<compile_context>
chip_gen: v6e
topology: v6e:2x2x1
jax: 0.10.0
libtpu: 0.0.40
codegen_flags: <defaults>
</compile_context>

<pallas_src>
import functools

import jax
import jax.numpy as jnp
from jax.experimental import pallas as pl
from jax.experimental.pallas import tpu as pltpu


# ------------------------------ fused kernel -------------------------------

def _fused_attention_kernel(x_cn_ref, wqkv_ref, wo_ref, b_ref, o_ref, slab_ref,
                            *, heads, dim_head):
    """Processes one batch image (leading batch dim squeezed by BlockSpec).

    x_cn_ref : (C, N)          channel-major input (free view of NCHW)
    wqkv_ref : (3*hidden, C)   fused QKV projection, softmax scale folded in Q
    wo_ref   : (C, hidden)     output projection
    b_ref    : (C, 1)          output bias
    o_ref    : (C, N)          channel-major result (lane-dense, last dim = N)
    slab_ref : (N, hidden) f32 VMEM scratch for the per-head attention outputs
    """
    hidden = heads * dim_head

    # Fused 1x1-conv QKV projection, channel-major:
    #   (3*hidden, C) @ (C, N) -> (3*hidden, N).  One MXU call (K = C = 4).
    qkvt = jnp.dot(wqkv_ref[...], x_cn_ref[...],
                   preferred_element_type=jnp.float32)
    qt = qkvt[:hidden]                  # (hidden, N), scale pre-folded
    kt = qkvt[hidden:2 * hidden]        # (hidden, N) -- already score-RHS layout
    vt = qkvt[2 * hidden:]              # (hidden, N)

    # Token-major Q / V via (128, 256) -> (256, 128) XLU transposes (idle slot).
    # bf16 MXU operands; accumulation stays f32 (preferred_element_type below).
    q_b = qt.T.astype(jnp.bfloat16)     # (N, hidden)
    v_b = vt.T.astype(jnp.bfloat16)     # (N, hidden)
    kt_b = kt.astype(jnp.bfloat16)      # (hidden, N)

    for h in range(heads):              # unrolled at trace time
        lo = h * dim_head
        hi = lo + dim_head
        # (N, d) @ (d, N) -> (N, N): K already transposed, no in-loop shuffle.
        s = jnp.dot(q_b[:, lo:hi], kt_b[lo:hi, :],
                    preferred_element_type=jnp.float32)            # (N, N) f32
        m = jnp.max(s, axis=-1, keepdims=True)                     # f32 softmax
        p = jnp.exp(s - m)
        l = jnp.sum(p, axis=-1, keepdims=True)
        o_h = jnp.dot(p.astype(jnp.bfloat16), v_b[:, lo:hi],
                      preferred_element_type=jnp.float32)          # (N, d)
        # Fold 1/l into the small (N, d) block: EUP reciprocal + one multiply
        # instead of a VALU divide over the (N, N) probability matrix.
        slab_ref[:, lo:hi] = o_h * pl.reciprocal(l, approx=True)

    # Channel-major 1x1-conv output projection + bias:
    # one (256, 128) -> (128, 256) transpose of the slab, then
    # (C, hidden) @ (hidden, N) -> (C, N), written lane-dense.
    y = jnp.dot(wo_ref[...], slab_ref[...].T,
                preferred_element_type=jnp.float32)
    o_ref[...] = (y + b_ref[...]).astype(o_ref.dtype)


# ------------------------------ public wrapper ------------------------------

@functools.partial(jax.jit, static_argnames=("heads", "dim_head"))
def attention_forward(x, params, *, heads, dim_head):
    """x: (B, C, H, W) NCHW float32. Returns (B, C, H, W)."""
    b, c, h, w = x.shape
    hidden = heads * dim_head
    n = h * w
    scale = dim_head ** (-0.5)

    # TODO(synk): replace this guard with a kv-tiled online-softmax (flash)
    # fallback for large spatial sizes (quadratic (N, N) score block).
    if n > 1024 or n % 128 != 0:
        raise NotImplementedError(
            "fused attention kernel assumes H*W a multiple of 128 and <= 1024")

    # Fold the softmax scale into the Q rows of the fused QKV weight.
    w_qkv = params["w_qkv"]                                       # (3*hidden, C)
    w_qkv = jnp.concatenate([w_qkv[:hidden] * scale, w_qkv[hidden:]], axis=0)
    w_out = params["w_out"]                                       # (C, hidden)
    bias = params["b_out"].reshape(c, 1)                          # (C, 1)

    x_cn = x.reshape(b, c, n)                                     # free NCHW view

    kernel = functools.partial(_fused_attention_kernel,
                               heads=heads, dim_head=dim_head)

    y_cn = pl.pallas_call(
        kernel,
        out_shape=jax.ShapeDtypeStruct((b, c, n), x.dtype),
        grid=(b,),
        in_specs=[
            pl.BlockSpec((None, c, n), lambda i: (i, 0, 0)),      # x (C, N)
            pl.BlockSpec((3 * hidden, c), lambda i: (0, 0)),      # w_qkv (resident)
            pl.BlockSpec((c, hidden), lambda i: (0, 0)),          # w_out (resident)
            pl.BlockSpec((c, 1), lambda i: (0, 0)),               # bias  (resident)
        ],
        out_specs=pl.BlockSpec((None, c, n), lambda i: (i, 0, 0)),
        scratch_shapes=[pltpu.VMEM((n, hidden), jnp.float32)],
        compiler_params=pltpu.CompilerParams(
            dimension_semantics=("parallel",)),
    )(x_cn, w_qkv, w_out, bias)

    return y_cn.reshape(b, c, h, w)                               # free reshape


# ------------------------------- reference ---------------------------------

def attention_reference(x, params, *, heads, dim_head):
    b, c, h, w = x.shape
    scale = dim_head ** (-0.5)
    qkv = jnp.einsum("bchw,oc->bohw", x, params["w_qkv"])
    q, k, v = jnp.split(qkv, 3, axis=1)
    rearr = lambda t: t.reshape(b, heads, dim_head, h * w)
    q, k, v = map(rearr, (q, k, v))
    q = q * scale
    dots = jnp.einsum("bhdi,bhdj->bhij", q, k)
    dots = dots - jnp.max(dots, axis=-1, keepdims=True)
    attn = jax.nn.softmax(dots, axis=-1)
    out = jnp.einsum("bhij,bhdj->bhid", attn, v)
    out = jnp.transpose(out, (0, 1, 3, 2)).reshape(b, heads * dim_head, h, w)
    y = jnp.einsum("bchw,oc->bohw", out, params["w_out"])
    return y + params["b_out"].reshape(1, -1, 1, 1)


# --------------------------------- main -------------------------------------

if __name__ == "__main__":
    dim = 4
    heads = 4
    dim_head = 32
    hidden = heads * dim_head
    B, H, W = 2, 16, 16

    key = jax.random.PRNGKey(0)
    k1, k2, k3, kx = jax.random.split(key, 4)
    params = {
        # Conv2d(dim, 3*hidden, 1, bias=False).weight -> (3*hidden, dim)
        "w_qkv": jax.random.normal(k1, (3 * hidden, dim), jnp.float32) * 0.1,
        # Conv2d(hidden, dim, 1).weight -> (dim, hidden), bias -> (dim,)
        "w_out": jax.random.normal(k2, (dim, hidden), jnp.float32) * 0.1,
        "b_out": jax.random.normal(k3, (dim,), jnp.float32) * 0.1,
    }
    x = jax.random.normal(kx, (B, dim, H, W), jnp.float32)

    y = attention_forward(x, params, heads=heads, dim_head=dim_head)
    y = jax.block_until_ready(y)

    y_ref = attention_reference(x, params, heads=heads, dim_head=dim_head)
    assert y.shape == (B, dim, H, W)
    # bf16 MXU operands (with f32 accumulation) + the EUP approximate
    # reciprocal in the softmax denominator add a few 1e-3 absolute error
    # vs the pure-f32 reference; tolerance set accordingly.
    max_err = float(jnp.max(jnp.abs(y - y_ref)))
    assert jnp.allclose(y, y_ref, rtol=2e-2, atol=2e-2), max_err
    print("KERNEL_OK")
</pallas_src>

<mosaic_0001>
module attributes {stable_mosaic.version = 11 : i64} {
  func.func @_fused_attention_kernel(%arg0: i32, %arg1: memref<1x4x256xf32, #tpu.memory_space<vmem>>, %arg2: memref<384x4xf32, #tpu.memory_space<vmem>>, %arg3: memref<4x128xf32, #tpu.memory_space<vmem>>, %arg4: memref<4x1xf32, #tpu.memory_space<vmem>>, %arg5: memref<1x4x256xf32, #tpu.memory_space<vmem>>, %arg6: memref<256x128xf32, #tpu.memory_space<vmem>>) attributes {dimension_semantics = [#tpu.dimension_semantics<parallel>], iteration_bounds = array<i64: 2>, scalar_prefetch = 0 : i64, scratch_operands = 1 : i64, tpu.core_type = #tpu.core_type<tc>, window_params = [{transform_indices = @transform_0, window_bounds = array<i64: 1, 4, 256>}, {pipeline_mode = #tpu.pipeline_mode<synchronous>, transform_indices = @transform_1, window_bounds = array<i64: 384, 4>}, {pipeline_mode = #tpu.pipeline_mode<synchronous>, transform_indices = @transform_2, window_bounds = array<i64: 4, 128>}, {pipeline_mode = #tpu.pipeline_mode<synchronous>, transform_indices = @transform_3, window_bounds = array<i64: 4, 1>}, {transform_indices = @transform_4, window_bounds = array<i64: 1, 4, 256>}]} {
    %c0 = arith.constant 0 : index
    %c0_0 = arith.constant 0 : index
    %0 = vector.load %arg2[%c0, %c0_0] : memref<384x4xf32, #tpu.memory_space<vmem>>, vector<384x4xf32>
    %c0_1 = arith.constant 0 : index
    %c0_2 = arith.constant 0 : index
    %c0_3 = arith.constant 0 : index
    %1 = vector.load %arg1[%c0_1, %c0_2, %c0_3] : memref<1x4x256xf32, #tpu.memory_space<vmem>>, vector<1x4x256xf32>
    %2 = vector.shape_cast %1 : vector<1x4x256xf32> to vector<4x256xf32>
    %cst = arith.constant dense<0.000000e+00> : vector<384x256xf32>
    %3 = tpu.matmul %0, %2, %cst {dimension_numbers = #tpu.dot_dimension_numbers<[1], [0], [0], [1], [0, 0, 1, 1], [], []>} : vector<384x4xf32>, vector<4x256xf32>, vector<384x256xf32> -> vector<384x256xf32>
    %4 = vector.extract_strided_slice %3 {offsets = [0, 0], sizes = [128, 256], strides = [1, 1]} : vector<384x256xf32> to vector<128x256xf32>
    %5 = vector.extract_strided_slice %3 {offsets = [128, 0], sizes = [128, 256], strides = [1, 1]} : vector<384x256xf32> to vector<128x256xf32>
    %6 = vector.extract_strided_slice %3 {offsets = [256, 0], sizes = [128, 256], strides = [1, 1]} : vector<384x256xf32> to vector<128x256xf32>
    %7 = tpu.transpose %4, [1, 0] : vector<128x256xf32> -> vector<256x128xf32>
    %8 = arith.truncf %7 : vector<256x128xf32> to vector<256x128xbf16>
    %9 = tpu.transpose %6, [1, 0] : vector<128x256xf32> -> vector<256x128xf32>
    %10 = arith.truncf %9 : vector<256x128xf32> to vector<256x128xbf16>
    %11 = arith.truncf %5 : vector<128x256xf32> to vector<128x256xbf16>
    %12 = vector.extract_strided_slice %8 {offsets = [0, 0], sizes = [256, 32], strides = [1, 1]} : vector<256x128xbf16> to vector<256x32xbf16>
    %13 = vector.extract_strided_slice %11 {offsets = [0, 0], sizes = [32, 256], strides = [1, 1]} : vector<128x256xbf16> to vector<32x256xbf16>
    %cst_4 = arith.constant dense<0.000000e+00> : vector<256x256xf32>
    %14 = tpu.matmul %12, %13, %cst_4 {dimension_numbers = #tpu.dot_dimension_numbers<[1], [0], [0], [1], [0, 0, 1, 1], [], []>} : vector<256x32xbf16>, vector<32x256xbf16>, vector<256x256xf32> -> vector<256x256xf32>
    %cst_5 = arith.constant dense<0xFF800000> : vector<256xf32>
    %15 = vector.multi_reduction <maximumf>, %14, %cst_5 [1] : vector<256x256xf32> to vector<256xf32>
    %16 = vector.shape_cast %15 : vector<256xf32> to vector<256x1xf32>
    %17 = vector.broadcast %16 : vector<256x1xf32> to vector<256x256xf32>
    %18 = arith.subf %14, %17 : vector<256x256xf32>
    %19 = math.exp %18 : vector<256x256xf32>
    %cst_6 = arith.constant dense<0.000000e+00> : vector<256xf32>
    %20 = vector.multi_reduction <add>, %19, %cst_6 [1] : vector<256x256xf32> to vector<256xf32>
    %21 = vector.shape_cast %20 : vector<256xf32> to vector<256x1xf32>
    %22 = arith.truncf %19 : vector<256x256xf32> to vector<256x256xbf16>
    %23 = vector.extract_strided_slice %10 {offsets = [0, 0], sizes = [256, 32], strides = [1, 1]} : vector<256x128xbf16> to vector<256x32xbf16>
    %cst_7 = arith.constant dense<0.000000e+00> : vector<256x32xf32>
    %24 = tpu.matmul %22, %23, %cst_7 {dimension_numbers = #tpu.dot_dimension_numbers<[1], [0], [0], [1], [0, 0, 1, 1], [], []>} : vector<256x256xbf16>, vector<256x32xbf16>, vector<256x32xf32> -> vector<256x32xf32>
    %25 = tpu.reciprocal %21 {approx = true} : vector<256x1xf32> -> vector<256x1xf32>
    %26 = vector.broadcast %25 : vector<256x1xf32> to vector<256x32xf32>
    %27 = arith.mulf %24, %26 : vector<256x32xf32>
    %c0_8 = arith.constant 0 : index
    %c0_9 = arith.constant 0 : index
    %28 = vector.load %arg6[%c0_8, %c0_9] : memref<256x128xf32, #tpu.memory_space<vmem>>, vector<256x32xf32>
    tpu.vector_store %arg6[%c0_8, %c0_9], %27 {strides = array<i32>} : memref<256x128xf32, #tpu.memory_space<vmem>>, vector<256x32xf32>,
    %29 = vector.extract_strided_slice %8 {offsets = [0, 32], sizes = [256, 32], strides = [1, 1]} : vector<256x128xbf16> to vector<256x32xbf16>
    %30 = vector.extract_strided_slice %11 {offsets = [32, 0], sizes = [32, 256], strides = [1, 1]} : vector<128x256xbf16> to vector<32x256xbf16>
    %cst_10 = arith.constant dense<0.000000e+00> : vector<256x256xf32>
    %31 = tpu.matmul %29, %30, %cst_10 {dimension_numbers = #tpu.dot_dimension_numbers<[1], [0], [0], [1], [0, 0, 1, 1], [], []>} : vector<256x32xbf16>, vector<32x256xbf16>, vector<256x256xf32> -> vector<256x256xf32>
    %cst_11 = arith.constant dense<0xFF800000> : vector<256xf32>
    %32 = vector.multi_reduction <maximumf>, %31, %cst_11 [1] : vector<256x256xf32> to vector<256xf32>
    %33 = vector.shape_cast %32 : vector<256xf32> to vector<256x1xf32>
    %34 = vector.broadcast %33 : vector<256x1xf32> to vector<256x256xf32>
    %35 = arith.subf %31, %34 : vector<256x256xf32>
    %36 = math.exp %35 : vector<256x256xf32>
    %cst_12 = arith.constant dense<0.000000e+00> : vector<256xf32>
    %37 = vector.multi_reduction <add>, %36, %cst_12 [1] : vector<256x256xf32> to vector<256xf32>
    %38 = vector.shape_cast %37 : vector<256xf32> to vector<256x1xf32>
    %39 = arith.truncf %36 : vector<256x256xf32> to vector<256x256xbf16>
    %40 = vector.extract_strided_slice %10 {offsets = [0, 32], sizes = [256, 32], strides = [1, 1]} : vector<256x128xbf16> to vector<256x32xbf16>
    %cst_13 = arith.constant dense<0.000000e+00> : vector<256x32xf32>
    %41 = tpu.matmul %39, %40, %cst_13 {dimension_numbers = #tpu.dot_dimension_numbers<[1], [0], [0], [1], [0, 0, 1, 1], [], []>} : vector<256x256xbf16>, vector<256x32xbf16>, vector<256x32xf32> -> vector<256x32xf32>
    %42 = tpu.reciprocal %38 {approx = true} : vector<256x1xf32> -> vector<256x1xf32>
    %43 = vector.broadcast %42 : vector<256x1xf32> to vector<256x32xf32>
    %44 = arith.mulf %41, %43 : vector<256x32xf32>
    %c0_14 = arith.constant 0 : index
    %c32 = arith.constant 32 : index
    %45 = vector.load %arg6[%c0_14, %c32] : memref<256x128xf32, #tpu.memory_space<vmem>>, vector<256x32xf32>
    tpu.vector_store %arg6[%c0_14, %c32], %44 {strides = array<i32>} : memref<256x128xf32, #tpu.memory_space<vmem>>, vector<256x32xf32>,
    %46 = vector.extract_strided_slice %8 {offsets = [0, 64], sizes = [256, 32], strides = [1, 1]} : vector<256x128xbf16> to vector<256x32xbf16>
    %47 = vector.extract_strided_slice %11 {offsets = [64, 0], sizes = [32, 256], strides = [1, 1]} : vector<128x256xbf16> to vector<32x256xbf16>
    %cst_15 = arith.constant dense<0.000000e+00> : vector<256x256xf32>
    %48 = tpu.matmul %46, %47, %cst_15 {dimension_numbers = #tpu.dot_dimension_numbers<[1], [0], [0], [1], [0, 0, 1, 1], [], []>} : vector<256x32xbf16>, vector<32x256xbf16>, vector<256x256xf32> -> vector<256x256xf32>
    %cst_16 = arith.constant dense<0xFF800000> : vector<256xf32>
    %49 = vector.multi_reduction <maximumf>, %48, %cst_16 [1] : vector<256x256xf32> to vector<256xf32>
    %50 = vector.shape_cast %49 : vector<256xf32> to vector<256x1xf32>
    %51 = vector.broadcast %50 : vector<256x1xf32> to vector<256x256xf32>
    %52 = arith.subf %48, %51 : vector<256x256xf32>
    %53 = math.exp %52 : vector<256x256xf32>
    %cst_17 = arith.constant dense<0.000000e+00> : vector<256xf32>
    %54 = vector.multi_reduction <add>, %53, %cst_17 [1] : vector<256x256xf32> to vector<256xf32>
    %55 = vector.shape_cast %54 : vector<256xf32> to vector<256x1xf32>
    %56 = arith.truncf %53 : vector<256x256xf32> to vector<256x256xbf16>
    %57 = vector.extract_strided_slice %10 {offsets = [0, 64], sizes = [256, 32], strides = [1, 1]} : vector<256x128xbf16> to vector<256x32xbf16>
    %cst_18 = arith.constant dense<0.000000e+00> : vector<256x32xf32>
    %58 = tpu.matmul %56, %57, %cst_18 {dimension_numbers = #tpu.dot_dimension_numbers<[1], [0], [0], [1], [0, 0, 1, 1], [], []>} : vector<256x256xbf16>, vector<256x32xbf16>, vector<256x32xf32> -> vector<256x32xf32>
    %59 = tpu.reciprocal %55 {approx = true} : vector<256x1xf32> -> vector<256x1xf32>
    %60 = vector.broadcast %59 : vector<256x1xf32> to vector<256x32xf32>
    %61 = arith.mulf %58, %60 : vector<256x32xf32>
    %c0_19 = arith.constant 0 : index
    %c64 = arith.constant 64 : index
    %62 = vector.load %arg6[%c0_19, %c64] : memref<256x128xf32, #tpu.memory_space<vmem>>, vector<256x32xf32>
    tpu.vector_store %arg6[%c0_19, %c64], %61 {strides = array<i32>} : memref<256x128xf32, #tpu.memory_space<vmem>>, vector<256x32xf32>,
    %63 = vector.extract_strided_slice %8 {offsets = [0, 96], sizes = [256, 32], strides = [1, 1]} : vector<256x128xbf16> to vector<256x32xbf16>
    %64 = vector.extract_strided_slice %11 {offsets = [96, 0], sizes = [32, 256], strides = [1, 1]} : vector<128x256xbf16> to vector<32x256xbf16>
    %cst_20 = arith.constant dense<0.000000e+00> : vector<256x256xf32>
    %65 = tpu.matmul %63, %64, %cst_20 {dimension_numbers = #tpu.dot_dimension_numbers<[1], [0], [0], [1], [0, 0, 1, 1], [], []>} : vector<256x32xbf16>, vector<32x256xbf16>, vector<256x256xf32> -> vector<256x256xf32>
    %cst_21 = arith.constant dense<0xFF800000> : vector<256xf32>
    %66 = vector.multi_reduction <maximumf>, %65, %cst_21 [1] : vector<256x256xf32> to vector<256xf32>
    %67 = vector.shape_cast %66 : vector<256xf32> to vector<256x1xf32>
    %68 = vector.broadcast %67 : vector<256x1xf32> to vector<256x256xf32>
    %69 = arith.subf %65, %68 : vector<256x256xf32>
    %70 = math.exp %69 : vector<256x256xf32>
    %cst_22 = arith.constant dense<0.000000e+00> : vector<256xf32>
    %71 = vector.multi_reduction <add>, %70, %cst_22 [1] : vector<256x256xf32> to vector<256xf32>
    %72 = vector.shape_cast %71 : vector<256xf32> to vector<256x1xf32>
    %73 = arith.truncf %70 : vector<256x256xf32> to vector<256x256xbf16>
    %74 = vector.extract_strided_slice %10 {offsets = [0, 96], sizes = [256, 32], strides = [1, 1]} : vector<256x128xbf16> to vector<256x32xbf16>
    %cst_23 = arith.constant dense<0.000000e+00> : vector<256x32xf32>
    %75 = tpu.matmul %73, %74, %cst_23 {dimension_numbers = #tpu.dot_dimension_numbers<[1], [0], [0], [1], [0, 0, 1, 1], [], []>} : vector<256x256xbf16>, vector<256x32xbf16>, vector<256x32xf32> -> vector<256x32xf32>
    %76 = tpu.reciprocal %72 {approx = true} : vector<256x1xf32> -> vector<256x1xf32>
    %77 = vector.broadcast %76 : vector<256x1xf32> to vector<256x32xf32>
    %78 = arith.mulf %75, %77 : vector<256x32xf32>
    %c0_24 = arith.constant 0 : index
    %c96 = arith.constant 96 : index
    %79 = vector.load %arg6[%c0_24, %c96] : memref<256x128xf32, #tpu.memory_space<vmem>>, vector<256x32xf32>
    tpu.vector_store %arg6[%c0_24, %c96], %78 {strides = array<i32>} : memref<256x128xf32, #tpu.memory_space<vmem>>, vector<256x32xf32>,
    %c0_25 = arith.constant 0 : index
    %c0_26 = arith.constant 0 : index
    %80 = vector.load %arg3[%c0_25, %c0_26] : memref<4x128xf32, #tpu.memory_space<vmem>>, vector<4x128xf32>
    %c0_27 = arith.constant 0 : index
    %c0_28 = arith.constant 0 : index
    %81 = vector.load %arg6[%c0_27, %c0_28] : memref<256x128xf32, #tpu.memory_space<vmem>>, vector<256x128xf32>
    %82 = tpu.transpose %81, [1, 0] : vector<256x128xf32> -> vector<128x256xf32>
    %cst_29 = arith.constant dense<0.000000e+00> : vector<4x256xf32>
    %83 = tpu.matmul %80, %82, %cst_29 {dimension_numbers = #tpu.dot_dimension_numbers<[1], [0], [0], [1], [0, 0, 1, 1], [], []>} : vector<4x128xf32>, vector<128x256xf32>, vector<4x256xf32> -> vector<4x256xf32>
    %c0_30 = arith.constant 0 : index
    %c0_31 = arith.constant 0 : index
    %84 = vector.load %arg4[%c0_30, %c0_31] : memref<4x1xf32, #tpu.memory_space<vmem>>, vector<4x1xf32>
    %85 = vector.broadcast %84 : vector<4x1xf32> to vector<4x256xf32>
    %86 = arith.addf %83, %85 : vector<4x256xf32>
    %c0_32 = arith.constant 0 : index
    %c0_33 = arith.constant 0 : index
    %c0_34 = arith.constant 0 : index
    %87 = vector.load %arg5[%c0_32, %c0_33, %c0_34] : memref<1x4x256xf32, #tpu.memory_space<vmem>>, vector<1x4x256xf32>
    %88 = vector.shape_cast %87 : vector<1x4x256xf32> to vector<4x256xf32>
    %89 = vector.shape_cast %86 : vector<4x256xf32> to vector<1x4x256xf32>
    tpu.vector_store %arg5[%c0_32, %c0_33, %c0_34], %89 {strides = array<i32>} : memref<1x4x256xf32, #tpu.memory_space<vmem>>, vector<1x4x256xf32>,
    return
  }
  func.func @transform_0(%arg0: i32) -> (i32, i32, i32) {
    %c0_i32 = arith.constant 0 : i32
    %c0_i32_0 = arith.constant 0 : i32
    %c0_i32_1 = arith.constant 0 : i32
    return %arg0, %c0_i32, %c0_i32_0 : i32, i32, i32
  }
  func.func @transform_1(%arg0: i32) -> (i32, i32) {
    %c0_i32 = arith.constant 0 : i32
    %c0_i32_0 = arith.constant 0 : i32
    %c0_i32_1 = arith.constant 0 : i32
    return %c0_i32, %c0_i32_0 : i32, i32
  }
  func.func @transform_2(%arg0: i32) -> (i32, i32) {
    %c0_i32 = arith.constant 0 : i32
    %c0_i32_0 = arith.constant 0 : i32
    %c0_i32_1 = arith.constant 0 : i32
    return %c0_i32, %c0_i32_0 : i32, i32
  }
  func.func @transform_3(%arg0: i32) -> (i32, i32) {
    %c0_i32 = arith.constant 0 : i32
    %c0_i32_0 = arith.constant 0 : i32
    %c0_i32_1 = arith.constant 0 : i32
    return %c0_i32, %c0_i32_0 : i32, i32
  }
  func.func @transform_4(%arg0: i32) -> (i32, i32, i32) {
    %c0_i32 = arith.constant 0 : i32
    %c0_i32_0 = arith.constant 0 : i32
    %c0_i32_1 = arith.constant 0 : i32
    return %arg0, %c0_i32, %c0_i32_0 : i32, i32, i32
  }
}

</mosaic_0001>

<llo_original>
// kernel: attention_forward.1
$region0: #{attention_forward.1}
  #allocation0 [shape = 'u32[]', space=smem, size = 0x4, offset = 0x4, fixed_abs, tag = 'smem constant byte address 0x4 - core index']
  #allocation1 [shape = 'u32[144,128]{1,0:T(1,128)}', space=vmem, size = 0x12000, scoped, tag = 'internal scratch']
  #allocation2 [shape = 'f32[256,128]{1,0:T(8,128)}', space=vmem, size = 0x20000, scoped, tag = 'scratch operand']
  %s0 = inlined_call_operand.vmem [shape: f32[2,4,256], index: 0, kind: input, shape index: {}]
  %s1 = inlined_call_operand.vmem [shape: f32[384,4], index: 1, kind: input, shape index: {}]
  %s2 = inlined_call_operand.vmem [shape: f32[4,128], index: 2, kind: input, shape index: {}]
  %s3 = inlined_call_operand.vmem [shape: f32[4,1], index: 3, kind: input, shape index: {}]
  %s4 = inlined_call_operand.vmem [shape: f32[2,4,256], index: 4, kind: output, shape index: {}]
  %s5 = sld [smem:[#allocation0]]
  $region49: #{attention_forward.1} parent=0
    _
  %s7 = ssub.s32 1, %s5
  %s8 = scalar_select 0, %s7, %s5
  loop: start=0, step=1, limit=4
  $region2: #{attention_forward.1} parent=0 // loop_pre_header
    _
  $region3: #{attention_forward.1} parent=0 // loop_header
    %s10 = sphi 0, %s14
    %p11 = scmp.ge.s32.totalorder %s10, 4
    %s20 = sphi 0, %s22
    %s23 = sphi 0, %s20
    %s24 = sphi 0, %s23
    %s40 = sphi 0, %s24
    %s44 = sphi 0, %s44
    %s46 = sphi 0, %s44
    %s47 = sphi 0, %s46
    %s61 = sphi 0, %s47
    %s65 = sphi 0, %s65
    %s67 = sphi 0, %s65
    %s68 = sphi 0, %s67
    %s82 = sphi 0, %s68
    %s86 = sphi 0, %s86
    %s88 = sphi 0, %s86
    %s89 = sphi 0, %s88
    %s103 = sphi 0, %s89
    %s109 = sphi 0, %s111
    %s112 = sphi 0, %s109
    %s113 = sphi 0, %s112
    %s129 = sphi 0, %s113
  $region4: #{attention_forward.1} parent=0 // loop_header_branch
    %13 = sbr.rel (%p11) target = $region8
  $region5: #{attention_forward.1} parent=0 // loop_body
    %s15 = ssub.s32 %s10, 1
    %s16 = ssub.s32 %s10, 2
    %s17 = sadd.s32 %s10, 1
    %s18 = ssub.s32 %s10, %s17
    %p19 = scmp.eq.s32.totalorder %s18, 0
    %s21 = sadd.s32 %s20, 1
    %s22 = scalar_select %p19, %s20, %s21
    %p25 = pneg %p19
    %p26 = scmp.eq.s32.totalorder %s10, 1
    %p27 = por %p25, %p26
    %p28 = scmp.ne.s32.totalorder %s20, %s23
    %p29 = scmp.eq.s32.totalorder %s10, 0
    %p30 = por %p28, %p29
    %p31 = scmp.ne.s32.totalorder %s20, %s23
    %p32 = scmp.eq.s32.totalorder %s15, 1
    %p33 = por %p31, %p32
    %p34 = scmp.ne.s32.totalorder %s23, %s24
    %p35 = scmp.eq.s32.totalorder %s15, 0
    %p36 = por %p34, %p35
    %p37 = scmp.ne.s32.totalorder %s23, %s24
    %p38 = scmp.eq.s32.totalorder %s16, 1
    %p39 = por %p37, %p38
    %p41 = scmp.ne.s32.totalorder %s24, %s40
    %p42 = scmp.eq.s32.totalorder %s16, 0
    %p43 = por %p41, %p42
    %s45 = sadd.s32 %s44, 1
    %p48 = scmp.eq.s32.totalorder %s10, 1
    %p49 = scmp.ne.s32.totalorder %s44, %s46
    %p50 = scmp.eq.s32.totalorder %s10, 0
    %p51 = por %p49, %p50
    %p52 = scmp.ne.s32.totalorder %s44, %s46
    %p53 = scmp.eq.s32.totalorder %s15, 1
    %p54 = por %p52, %p53
    %p55 = scmp.ne.s32.totalorder %s46, %s47
    %p56 = scmp.eq.s32.totalorder %s15, 0
    %p57 = por %p55, %p56
    %p58 = scmp.ne.s32.totalorder %s46, %s47
    %p59 = scmp.eq.s32.totalorder %s16, 1
    %p60 = por %p58, %p59
    %p62 = scmp.ne.s32.totalorder %s47, %s61
    %p63 = scmp.eq.s32.totalorder %s16, 0
    %p64 = por %p62, %p63
    %s66 = sadd.s32 %s65, 1
    %p69 = scmp.eq.s32.totalorder %s10, 1
    %p70 = scmp.ne.s32.totalorder %s65, %s67
    %p71 = scmp.eq.s32.totalorder %s10, 0
    %p72 = por %p70, %p71
    %p73 = scmp.ne.s32.totalorder %s65, %s67
    %p74 = scmp.eq.s32.totalorder %s15, 1
    %p75 = por %p73, %p74
    %p76 = scmp.ne.s32.totalorder %s67, %s68
    %p77 = scmp.eq.s32.totalorder %s15, 0
    %p78 = por %p76, %p77
    %p79 = scmp.ne.s32.totalorder %s67, %s68
    %p80 = scmp.eq.s32.totalorder %s16, 1
    %p81 = por %p79, %p80
    %p83 = scmp.ne.s32.totalorder %s68, %s82
    %p84 = scmp.eq.s32.totalorder %s16, 0
    %p85 = por %p83, %p84
    %s87 = sadd.s32 %s86, 1
    %p90 = scmp.eq.s32.totalorder %s10, 1
    %p91 = scmp.ne.s32.totalorder %s86, %s88
    %p92 = scmp.eq.s32.totalorder %s10, 0
    %p93 = por %p91, %p92
    %p94 = scmp.ne.s32.totalorder %s86, %s88
    %p95 = scmp.eq.s32.totalorder %s15, 1
    %p96 = por %p94, %p95
    %p97 = scmp.ne.s32.totalorder %s88, %s89
    %p98 = scmp.eq.s32.totalorder %s15, 0
    %p99 = por %p97, %p98
    %p100 = scmp.ne.s32.totalorder %s88, %s89
    %p101 = scmp.eq.s32.totalorder %s16, 1
    %p102 = por %p100, %p101
    %p104 = scmp.ne.s32.totalorder %s89, %s103
    %p105 = scmp.eq.s32.totalorder %s16, 0
    %p106 = por %p104, %p105
    %s107 = ssub.s32 %s10, %s17
    %p108 = scmp.eq.s32.totalorder %s107, 0
    %s110 = sadd.s32 %s109, 1
    %s111 = scalar_select %p108, %s109, %s110
    %p114 = pneg %p108
    %p115 = scmp.eq.s32.totalorder %s10, 1
    %p116 = por %p114, %p115
    %p117 = scmp.ne.s32.totalorder %s109, %s112
    %p118 = scmp.eq.s32.totalorder %s10, 0
    %p119 = por %p117, %p118
    %p120 = scmp.ne.s32.totalorder %s109, %s112
    %p121 = scmp.eq.s32.totalorder %s15, 1
    %p122 = por %p120, %p121
    %p123 = scmp.ne.s32.totalorder %s112, %s113
    %p124 = scmp.eq.s32.totalorder %s15, 0
    %p125 = por %p123, %p124
    %p126 = scmp.ne.s32.totalorder %s112, %s113
    %p127 = scmp.eq.s32.totalorder %s16, 1
    %p128 = por %p126, %p127
    %p130 = scmp.ne.s32.totalorder %s113, %s129
    %p131 = scmp.eq.s32.totalorder %s16, 0
    %p132 = por %p130, %p131
    %p133 = scmp.le.s32.totalorder 1, %s10
    %p134 = scmp.lt.s32.totalorder %s10, 3
    %p135 = pnand %p133, %p134
    %p136 = pneg %p135
    // Predicated region
    $region9: #{attention_forward.1} parent=5 // pred_check
      _
    $region10: #{attention_forward.1} parent=5 // pred_check_branch
      %138 = sbr.rel (%p135) target = $region12
    $region11: #{attention_forward.1} parent=5 // pred_region
      %s139 = ssub.s32 %s10, 1
      // Predicated region
      $region13: #{attention_forward.1} parent=11 // pred_check
        %p140 = pneg %p57
      $region14: #{attention_forward.1} parent=11 // pred_check_branch
        %142 = sbr.rel (%p140) target = $region16
      $region15: #{attention_forward.1} parent=11 // pred_region
        _
      $region16: #{attention_forward.1} parent=11 // pred_fallthru
        _
      // Predicated region
      $region17: #{attention_forward.1} parent=11 // pred_check
        %p143 = pneg %p78
      $region18: #{attention_forward.1} parent=11 // pred_check_branch
        %145 = sbr.rel (%p143) target = $region20
      $region19: #{attention_forward.1} parent=11 // pred_region
        _
      $region20: #{attention_forward.1} parent=11 // pred_fallthru
        _
      // Predicated region
      $region21: #{attention_forward.1} parent=11 // pred_check
        %p146 = pneg %p99
      $region22: #{attention_forward.1} parent=11 // pred_check_branch
        %148 = sbr.rel (%p146) target = $region24
      $region23: #{attention_forward.1} parent=11 // pred_region
        _
      $region24: #{attention_forward.1} parent=11 // pred_fallthru
        _
    $region12: #{attention_forward.1} parent=5 // pred_fallthru
      _
    %p149 = scmp.lt.s32.totalorder %s10, 2
    // Predicated region
    $region25: #{attention_forward.1} parent=5 // pred_check
      %p150 = pneg %p149
    $region26: #{attention_forward.1} parent=5 // pred_check_branch
      %152 = sbr.rel (%p150) target = $region28
    $region27: #{attention_forward.1} parent=5 // pred_region
      // Predicated region
      $region29: #{attention_forward.1} parent=27 // pred_check
        %p153 = pneg %p30
      $region30: #{attention_forward.1} parent=27 // pred_check_branch
        %155 = sbr.rel (%p153) target = $region32
      $region31: #{attention_forward.1} parent=27 // pred_region
        %p156 = scmp.lt.s32.totalorder %s10, 1
        %s157 = scalar_select %p156, %s10, 1
        %s158 = smul.addr %s157, 2
        %s159 = smul.addr %s158, 4
        %s160 = scalar_lea.vmem %s0, %s159
      $region32: #{attention_forward.1} parent=27 // pred_fallthru
        _
    $region28: #{attention_forward.1} parent=5 // pred_fallthru
      _
    %p161 = scmp.le.s32.totalorder 1, %s10
    %p162 = scmp.lt.s32.totalorder %s10, 3
    %p163 = pnand %p161, %p162
    %p164 = pneg %p163
    // Predicated region
    $region33: #{attention_forward.1} parent=5 // pred_check
      _
    $region34: #{attention_forward.1} parent=5 // pred_check_branch
      %166 = sbr.rel (%p163) target = $region36
    $region35: #{attention_forward.1} parent=5 // pred_region
      %s167 = ssub.s32 %s10, 1
      %p168 = scmp.lt.s32.totalorder %s15, 1
      %s169 = scalar_select %p168, %s15, 1
      %s170 = smul.addr %s169, 2
      %s171 = smul.addr %s170, 4
      %s172 = scalar_lea.vmem %s0, %s171
      %p173 = pneg %p36
      %p174 = pneg %p33
      %p175 = pneg %p57
      %p176 = pneg %p54
      %p177 = pneg %p78
      %p178 = pneg %p75
      %p179 = pneg %p99
      %p180 = pneg %p96
      %p181 = pneg %p125
      %p182 = pneg %p122
      %p183 = scmp.lt.s32.totalorder %s15, 1
      %s184 = scalar_select %p183, %s15, 1
      %s185 = smul.addr %s184, 2
      %s186 = smul.addr %s185, 4
      %s187 = scalar_lea.vmem %s4, %s186
      %p188 = scmp.lt.s32.totalorder %s15, 1
      %s189 = scalar_select %p188, %s15, 1
      %s190 = smul.addr %s189, 2
      %s191 = smul.addr %s190, 4
      %s192 = scalar_lea.vmem %s0, %s191
      %p193 = scmp.lt.s32.totalorder %s15, 1
      %s194 = scalar_select %p193, %s15, 1
      %s195 = smul.addr %s194, 2
      %s196 = smul.addr %s195, 4
      %s197 = scalar_lea.vmem %s4, %s196
      %v199 = vld [vmem:[%s1] sm:$0xff]
      %v200 = vld [vmem:[%s1 + $0x8] sm:$0xff]
      %v201 = vld [vmem:[%s1 + $0x10] sm:$0xff]
      %v202 = vld [vmem:[%s1 + $0x18] sm:$0xff]
      %v203 = vld [vmem:[%s1 + $0x20] sm:$0xff]
      %v204 = vld [vmem:[%s1 + $0x28] sm:$0xff]
      %v205 = vld [vmem:[%s1 + $0x30] sm:$0xff]
      %v206 = vld [vmem:[%s1 + $0x38] sm:$0xff]
      %v207 = vld [vmem:[%s1 + $0x40] sm:$0xff]
      %v208 = vld [vmem:[%s1 + $0x48] sm:$0xff]
      %v209 = vld [vmem:[%s1 + $0x50] sm:$0xff]
      %v210 = vld [vmem:[%s1 + $0x58] sm:$0xff]
      %v211 = vld [vmem:[%s1 + $0x60] sm:$0xff]
      %v212 = vld [vmem:[%s1 + $0x68] sm:$0xff]
      %v213 = vld [vmem:[%s1 + $0x70] sm:$0xff]
      %v214 = vld [vmem:[%s1 + $0x78] sm:$0xff]
      %v215 = vld [vmem:[%s1 + $0x80] sm:$0xff]
      %v216 = vld [vmem:[%s1 + $0x88] sm:$0xff]
      %v217 = vld [vmem:[%s1 + $0x90] sm:$0xff]
      %v218 = vld [vmem:[%s1 + $0x98] sm:$0xff]
      %v219 = vld [vmem:[%s1 + $0xa0] sm:$0xff]
      %v220 = vld [vmem:[%s1 + $0xa8] sm:$0xff]
      %v221 = vld [vmem:[%s1 + $0xb0] sm:$0xff]
      %v222 = vld [vmem:[%s1 + $0xb8] sm:$0xff]
      %v223 = vld [vmem:[%s1 + $0xc0] sm:$0xff]
      %v224 = vld [vmem:[%s1 + $0xc8] sm:$0xff]
      %v225 = vld [vmem:[%s1 + $0xd0] sm:$0xff]
      %v226 = vld [vmem:[%s1 + $0xd8] sm:$0xff]
      %v227 = vld [vmem:[%s1 + $0xe0] sm:$0xff]
      %v228 = vld [vmem:[%s1 + $0xe8] sm:$0xff]
      %v229 = vld [vmem:[%s1 + $0xf0] sm:$0xff]
      %v230 = vld [vmem:[%s1 + $0xf8] sm:$0xff]
      %v231 = vld [vmem:[%s1 + $0x100] sm:$0xff]
      %v232 = vld [vmem:[%s1 + $0x108] sm:$0xff]
      %v233 = vld [vmem:[%s1 + $0x110] sm:$0xff]
      %v234 = vld [vmem:[%s1 + $0x118] sm:$0xff]
      %v235 = vld [vmem:[%s1 + $0x120] sm:$0xff]
      %v236 = vld [vmem:[%s1 + $0x128] sm:$0xff]
      %v237 = vld [vmem:[%s1 + $0x130] sm:$0xff]
      %v238 = vld [vmem:[%s1 + $0x138] sm:$0xff]
      %v239 = vld [vmem:[%s1 + $0x140] sm:$0xff]
      %v240 = vld [vmem:[%s1 + $0x148] sm:$0xff]
      %v241 = vld [vmem:[%s1 + $0x150] sm:$0xff]
      %v242 = vld [vmem:[%s1 + $0x158] sm:$0xff]
      %v243 = vld [vmem:[%s1 + $0x160] sm:$0xff]
      %v244 = vld [vmem:[%s1 + $0x168] sm:$0xff]
      %v245 = vld [vmem:[%s1 + $0x170] sm:$0xff]
      %v246 = vld [vmem:[%s1 + $0x178] sm:$0xff]
      %v247 = vld [vmem:[%s192] sm:$0xff]
      %v249 = vcombine.high %v247, %v247
      %vm250 = vcmask 31744
      %v252 = vsel %vm250, %v199, 0
      %v255 = vsel %vm250, %v200, 0
      %v258 = vsel %vm250, %v201, 0
      %v261 = vsel %vm250, %v202, 0
      %v264 = vsel %vm250, %v203, 0
      %v267 = vsel %vm250, %v204, 0
      %v270 = vsel %vm250, %v205, 0
      %v273 = vsel %vm250, %v206, 0
      %v276 = vsel %vm250, %v207, 0
      %v279 = vsel %vm250, %v208, 0
      %v282 = vsel %vm250, %v209, 0
      %v285 = vsel %vm250, %v210, 0
      %v288 = vsel %vm250, %v211, 0
      %v291 = vsel %vm250, %v212, 0
      %v294 = vsel %vm250, %v213, 0
      %v297 = vsel %vm250, %v214, 0
      %v300 = vsel %vm250, %v215, 0
      %v303 = vsel %vm250, %v216, 0
      %v306 = vsel %vm250, %v217, 0
      %v309 = vsel %vm250, %v218, 0
      %v312 = vsel %vm250, %v219, 0
      %v315 = vsel %vm250, %v220, 0
      %v318 = vsel %vm250, %v221, 0
      %v321 = vsel %vm250, %v222, 0
      %v324 = vsel %vm250, %v223, 0
      %v327 = vsel %vm250, %v224, 0
      %v330 = vsel %vm250, %v225, 0
      %v333 = vsel %vm250, %v226, 0
      %v336 = vsel %vm250, %v227, 0
      %v339 = vsel %vm250, %v228, 0
      %v342 = vsel %vm250, %v229, 0
      %v345 = vsel %vm250, %v230, 0
      %v348 = vsel %vm250, %v231, 0
      %v351 = vsel %vm250, %v232, 0
      %v354 = vsel %vm250, %v233, 0
      %v357 = vsel %vm250, %v234, 0
      %v360 = vsel %vm250, %v235, 0
      %v363 = vsel %vm250, %v236, 0
      %v366 = vsel %vm250, %v237, 0
      %v369 = vsel %vm250, %v238, 0
      %v372 = vsel %vm250, %v239, 0
      %v375 = vsel %vm250, %v240, 0
      %v378 = vsel %vm250, %v241, 0
      %v381 = vsel %vm250, %v242, 0
      %v384 = vsel %vm250, %v243, 0
      %v387 = vsel %vm250, %v244, 0
      %v390 = vsel %vm250, %v245, 0
      %v393 = vsel %vm250, %v246, 0
      %vm395 = vcmask 1043456
      %v396 = vsel %vm395, %v247, 0
      %v398 = vsel %vm395, %v249, 0
      %400 = vmatprep.subr.mxu0 0.0
      %401 = vmatpush1.msra.mxu0 0.0
      %402 = vmatprep.subr.mxu0 0.0
      %403 = vmatpush1.msra.mxu0 0.0
      %404 = vmatprep.subr.mxu0 0.0
      %405 = vmatpush1.msra.mxu0 0.0
      %406 = vmatprep.subr.mxu0 0.0
      %407 = vmatpush1.msra.mxu0 0.0
      %408 = vmatprep.subr.mxu0 0.0
      %409 = vmatpush1.msra.mxu0 0.0
      %410 = vmatprep.subr.mxu0 0.0
      %411 = vmatpush1.msra.mxu0 0.0
      %412 = vmatprep.subr.mxu0 0.0
      %413 = vmatpush1.msra.mxu0 0.0
      %414 = vmatprep.subr.mxu0 0.0
      %415 = vmatpush1.msra.mxu0 0.0
      %416 = vmatprep.subr.mxu0 0.0
      %417 = vmatpush1.msra.mxu0 0.0
      %418 = vmatprep.subr.mxu0 0.0
      %419 = vmatpush1.msra.mxu0 0.0
      %420 = vmatprep.subr.mxu0 0.0
      %421 = vmatpush1.msra.mxu0 0.0
      %422 = vmatprep.subr.mxu0 0.0
      %423 = vmatpush1.msra.mxu0 0.0
      %424 = vmatprep.subr.mxu0 0.0
      %425 = vmatpush1.msra.mxu0 0.0
      %426 = vmatprep.subr.mxu0 0.0
      %427 = vmatpush1.msra.mxu0 0.0
      %428 = vmatprep.subr.mxu0 0.0
      %429 = vmatpush1.msra.mxu0 0.0
      %430 = vmatprep.subr.mxu0 %v398
      %431 = vmatpush1.msra.mxu0 %v396
      %432 = vmatprep.subr.mxu0 0.0
      %433 = vmatpush2.msra.mxu0 0.0
      %434 = vmatprep.subr.mxu0 0.0
      %435 = vmatpush2.msra.mxu0 0.0
      %436 = vmatprep.subr.mxu0 0.0
      %437 = vmatpush2.msra.mxu0 0.0
      %438 = vmatprep.subr.mxu0 0.0
      %439 = vmatpush2.msra.mxu0 0.0
      %440 = vmatprep.subr.mxu0 0.0
      %441 = vmatpush2.msra.mxu0 0.0
      %442 = vmatprep.subr.mxu0 0.0
      %443 = vmatpush2.msra.mxu0 0.0
      %444 = vmatprep.subr.mxu0 0.0
      %445 = vmatpush2.msra.mxu0 0.0
      %446 = vmatprep.subr.mxu0 0.0
      %447 = vmatpush2.msra.mxu0 0.0
      %448 = vmatprep.subr.mxu0 0.0
      %449 = vmatpush2.msra.mxu0 0.0
      %450 = vmatprep.subr.mxu0 0.0
      %451 = vmatpush2.msra.mxu0 0.0
      %452 = vmatprep.subr.mxu0 0.0
      %453 = vmatpush2.msra.mxu0 0.0
      %454 = vmatprep.subr.mxu0 0.0
      %455 = vmatpush2.msra.mxu0 0.0
      %456 = vmatprep.subr.mxu0 0.0
      %457 = vmatpush2.msra.mxu0 0.0
      %458 = vmatprep.subr.mxu0 0.0
      %459 = vmatpush2.msra.mxu0 0.0
      %460 = vmatprep.subr.mxu0 0.0
      %461 = vmatpush2.msra.mxu0 0.0
      %462 = vmatprep.subr.mxu0 0.0
      %463 = vmatpush2.msra.mxu0 0.0
      %464 = vmatprep.mubr.f32.mxu0 0.0
      %465 = vmatmul.mubr.f32.gmra.mxu0 %v252
      %v466 = vpop.f32.mrf.mxu0
      %v467 = vadd.f32 0.0, %v466
      %v468 = vpop.f32.mrf.mxu0
      %v469 = vadd.f32 0.0, %v468
      %470 = vmatprep.mubr.f32.mxu0 0.0
      %471 = vmatmul.mubr.f32.gmra.mxu0 %v255
      %v472 = vpop.f32.mrf.mxu0
      %v473 = vadd.f32 0.0, %v472
      %v474 = vpop.f32.mrf.mxu0
      %v475 = vadd.f32 0.0, %v474
      %476 = vmatprep.mubr.f32.mxu0 0.0
      %477 = vmatmul.mubr.f32.gmra.mxu0 %v258
      %v478 = vpop.f32.mrf.mxu0
      %v479 = vadd.f32 0.0, %v478
      %v480 = vpop.f32.mrf.mxu0
      %v481 = vadd.f32 0.0, %v480
      %482 = vmatprep.mubr.f32.mxu0 0.0
      %483 = vmatmul.mubr.f32.gmra.mxu0 %v261
      %v484 = vpop.f32.mrf.mxu0
      %v485 = vadd.f32 0.0, %v484
      %v486 = vpop.f32.mrf.mxu0
      %v487 = vadd.f32 0.0, %v486
      %488 = vmatprep.mubr.f32.mxu0 0.0
      %489 = vmatmul.mubr.f32.gmra.mxu0 %v264
      %v490 = vpop.f32.mrf.mxu0
      %v491 = vadd.f32 0.0, %v490
      %v492 = vpop.f32.mrf.mxu0
      %v493 = vadd.f32 0.0, %v492
      %494 = vmatprep.mubr.f32.mxu0 0.0
      %495 = vmatmul.mubr.f32.gmra.mxu0 %v267
      %v496 = vpop.f32.mrf.mxu0
      %v497 = vadd.f32 0.0, %v496
      %v498 = vpop.f32.mrf.mxu0
      %v499 = vadd.f32 0.0, %v498
      %500 = vmatprep.mubr.f32.mxu0 0.0
      %501 = vmatmul.mubr.f32.gmra.mxu0 %v270
      %v502 = vpop.f32.mrf.mxu0
      %v503 = vadd.f32 0.0, %v502
      %v504 = vpop.f32.mrf.mxu0
      %v505 = vadd.f32 0.0, %v504
      %506 = vmatprep.mubr.f32.mxu0 0.0
      %507 = vmatmul.mubr.f32.gmra.mxu0 %v273
      %v508 = vpop.f32.mrf.mxu0
      %v509 = vadd.f32 0.0, %v508
      %v510 = vpop.f32.mrf.mxu0
      %v511 = vadd.f32 0.0, %v510
      %512 = vmatprep.mubr.f32.mxu0 0.0
      %513 = vmatmul.mubr.f32.gmra.mxu0 %v276
      %v514 = vpop.f32.mrf.mxu0
      %v515 = vadd.f32 0.0, %v514
      %v516 = vpop.f32.mrf.mxu0
      %v517 = vadd.f32 0.0, %v516
      %518 = vmatprep.mubr.f32.mxu0 0.0
      %519 = vmatmul.mubr.f32.gmra.mxu0 %v279
      %v520 = vpop.f32.mrf.mxu0
      %v521 = vadd.f32 0.0, %v520
      %v522 = vpop.f32.mrf.mxu0
      %v523 = vadd.f32 0.0, %v522
      %524 = vmatprep.mubr.f32.mxu0 0.0
      %525 = vmatmul.mubr.f32.gmra.mxu0 %v282
      %v526 = vpop.f32.mrf.mxu0
      %v527 = vadd.f32 0.0, %v526
      %v528 = vpop.f32.mrf.mxu0
      %v529 = vadd.f32 0.0, %v528
      %530 = vmatprep.mubr.f32.mxu0 0.0
      %531 = vmatmul.mubr.f32.gmra.mxu0 %v285
      %v532 = vpop.f32.mrf.mxu0
      %v533 = vadd.f32 0.0, %v532
      %v534 = vpop.f32.mrf.mxu0
      %v535 = vadd.f32 0.0, %v534
      %536 = vmatprep.mubr.f32.mxu0 0.0
      %537 = vmatmul.mubr.f32.gmra.mxu0 %v288
      %v538 = vpop.f32.mrf.mxu0
      %v539 = vadd.f32 0.0, %v538
      %v540 = vpop.f32.mrf.mxu0
      %v541 = vadd.f32 0.0, %v540
      %542 = vmatprep.mubr.f32.mxu0 0.0
      %543 = vmatmul.mubr.f32.gmra.mxu0 %v291
      %v544 = vpop.f32.mrf.mxu0
      %v545 = vadd.f32 0.0, %v544
      %v546 = vpop.f32.mrf.mxu0
      %v547 = vadd.f32 0.0, %v546
      %548 = vmatprep.mubr.f32.mxu0 0.0
      %549 = vmatmul.mubr.f32.gmra.mxu0 %v294
      %v550 = vpop.f32.mrf.mxu0
      %v551 = vadd.f32 0.0, %v550
      %v552 = vpop.f32.mrf.mxu0
      %v553 = vadd.f32 0.0, %v552
      %554 = vmatprep.mubr.f32.mxu0 0.0
      %555 = vmatmul.mubr.f32.gmra.mxu0 %v297
      %v556 = vpop.f32.mrf.mxu0
      %v557 = vadd.f32 0.0, %v556
      %v558 = vpop.f32.mrf.mxu0
      %v559 = vadd.f32 0.0, %v558
      %560 = vmatprep.mubr.f32.mxu0 0.0
      %561 = vmatmul.mubr.f32.gmra.mxu0 %v300
      %v562 = vpop.f32.mrf.mxu0
      %v563 = vadd.f32 0.0, %v562
      %v564 = vpop.f32.mrf.mxu0
      %v565 = vadd.f32 0.0, %v564
      %566 = vmatprep.mubr.f32.mxu0 0.0
      %567 = vmatmul.mubr.f32.gmra.mxu0 %v303
      %v568 = vpop.f32.mrf.mxu0
      %v569 = vadd.f32 0.0, %v568
      %v570 = vpop.f32.mrf.mxu0
      %v571 = vadd.f32 0.0, %v570
      %572 = vmatprep.mubr.f32.mxu0 0.0
      %573 = vmatmul.mubr.f32.gmra.mxu0 %v306
      %v574 = vpop.f32.mrf.mxu0
      %v575 = vadd.f32 0.0, %v574
      %v576 = vpop.f32.mrf.mxu0
      %v577 = vadd.f32 0.0, %v576
      %578 = vmatprep.mubr.f32.mxu0 0.0
      %579 = vmatmul.mubr.f32.gmra.mxu0 %v309
      %v580 = vpop.f32.mrf.mxu0
      %v581 = vadd.f32 0.0, %v580
      %v582 = vpop.f32.mrf.mxu0
      %v583 = vadd.f32 0.0, %v582
      %584 = vmatprep.mubr.f32.mxu0 0.0
      %585 = vmatmul.mubr.f32.gmra.mxu0 %v312
      %v586 = vpop.f32.mrf.mxu0
      %v587 = vadd.f32 0.0, %v586
      %v588 = vpop.f32.mrf.mxu0
      %v589 = vadd.f32 0.0, %v588
      %590 = vmatprep.mubr.f32.mxu0 0.0
      %591 = vmatmul.mubr.f32.gmra.mxu0 %v315
      %v592 = vpop.f32.mrf.mxu0
      %v593 = vadd.f32 0.0, %v592
      %v594 = vpop.f32.mrf.mxu0
      %v595 = vadd.f32 0.0, %v594
      %596 = vmatprep.mubr.f32.mxu0 0.0
      %597 = vmatmul.mubr.f32.gmra.mxu0 %v318
      %v598 = vpop.f32.mrf.mxu0
      %v599 = vadd.f32 0.0, %v598
      %v600 = vpop.f32.mrf.mxu0
      %v601 = vadd.f32 0.0, %v600
      %602 = vmatprep.mubr.f32.mxu0 0.0
      %603 = vmatmul.mubr.f32.gmra.mxu0 %v321
      %v604 = vpop.f32.mrf.mxu0
      %v605 = vadd.f32 0.0, %v604
      %v606 = vpop.f32.mrf.mxu0
      %v607 = vadd.f32 0.0, %v606
      %608 = vmatprep.mubr.f32.mxu0 0.0
      %609 = vmatmul.mubr.f32.gmra.mxu0 %v324
      %v610 = vpop.f32.mrf.mxu0
      %v611 = vadd.f32 0.0, %v610
      %v612 = vpop.f32.mrf.mxu0
      %v613 = vadd.f32 0.0, %v612
      %614 = vmatprep.mubr.f32.mxu0 0.0
      %615 = vmatmul.mubr.f32.gmra.mxu0 %v327
      %v616 = vpop.f32.mrf.mxu0
      %v617 = vadd.f32 0.0, %v616
      %v618 = vpop.f32.mrf.mxu0
      %v619 = vadd.f32 0.0, %v618
      %620 = vmatprep.mubr.f32.mxu0 0.0
      %621 = vmatmul.mubr.f32.gmra.mxu0 %v330
      %v622 = vpop.f32.mrf.mxu0
      %v623 = vadd.f32 0.0, %v622
      %v624 = vpop.f32.mrf.mxu0
      %v625 = vadd.f32 0.0, %v624
      %626 = vmatprep.mubr.f32.mxu0 0.0
      %627 = vmatmul.mubr.f32.gmra.mxu0 %v333
      %v628 = vpop.f32.mrf.mxu0
      %v629 = vadd.f32 0.0, %v628
      %v630 = vpop.f32.mrf.mxu0
      %v631 = vadd.f32 0.0, %v630
      %632 = vmatprep.mubr.f32.mxu0 0.0
      %633 = vmatmul.mubr.f32.gmra.mxu0 %v336
      %v634 = vpop.f32.mrf.mxu0
      %v635 = vadd.f32 0.0, %v634
      %v636 = vpop.f32.mrf.mxu0
      %v637 = vadd.f32 0.0, %v636
      %638 = vmatprep.mubr.f32.mxu0 0.0
      %639 = vmatmul.mubr.f32.gmra.mxu0 %v339
      %v640 = vpop.f32.mrf.mxu0
      %v641 = vadd.f32 0.0, %v640
      %v642 = vpop.f32.mrf.mxu0
      %v643 = vadd.f32 0.0, %v642
      %644 = vmatprep.mubr.f32.mxu0 0.0
      %645 = vmatmul.mubr.f32.gmra.mxu0 %v342
      %v646 = vpop.f32.mrf.mxu0
      %v647 = vadd.f32 0.0, %v646
      %v648 = vpop.f32.mrf.mxu0
      %v649 = vadd.f32 0.0, %v648
      %650 = vmatprep.mubr.f32.mxu0 0.0
      %651 = vmatmul.mubr.f32.gmra.mxu0 %v345
      %v652 = vpop.f32.mrf.mxu0
      %v653 = vadd.f32 0.0, %v652
      %v654 = vpop.f32.mrf.mxu0
      %v655 = vadd.f32 0.0, %v654
      %656 = vmatprep.mubr.f32.mxu0 0.0
      %657 = vmatmul.mubr.f32.gmra.mxu0 %v348
      %v658 = vpop.f32.mrf.mxu0
      %v659 = vadd.f32 0.0, %v658
      %v660 = vpop.f32.mrf.mxu0
      %v661 = vadd.f32 0.0, %v660
      %662 = vmatprep.mubr.f32.mxu0 0.0
      %663 = vmatmul.mubr.f32.gmra.mxu0 %v351
      %v664 = vpop.f32.mrf.mxu0
      %v665 = vadd.f32 0.0, %v664
      %v666 = vpop.f32.mrf.mxu0
      %v667 = vadd.f32 0.0, %v666
      %668 = vmatprep.mubr.f32.mxu0 0.0
      %669 = vmatmul.mubr.f32.gmra.mxu0 %v354
      %v670 = vpop.f32.mrf.mxu0
      %v671 = vadd.f32 0.0, %v670
      %v672 = vpop.f32.mrf.mxu0
      %v673 = vadd.f32 0.0, %v672
      %674 = vmatprep.mubr.f32.mxu0 0.0
      %675 = vmatmul.mubr.f32.gmra.mxu0 %v357
      %v676 = vpop.f32.mrf.mxu0
      %v677 = vadd.f32 0.0, %v676
      %v678 = vpop.f32.mrf.mxu0
      %v679 = vadd.f32 0.0, %v678
      %680 = vmatprep.mubr.f32.mxu0 0.0
      %681 = vmatmul.mubr.f32.gmra.mxu0 %v360
      %v682 = vpop.f32.mrf.mxu0
      %v683 = vadd.f32 0.0, %v682
      %v684 = vpop.f32.mrf.mxu0
      %v685 = vadd.f32 0.0, %v684
      %686 = vmatprep.mubr.f32.mxu0 0.0
      %687 = vmatmul.mubr.f32.gmra.mxu0 %v363
      %v688 = vpop.f32.mrf.mxu0
      %v689 = vadd.f32 0.0, %v688
      %v690 = vpop.f32.mrf.mxu0
      %v691 = vadd.f32 0.0, %v690
      %692 = vmatprep.mubr.f32.mxu0 0.0
      %693 = vmatmul.mubr.f32.gmra.mxu0 %v366
      %v694 = vpop.f32.mrf.mxu0
      %v695 = vadd.f32 0.0, %v694
      %v696 = vpop.f32.mrf.mxu0
      %v697 = vadd.f32 0.0, %v696
      %698 = vmatprep.mubr.f32.mxu0 0.0
      %699 = vmatmul.mubr.f32.gmra.mxu0 %v369
      %v700 = vpop.f32.mrf.mxu0
      %v701 = vadd.f32 0.0, %v700
      %v702 = vpop.f32.mrf.mxu0
      %v703 = vadd.f32 0.0, %v702
      %704 = vmatprep.mubr.f32.mxu0 0.0
      %705 = vmatmul.mubr.f32.gmra.mxu0 %v372
      %v706 = vpop.f32.mrf.mxu0
      %v707 = vadd.f32 0.0, %v706
      %v708 = vpop.f32.mrf.mxu0
      %v709 = vadd.f32 0.0, %v708
      %710 = vmatprep.mubr.f32.mxu0 0.0
      %711 = vmatmul.mubr.f32.gmra.mxu0 %v375
      %v712 = vpop.f32.mrf.mxu0
      %v713 = vadd.f32 0.0, %v712
      %v714 = vpop.f32.mrf.mxu0
      %v715 = vadd.f32 0.0, %v714
      %716 = vmatprep.mubr.f32.mxu0 0.0
      %717 = vmatmul.mubr.f32.gmra.mxu0 %v378
      %v718 = vpop.f32.mrf.mxu0
      %v719 = vadd.f32 0.0, %v718
      %v720 = vpop.f32.mrf.mxu0
      %v721 = vadd.f32 0.0, %v720
      %722 = vmatprep.mubr.f32.mxu0 0.0
      %723 = vmatmul.mubr.f32.gmra.mxu0 %v381
      %v724 = vpop.f32.mrf.mxu0
      %v725 = vadd.f32 0.0, %v724
      %v726 = vpop.f32.mrf.mxu0
      %v727 = vadd.f32 0.0, %v726
      %728 = vmatprep.mubr.f32.mxu0 0.0
      %729 = vmatmul.mubr.f32.gmra.mxu0 %v384
      %v730 = vpop.f32.mrf.mxu0
      %v731 = vadd.f32 0.0, %v730
      %v732 = vpop.f32.mrf.mxu0
      %v733 = vadd.f32 0.0, %v732
      %734 = vmatprep.mubr.f32.mxu0 0.0
      %735 = vmatmul.mubr.f32.gmra.mxu0 %v387
      %v736 = vpop.f32.mrf.mxu0
      %v737 = vadd.f32 0.0, %v736
      %v738 = vpop.f32.mrf.mxu0
      %v739 = vadd.f32 0.0, %v738
      %740 = vmatprep.mubr.f32.mxu0 0.0
      %741 = vmatmul.mubr.f32.gmra.mxu0 %v390
      %v742 = vpop.f32.mrf.mxu0
      %v743 = vadd.f32 0.0, %v742
      %v744 = vpop.f32.mrf.mxu0
      %v745 = vadd.f32 0.0, %v744
      %746 = vmatprep.mubr.f32.mxu0 0.0
      %747 = vmatmul.mubr.f32.gmra.mxu0 %v393
      %v748 = vpop.f32.mrf.mxu0
      %v749 = vadd.f32 0.0, %v748
      %v750 = vpop.f32.mrf.mxu0
      %v751 = vadd.f32 0.0, %v750
      %752 = vdwg.mxu0
      %753 = vxpose.xlu0.b32.start [1/16] %v467, 128
      %754 = vxpose.xlu0.b32.cont [2/16] %v473, 128
      %755 = vxpose.xlu0.b32.cont [3/16] %v479, 128
      %756 = vxpose.xlu0.b32.cont [4/16] %v485, 128
      %757 = vxpose.xlu0.b32.cont [5/16] %v491, 128
      %758 = vxpose.xlu0.b32.cont [6/16] %v497, 128
      %759 = vxpose.xlu0.b32.cont [7/16] %v503, 128
      %760 = vxpose.xlu0.b32.cont [8/16] %v509, 128
      %761 = vxpose.xlu0.b32.cont [9/16] %v515, 128
      %762 = vxpose.xlu0.b32.cont [10/16] %v521, 128
      %763 = vxpose.xlu0.b32.cont [11/16] %v527, 128
      %764 = vxpose.xlu0.b32.cont [12/16] %v533, 128
      %765 = vxpose.xlu0.b32.cont [13/16] %v539, 128
      %766 = vxpose.xlu0.b32.cont [14/16] %v545, 128
      %767 = vxpose.xlu0.b32.cont [15/16] %v551, 128
      %768 = vxpose.xlu0.b32.end [16/16] %v557, 128
      %v769 = vpop.trf.xlu0
      %v770 = vpop.trf.xlu0
      %v771 = vpop.trf.xlu0
      %v772 = vpop.trf.xlu0
      %v773 = vpop.trf.xlu0
      %v774 = vpop.trf.xlu0
      %v775 = vpop.trf.xlu0
      %v776 = vpop.trf.xlu0
      %v777 = vpop.trf.xlu0
      %v778 = vpop.trf.xlu0
      %v779 = vpop.trf.xlu0
      %v780 = vpop.trf.xlu0
      %v781 = vpop.trf.xlu0
      %v782 = vpop.trf.xlu0
      %v783 = vpop.trf.xlu0
      %v784 = vpop.trf.xlu0
      %785 = vxpose.xlu0.b32.start [1/16] %v469, 128
      %786 = vxpose.xlu0.b32.cont [2/16] %v475, 128
      %787 = vxpose.xlu0.b32.cont [3/16] %v481, 128
      %788 = vxpose.xlu0.b32.cont [4/16] %v487, 128
      %789 = vxpose.xlu0.b32.cont [5/16] %v493, 128
      %790 = vxpose.xlu0.b32.cont [6/16] %v499, 128
      %791 = vxpose.xlu0.b32.cont [7/16] %v505, 128
      %792 = vxpose.xlu0.b32.cont [8/16] %v511, 128
      %793 = vxpose.xlu0.b32.cont [9/16] %v517, 128
      %794 = vxpose.xlu0.b32.cont [10/16] %v523, 128
      %795 = vxpose.xlu0.b32.cont [11/16] %v529, 128
      %796 = vxpose.xlu0.b32.cont [12/16] %v535, 128
      %797 = vxpose.xlu0.b32.cont [13/16] %v541, 128
      %798 = vxpose.xlu0.b32.cont [14/16] %v547, 128
      %799 = vxpose.xlu0.b32.cont [15/16] %v553, 128
      %800 = vxpose.xlu0.b32.end [16/16] %v559, 128
      %v801 = vpop.trf.xlu0
      %v802 = vpop.trf.xlu0
      %v803 = vpop.trf.xlu0
      %v804 = vpop.trf.xlu0
      %v805 = vpop.trf.xlu0
      %v806 = vpop.trf.xlu0
      %v807 = vpop.trf.xlu0
      %v808 = vpop.trf.xlu0
      %v809 = vpop.trf.xlu0
      %v810 = vpop.trf.xlu0
      %v811 = vpop.trf.xlu0
      %v812 = vpop.trf.xlu0
      %v813 = vpop.trf.xlu0
      %v814 = vpop.trf.xlu0
      %v815 = vpop.trf.xlu0
      %v816 = vpop.trf.xlu0
      %v817 = vpack.c.bf16 %v770, %v769
      %v818 = vpack.c.bf16 %v772, %v771
      %v819 = vpack.c.bf16 %v774, %v773
      %v820 = vpack.c.bf16 %v776, %v775
      %v821 = vpack.c.bf16 %v778, %v777
      %v822 = vpack.c.bf16 %v780, %v779
      %v823 = vpack.c.bf16 %v782, %v781
      %v824 = vpack.c.bf16 %v784, %v783
      %v825 = vpack.c.bf16 %v802, %v801
      %v826 = vpack.c.bf16 %v804, %v803
      %v827 = vpack.c.bf16 %v806, %v805
      %v828 = vpack.c.bf16 %v808, %v807
      %v829 = vpack.c.bf16 %v810, %v809
      %v830 = vpack.c.bf16 %v812, %v811
      %v831 = vpack.c.bf16 %v814, %v813
      %v832 = vpack.c.bf16 %v816, %v815
      %833 = vxpose.xlu0.b32.start [1/16] %v659, 128
      %834 = vxpose.xlu0.b32.cont [2/16] %v665, 128
      %835 = vxpose.xlu0.b32.cont [3/16] %v671, 128
      %836 = vxpose.xlu0.b32.cont [4/16] %v677, 128
      %837 = vxpose.xlu0.b32.cont [5/16] %v683, 128
      %838 = vxpose.xlu0.b32.cont [6/16] %v689, 128
      %839 = vxpose.xlu0.b32.cont [7/16] %v695, 128
      %840 = vxpose.xlu0.b32.cont [8/16] %v701, 128
      %841 = vxpose.xlu0.b32.cont [9/16] %v707, 128
      %842 = vxpose.xlu0.b32.cont [10/16] %v713, 128
      %843 = vxpose.xlu0.b32.cont [11/16] %v719, 128
      %844 = vxpose.xlu0.b32.cont [12/16] %v725, 128
      %845 = vxpose.xlu0.b32.cont [13/16] %v731, 128
      %846 = vxpose.xlu0.b32.cont [14/16] %v737, 128
      %847 = vxpose.xlu0.b32.cont [15/16] %v743, 128
      %848 = vxpose.xlu0.b32.end [16/16] %v749, 128
      %v849 = vpop.trf.xlu0
      %v850 = vpop.trf.xlu0
      %v851 = vpop.trf.xlu0
      %v852 = vpop.trf.xlu0
      %v853 = vpop.trf.xlu0
      %v854 = vpop.trf.xlu0
      %v855 = vpop.trf.xlu0
      %v856 = vpop.trf.xlu0
      %v857 = vpop.trf.xlu0
      %v858 = vpop.trf.xlu0
      %v859 = vpop.trf.xlu0
      %v860 = vpop.trf.xlu0
      %v861 = vpop.trf.xlu0
      %v862 = vpop.trf.xlu0
      %v863 = vpop.trf.xlu0
      %v864 = vpop.trf.xlu0
      %865 = vxpose.xlu0.b32.start [1/16] %v661, 128
      %866 = vxpose.xlu0.b32.cont [2/16] %v667, 128
      %867 = vxpose.xlu0.b32.cont [3/16] %v673, 128
      %868 = vxpose.xlu0.b32.cont [4/16] %v679, 128
      %869 = vxpose.xlu0.b32.cont [5/16] %v685, 128
      %870 = vxpose.xlu0.b32.cont [6/16] %v691, 128
      %871 = vxpose.xlu0.b32.cont [7/16] %v697, 128
      %872 = vxpose.xlu0.b32.cont [8/16] %v703, 128
      %873 = vxpose.xlu0.b32.cont [9/16] %v709, 128
      %874 = vxpose.xlu0.b32.cont [10/16] %v715, 128
      %875 = vxpose.xlu0.b32.cont [11/16] %v721, 128
      %876 = vxpose.xlu0.b32.cont [12/16] %v727, 128
      %877 = vxpose.xlu0.b32.cont [13/16] %v733, 128
      %878 = vxpose.xlu0.b32.cont [14/16] %v739, 128
      %879 = vxpose.xlu0.b32.cont [15/16] %v745, 128
      %880 = vxpose.xlu0.b32.end [16/16] %v751, 128
      %v881 = vpop.trf.xlu0
      %v882 = vpop.trf.xlu0
      %v883 = vpop.trf.xlu0
      %v884 = vpop.trf.xlu0
      %v885 = vpop.trf.xlu0
      %v886 = vpop.trf.xlu0
      %v887 = vpop.trf.xlu0
      %v888 = vpop.trf.xlu0
      %v889 = vpop.trf.xlu0
      %v890 = vpop.trf.xlu0
      %v891 = vpop.trf.xlu0
      %v892 = vpop.trf.xlu0
      %v893 = vpop.trf.xlu0
      %v894 = vpop.trf.xlu0
      %v895 = vpop.trf.xlu0
      %v896 = vpop.trf.xlu0
      %v897 = vpack.c.bf16 %v850, %v849
      %v898 = vpack.c.bf16 %v852, %v851
      %v899 = vpack.c.bf16 %v854, %v853
      %v900 = vpack.c.bf16 %v856, %v855
      %v901 = vpack.c.bf16 %v858, %v857
      %v902 = vpack.c.bf16 %v860, %v859
      %v903 = vpack.c.bf16 %v862, %v861
      %v904 = vpack.c.bf16 %v864, %v863
      %v905 = vpack.c.bf16 %v882, %v881
      %v906 = vpack.c.bf16 %v884, %v883
      %v907 = vpack.c.bf16 %v886, %v885
      %v908 = vpack.c.bf16 %v888, %v887
      %v909 = vpack.c.bf16 %v890, %v889
      %v910 = vpack.c.bf16 %v892, %v891
      %v911 = vpack.c.bf16 %v894, %v893
      %v912 = vpack.c.bf16 %v896, %v895
      %v913 = vpack.c.bf16 %v569, %v563
      %v914 = vpack.c.bf16 %v571, %v565
      %v915 = vpack.c.bf16 %v581, %v575
      %v916 = vpack.c.bf16 %v583, %v577
      %v917 = vpack.c.bf16 %v593, %v587
      %v918 = vpack.c.bf16 %v595, %v589
      %v919 = vpack.c.bf16 %v605, %v599
      %v920 = vpack.c.bf16 %v607, %v601
      %v921 = vpack.c.bf16 %v617, %v611
      %v922 = vpack.c.bf16 %v619, %v613
      %v923 = vpack.c.bf16 %v629, %v623
      %v924 = vpack.c.bf16 %v631, %v625
      %v925 = vpack.c.bf16 %v641, %v635
      %v926 = vpack.c.bf16 %v643, %v637
      %v927 = vpack.c.bf16 %v653, %v647
      %v928 = vpack.c.bf16 %v655, %v649
      %vm929 = vcmask 261120
      %v931 = vsel %vm929, %v817, 0
      %v934 = vsel %vm929, %v818, 0
      %v937 = vsel %vm929, %v819, 0
      %v940 = vsel %vm929, %v820, 0
      %v943 = vsel %vm929, %v821, 0
      %v946 = vsel %vm929, %v822, 0
      %v949 = vsel %vm929, %v823, 0
      %v952 = vsel %vm929, %v824, 0
      %v955 = vsel %vm929, %v825, 0
      %v958 = vsel %vm929, %v826, 0
      %v961 = vsel %vm929, %v827, 0
      %v964 = vsel %vm929, %v828, 0
      %v967 = vsel %vm929, %v829, 0
      %v970 = vsel %vm929, %v830, 0
      %v973 = vsel %vm929, %v831, 0
      %v976 = vsel %vm929, %v832, 0
      %978 = vmatprep.subr.bf16.mxu0 0
      %979 = vmatpush1.bf16.msra.mxu0 0
      %980 = vmatprep.subr.bf16.mxu0 0
      %981 = vmatpush1.bf16.msra.mxu0 0
      %982 = vmatprep.subr.bf16.mxu0 0
      %983 = vmatpush1.bf16.msra.mxu0 0
      %984 = vmatprep.subr.bf16.mxu0 0
      %985 = vmatpush1.bf16.msra.mxu0 0
      %986 = vmatprep.subr.bf16.mxu0 0
      %987 = vmatpush1.bf16.msra.mxu0 0
      %988 = vmatprep.subr.bf16.mxu0 0
      %989 = vmatpush1.bf16.msra.mxu0 0
      %990 = vmatprep.subr.bf16.mxu0 %v916
      %991 = vmatpush1.bf16.msra.mxu0 %v915
      %992 = vmatprep.subr.bf16.mxu0 %v914
      %993 = vmatpush1.bf16.msra.mxu0 %v913
      %994 = vmatprep.subr.bf16.mxu0 0
      %995 = vmatpush2.bf16.msra.mxu0 0
      %996 = vmatprep.subr.bf16.mxu0 0
      %997 = vmatpush2.bf16.msra.mxu0 0
      %998 = vmatprep.subr.bf16.mxu0 0
      %999 = vmatpush2.bf16.msra.mxu0 0
      %1000 = vmatprep.subr.bf16.mxu0 0
      %1001 = vmatpush2.bf16.msra.mxu0 0
      %1002 = vmatprep.subr.bf16.mxu0 0
      %1003 = vmatpush2.bf16.msra.mxu0 0
      %1004 = vmatprep.subr.bf16.mxu0 0
      %1005 = vmatpush2.bf16.msra.mxu0 0
      %1006 = vmatprep.subr.bf16.mxu0 0
      %1007 = vmatpush2.bf16.msra.mxu0 0
      %1008 = vmatprep.subr.bf16.mxu0 0
      %1009 = vmatpush2.bf16.msra.mxu0 0
      %1010 = vmatprep.mubr.bf16.mxu0 0
      %1011 = vmatmul.mubr.bf16.gmra.mxu0 %v931
      %v1012 = vpop.f32.mrf.mxu0
      %v1013 = vadd.f32 0.0, %v1012
      %v1014 = vpop.f32.mrf.mxu0
      %v1015 = vadd.f32 0.0, %v1014
      %v1016 = vpop.f32.mrf.mxu0
      %v1017 = vadd.f32 0.0, %v1016
      %v1018 = vpop.f32.mrf.mxu0
      %v1019 = vadd.f32 0.0, %v1018
      %1020 = vmatprep.mubr.bf16.mxu0 0
      %1021 = vmatmul.mubr.bf16.gmra.mxu0 %v934
      %v1022 = vpop.f32.mrf.mxu0
      %v1023 = vadd.f32 0.0, %v1022
      %v1024 = vpop.f32.mrf.mxu0
      %v1025 = vadd.f32 0.0, %v1024
      %v1026 = vpop.f32.mrf.mxu0
      %v1027 = vadd.f32 0.0, %v1026
      %v1028 = vpop.f32.mrf.mxu0
      %v1029 = vadd.f32 0.0, %v1028
      %1030 = vmatprep.mubr.bf16.mxu0 0
      %1031 = vmatmul.mubr.bf16.gmra.mxu0 %v937
      %v1032 = vpop.f32.mrf.mxu0
      %v1033 = vadd.f32 0.0, %v1032
      %v1034 = vpop.f32.mrf.mxu0
      %v1035 = vadd.f32 0.0, %v1034
      %v1036 = vpop.f32.mrf.mxu0
      %v1037 = vadd.f32 0.0, %v1036
      %v1038 = vpop.f32.mrf.mxu0
      %v1039 = vadd.f32 0.0, %v1038
      %1040 = vmatprep.mubr.bf16.mxu0 0
      %1041 = vmatmul.mubr.bf16.gmra.mxu0 %v940
      %v1042 = vpop.f32.mrf.mxu0
      %v1043 = vadd.f32 0.0, %v1042
      %v1044 = vpop.f32.mrf.mxu0
      %v1045 = vadd.f32 0.0, %v1044
      %v1046 = vpop.f32.mrf.mxu0
      %v1047 = vadd.f32 0.0, %v1046
      %v1048 = vpop.f32.mrf.mxu0
      %v1049 = vadd.f32 0.0, %v1048
      %1050 = vmatprep.mubr.bf16.mxu0 0
      %1051 = vmatmul.mubr.bf16.gmra.mxu0 %v943
      %v1052 = vpop.f32.mrf.mxu0
      %v1053 = vadd.f32 0.0, %v1052
      %v1054 = vpop.f32.mrf.mxu0
      %v1055 = vadd.f32 0.0, %v1054
      %v1056 = vpop.f32.mrf.mxu0
      %v1057 = vadd.f32 0.0, %v1056
      %v1058 = vpop.f32.mrf.mxu0
      %v1059 = vadd.f32 0.0, %v1058
      %1060 = vmatprep.mubr.bf16.mxu0 0
      %1061 = vmatmul.mubr.bf16.gmra.mxu0 %v946
      %v1062 = vpop.f32.mrf.mxu0
      %v1063 = vadd.f32 0.0, %v1062
      %v1064 = vpop.f32.mrf.mxu0
      %v1065 = vadd.f32 0.0, %v1064
      %v1066 = vpop.f32.mrf.mxu0
      %v1067 = vadd.f32 0.0, %v1066
      %v1068 = vpop.f32.mrf.mxu0
      %v1069 = vadd.f32 0.0, %v1068
      %1070 = vmatprep.mubr.bf16.mxu0 0
      %1071 = vmatmul.mubr.bf16.gmra.mxu0 %v949
      %v1072 = vpop.f32.mrf.mxu0
      %v1073 = vadd.f32 0.0, %v1072
      %v1074 = vpop.f32.mrf.mxu0
      %v1075 = vadd.f32 0.0, %v1074
      %v1076 = vpop.f32.mrf.mxu0
      %v1077 = vadd.f32 0.0, %v1076
      %v1078 = vpop.f32.mrf.mxu0
      %v1079 = vadd.f32 0.0, %v1078
      %1080 = vmatprep.mubr.bf16.mxu0 0
      %1081 = vmatmul.mubr.bf16.gmra.mxu0 %v952
      %v1082 = vpop.f32.mrf.mxu0
      %v1083 = vadd.f32 0.0, %v1082
      %v1084 = vpop.f32.mrf.mxu0
      %v1085 = vadd.f32 0.0, %v1084
      %v1086 = vpop.f32.mrf.mxu0
      %v1087 = vadd.f32 0.0, %v1086
      %v1088 = vpop.f32.mrf.mxu0
      %v1089 = vadd.f32 0.0, %v1088
      %1090 = vmatprep.mubr.bf16.mxu0 0
      %1091 = vmatmul.mubr.bf16.gmra.mxu0 %v955
      %v1092 = vpop.f32.mrf.mxu0
      %v1093 = vadd.f32 0.0, %v1092
      %v1094 = vpop.f32.mrf.mxu0
      %v1095 = vadd.f32 0.0, %v1094
      %v1096 = vpop.f32.mrf.mxu0
      %v1097 = vadd.f32 0.0, %v1096
      %v1098 = vpop.f32.mrf.mxu0
      %v1099 = vadd.f32 0.0, %v1098
      %1100 = vmatprep.mubr.bf16.mxu0 0
      %1101 = vmatmul.mubr.bf16.gmra.mxu0 %v958
      %v1102 = vpop.f32.mrf.mxu0
      %v1103 = vadd.f32 0.0, %v1102
      %v1104 = vpop.f32.mrf.mxu0
      %v1105 = vadd.f32 0.0, %v1104
      %v1106 = vpop.f32.mrf.mxu0
      %v1107 = vadd.f32 0.0, %v1106
      %v1108 = vpop.f32.mrf.mxu0
      %v1109 = vadd.f32 0.0, %v1108
      %1110 = vmatprep.mubr.bf16.mxu0 0
      %1111 = vmatmul.mubr.bf16.gmra.mxu0 %v961
      %v1112 = vpop.f32.mrf.mxu0
      %v1113 = vadd.f32 0.0, %v1112
      %v1114 = vpop.f32.mrf.mxu0
      %v1115 = vadd.f32 0.0, %v1114
      %v1116 = vpop.f32.mrf.mxu0
      %v1117 = vadd.f32 0.0, %v1116
      %v1118 = vpop.f32.mrf.mxu0
      %v1119 = vadd.f32 0.0, %v1118
      %1120 = vmatprep.mubr.bf16.mxu0 0
      %1121 = vmatmul.mubr.bf16.gmra.mxu0 %v964
      %v1122 = vpop.f32.mrf.mxu0
      %v1123 = vadd.f32 0.0, %v1122
      %v1124 = vpop.f32.mrf.mxu0
      %v1125 = vadd.f32 0.0, %v1124
      %v1126 = vpop.f32.mrf.mxu0
      %v1127 = vadd.f32 0.0, %v1126
      %v1128 = vpop.f32.mrf.mxu0
      %v1129 = vadd.f32 0.0, %v1128
      %1130 = vmatprep.mubr.bf16.mxu0 0
      %1131 = vmatmul.mubr.bf16.gmra.mxu0 %v967
      %v1132 = vpop.f32.mrf.mxu0
      %v1133 = vadd.f32 0.0, %v1132
      %v1134 = vpop.f32.mrf.mxu0
      %v1135 = vadd.f32 0.0, %v1134
      %v1136 = vpop.f32.mrf.mxu0
      %v1137 = vadd.f32 0.0, %v1136
      %v1138 = vpop.f32.mrf.mxu0
      %v1139 = vadd.f32 0.0, %v1138
      %1140 = vmatprep.mubr.bf16.mxu0 0
      %1141 = vmatmul.mubr.bf16.gmra.mxu0 %v970
      %v1142 = vpop.f32.mrf.mxu0
      %v1143 = vadd.f32 0.0, %v1142
      %v1144 = vpop.f32.mrf.mxu0
      %v1145 = vadd.f32 0.0, %v1144
      %v1146 = vpop.f32.mrf.mxu0
      %v1147 = vadd.f32 0.0, %v1146
      %v1148 = vpop.f32.mrf.mxu0
      %v1149 = vadd.f32 0.0, %v1148
      %1150 = vmatprep.mubr.bf16.mxu0 0
      %1151 = vmatmul.mubr.bf16.gmra.mxu0 %v973
      %v1152 = vpop.f32.mrf.mxu0
      %v1153 = vadd.f32 0.0, %v1152
      %v1154 = vpop.f32.mrf.mxu0
      %v1155 = vadd.f32 0.0, %v1154
      %v1156 = vpop.f32.mrf.mxu0
      %v1157 = vadd.f32 0.0, %v1156
      %v1158 = vpop.f32.mrf.mxu0
      %v1159 = vadd.f32 0.0, %v1158
      %1160 = vmatprep.mubr.bf16.mxu0 0
      %1161 = vmatmul.mubr.bf16.gmra.mxu0 %v976
      %v1162 = vpop.f32.mrf.mxu0
      %v1163 = vadd.f32 0.0, %v1162
      %v1164 = vpop.f32.mrf.mxu0
      %v1165 = vadd.f32 0.0, %v1164
      %v1166 = vpop.f32.mrf.mxu0
      %v1167 = vadd.f32 0.0, %v1166
      %v1168 = vpop.f32.mrf.mxu0
      %v1169 = vadd.f32 0.0, %v1168
      %1170 = vdwg.mxu0
      %v1171 = vmax.f32 %v1013, %v1015
      %1172 = vmax.xlane.f32.xlu0 %v1171
      %v1173 = vpop.xlane.xlu0 %1172
      %v1174 = vmax.f32 %v1017, %v1019
      %1175 = vmax.xlane.f32.xlu0 %v1174
      %v1176 = vpop.xlane.xlu0 %1175
      %v1177 = vmax.f32 %v1023, %v1025
      %1178 = vmax.xlane.f32.xlu0 %v1177
      %v1179 = vpop.xlane.xlu0 %1178
      %v1180 = vmax.f32 %v1027, %v1029
      %1181 = vmax.xlane.f32.xlu0 %v1180
      %v1182 = vpop.xlane.xlu0 %1181
      %v1183 = vmax.f32 %v1033, %v1035
      %1184 = vmax.xlane.f32.xlu0 %v1183
      %v1185 = vpop.xlane.xlu0 %1184
      %v1186 = vmax.f32 %v1037, %v1039
      %1187 = vmax.xlane.f32.xlu0 %v1186
      %v1188 = vpop.xlane.xlu0 %1187
      %v1189 = vmax.f32 %v1043, %v1045
      %1190 = vmax.xlane.f32.xlu0 %v1189
      %v1191 = vpop.xlane.xlu0 %1190
      %v1192 = vmax.f32 %v1047, %v1049
      %1193 = vmax.xlane.f32.xlu0 %v1192
      %v1194 = vpop.xlane.xlu0 %1193
      %v1195 = vmax.f32 %v1053, %v1055
      %1196 = vmax.xlane.f32.xlu0 %v1195
      %v1197 = vpop.xlane.xlu0 %1196
      %v1198 = vmax.f32 %v1057, %v1059
      %1199 = vmax.xlane.f32.xlu0 %v1198
      %v1200 = vpop.xlane.xlu0 %1199
      %v1201 = vmax.f32 %v1063, %v1065
      %1202 = vmax.xlane.f32.xlu0 %v1201
      %v1203 = vpop.xlane.xlu0 %1202
      %v1204 = vmax.f32 %v1067, %v1069
      %1205 = vmax.xlane.f32.xlu0 %v1204
      %v1206 = vpop.xlane.xlu0 %1205
      %v1207 = vmax.f32 %v1073, %v1075
      %1208 = vmax.xlane.f32.xlu0 %v1207
      %v1209 = vpop.xlane.xlu0 %1208
      %v1210 = vmax.f32 %v1077, %v1079
      %1211 = vmax.xlane.f32.xlu0 %v1210
      %v1212 = vpop.xlane.xlu0 %1211
      %v1213 = vmax.f32 %v1083, %v1085
      %1214 = vmax.xlane.f32.xlu0 %v1213
      %v1215 = vpop.xlane.xlu0 %1214
      %v1216 = vmax.f32 %v1087, %v1089
      %1217 = vmax.xlane.f32.xlu0 %v1216
      %v1218 = vpop.xlane.xlu0 %1217
      %v1219 = vmax.f32 %v1093, %v1095
      %1220 = vmax.xlane.f32.xlu0 %v1219
      %v1221 = vpop.xlane.xlu0 %1220
      %v1222 = vmax.f32 %v1097, %v1099
      %1223 = vmax.xlane.f32.xlu0 %v1222
      %v1224 = vpop.xlane.xlu0 %1223
      %v1225 = vmax.f32 %v1103, %v1105
      %1226 = vmax.xlane.f32.xlu0 %v1225
      %v1227 = vpop.xlane.xlu0 %1226
      %v1228 = vmax.f32 %v1107, %v1109
      %1229 = vmax.xlane.f32.xlu0 %v1228
      %v1230 = vpop.xlane.xlu0 %1229
      %v1231 = vmax.f32 %v1113, %v1115
      %1232 = vmax.xlane.f32.xlu0 %v1231
      %v1233 = vpop.xlane.xlu0 %1232
      %v1234 = vmax.f32 %v1117, %v1119
      %1235 = vmax.xlane.f32.xlu0 %v1234
      %v1236 = vpop.xlane.xlu0 %1235
      %v1237 = vmax.f32 %v1123, %v1125
      %1238 = vmax.xlane.f32.xlu0 %v1237
      %v1239 = vpop.xlane.xlu0 %1238
      %v1240 = vmax.f32 %v1127, %v1129
      %1241 = vmax.xlane.f32.xlu0 %v1240
      %v1242 = vpop.xlane.xlu0 %1241
      %v1243 = vmax.f32 %v1133, %v1135
      %1244 = vmax.xlane.f32.xlu0 %v1243
      %v1245 = vpop.xlane.xlu0 %1244
      %v1246 = vmax.f32 %v1137, %v1139
      %1247 = vmax.xlane.f32.xlu0 %v1246
      %v1248 = vpop.xlane.xlu0 %1247
      %v1249 = vmax.f32 %v1143, %v1145
      %1250 = vmax.xlane.f32.xlu0 %v1249
      %v1251 = vpop.xlane.xlu0 %1250
      %v1252 = vmax.f32 %v1147, %v1149
      %1253 = vmax.xlane.f32.xlu0 %v1252
      %v1254 = vpop.xlane.xlu0 %1253
      %v1255 = vmax.f32 %v1153, %v1155
      %1256 = vmax.xlane.f32.xlu0 %v1255
      %v1257 = vpop.xlane.xlu0 %1256
      %v1258 = vmax.f32 %v1157, %v1159
      %1259 = vmax.xlane.f32.xlu0 %v1258
      %v1260 = vpop.xlane.xlu0 %1259
      %v1261 = vmax.f32 %v1163, %v1165
      %1262 = vmax.xlane.f32.xlu0 %v1261
      %v1263 = vpop.xlane.xlu0 %1262
      %v1264 = vmax.f32 %v1167, %v1169
      %1265 = vmax.xlane.f32.xlu0 %v1264
      %v1266 = vpop.xlane.xlu0 %1265
      %v1267 = vsub.f32 %v1013, %v1173
      %v1268 = vsub.f32 %v1015, %v1173
      %v1269 = vsub.f32 %v1017, %v1176
      %v1270 = vsub.f32 %v1019, %v1176
      %v1271 = vsub.f32 %v1023, %v1179
      %v1272 = vsub.f32 %v1025, %v1179
      %v1273 = vsub.f32 %v1027, %v1182
      %v1274 = vsub.f32 %v1029, %v1182
      %v1275 = vsub.f32 %v1033, %v1185
      %v1276 = vsub.f32 %v1035, %v1185
      %v1277 = vsub.f32 %v1037, %v1188
      %v1278 = vsub.f32 %v1039, %v1188
      %v1279 = vsub.f32 %v1043, %v1191
      %v1280 = vsub.f32 %v1045, %v1191
      %v1281 = vsub.f32 %v1047, %v1194
      %v1282 = vsub.f32 %v1049, %v1194
      %v1283 = vsub.f32 %v1053, %v1197
      %v1284 = vsub.f32 %v1055, %v1197
      %v1285 = vsub.f32 %v1057, %v1200
      %v1286 = vsub.f32 %v1059, %v1200
      %v1287 = vsub.f32 %v1063, %v1203
      %v1288 = vsub.f32 %v1065, %v1203
      %v1289 = vsub.f32 %v1067, %v1206
      %v1290 = vsub.f32 %v1069, %v1206
      %v1291 = vsub.f32 %v1073, %v1209
      %v1292 = vsub.f32 %v1075, %v1209
      %v1293 = vsub.f32 %v1077, %v1212
      %v1294 = vsub.f32 %v1079, %v1212
      %v1295 = vsub.f32 %v1083, %v1215
      %v1296 = vsub.f32 %v1085, %v1215
      %v1297 = vsub.f32 %v1087, %v1218
      %v1298 = vsub.f32 %v1089, %v1218
      %v1299 = vsub.f32 %v1093, %v1221
      %v1300 = vsub.f32 %v1095, %v1221
      %v1301 = vsub.f32 %v1097, %v1224
      %v1302 = vsub.f32 %v1099, %v1224
      %v1303 = vsub.f32 %v1103, %v1227
      %v1304 = vsub.f32 %v1105, %v1227
      %v1305 = vsub.f32 %v1107, %v1230
      %v1306 = vsub.f32 %v1109, %v1230
      %v1307 = vsub.f32 %v1113, %v1233
      %v1308 = vsub.f32 %v1115, %v1233
      %v1309 = vsub.f32 %v1117, %v1236
      %v1310 = vsub.f32 %v1119, %v1236
      %v1311 = vsub.f32 %v1123, %v1239
      %v1312 = vsub.f32 %v1125, %v1239
      %v1313 = vsub.f32 %v1127, %v1242
      %v1314 = vsub.f32 %v1129, %v1242
      %v1315 = vsub.f32 %v1133, %v1245
      %v1316 = vsub.f32 %v1135, %v1245
      %v1317 = vsub.f32 %v1137, %v1248
      %v1318 = vsub.f32 %v1139, %v1248
      %v1319 = vsub.f32 %v1143, %v1251
      %v1320 = vsub.f32 %v1145, %v1251
      %v1321 = vsub.f32 %v1147, %v1254
      %v1322 = vsub.f32 %v1149, %v1254
      %v1323 = vsub.f32 %v1153, %v1257
      %v1324 = vsub.f32 %v1155, %v1257
      %v1325 = vsub.f32 %v1157, %v1260
      %v1326 = vsub.f32 %v1159, %v1260
      %v1327 = vsub.f32 %v1163, %v1263
      %v1328 = vsub.f32 %v1165, %v1263
      %v1329 = vsub.f32 %v1167, %v1266
      %v1330 = vsub.f32 %v1169, %v1266
      %v1331 = vmul.f32 %v1267, 1.442695
      %v1332 = vpow.pop %v1331
      %v1333 = vmul.f32 %v1268, 1.442695
      %v1334 = vpow.pop %v1333
      %v1335 = vmul.f32 %v1269, 1.442695
      %v1336 = vpow.pop %v1335
      %v1337 = vmul.f32 %v1270, 1.442695
      %v1338 = vpow.pop %v1337
      %v1339 = vmul.f32 %v1271, 1.442695
      %v1340 = vpow.pop %v1339
      %v1341 = vmul.f32 %v1272, 1.442695
      %v1342 = vpow.pop %v1341
      %v1343 = vmul.f32 %v1273, 1.442695
      %v1344 = vpow.pop %v1343
      %v1345 = vmul.f32 %v1274, 1.442695
      %v1346 = vpow.pop %v1345
      %v1347 = vmul.f32 %v1275, 1.442695
      %v1348 = vpow.pop %v1347
      %v1349 = vmul.f32 %v1276, 1.442695
      %v1350 = vpow.pop %v1349
      %v1351 = vmul.f32 %v1277, 1.442695
      %v1352 = vpow.pop %v1351
      %v1353 = vmul.f32 %v1278, 1.442695
      %v1354 = vpow.pop %v1353
      %v1355 = vmul.f32 %v1279, 1.442695
      %v1356 = vpow.pop %v1355
      %v1357 = vmul.f32 %v1280, 1.442695
      %v1358 = vpow.pop %v1357
      %v1359 = vmul.f32 %v1281, 1.442695
      %v1360 = vpow.pop %v1359
      %v1361 = vmul.f32 %v1282, 1.442695
      %v1362 = vpow.pop %v1361
      %v1363 = vmul.f32 %v1283, 1.442695
      %v1364 = vpow.pop %v1363
      %v1365 = vmul.f32 %v1284, 1.442695
      %v1366 = vpow.pop %v1365
      %v1367 = vmul.f32 %v1285, 1.442695
      %v1368 = vpow.pop %v1367
      %v1369 = vmul.f32 %v1286, 1.442695
      %v1370 = vpow.pop %v1369
      %v1371 = vmul.f32 %v1287, 1.442695
      %v1372 = vpow.pop %v1371
      %v1373 = vmul.f32 %v1288, 1.442695
      %v1374 = vpow.pop %v1373
      %v1375 = vmul.f32 %v1289, 1.442695
      %v1376 = vpow.pop %v1375
      %v1377 = vmul.f32 %v1290, 1.442695
      %v1378 = vpow.pop %v1377
      %v1379 = vmul.f32 %v1291, 1.442695
      %v1380 = vpow.pop %v1379
      %v1381 = vmul.f32 %v1292, 1.442695
      %v1382 = vpow.pop %v1381
      %v1383 = vmul.f32 %v1293, 1.442695
      %v1384 = vpow.pop %v1383
      %v1385 = vmul.f32 %v1294, 1.442695
      %v1386 = vpow.pop %v1385
      %v1387 = vmul.f32 %v1295, 1.442695
      %v1388 = vpow.pop %v1387
      %v1389 = vmul.f32 %v1296, 1.442695
      %v1390 = vpow.pop %v1389
      %v1391 = vmul.f32 %v1297, 1.442695
      %v1392 = vpow.pop %v1391
      %v1393 = vmul.f32 %v1298, 1.442695
      %v1394 = vpow.pop %v1393
      %v1395 = vmul.f32 %v1299, 1.442695
      %v1396 = vpow.pop %v1395
      %v1397 = vmul.f32 %v1300, 1.442695
      %v1398 = vpow.pop %v1397
      %v1399 = vmul.f32 %v1301, 1.442695
      %v1400 = vpow.pop %v1399
      %v1401 = vmul.f32 %v1302, 1.442695
      %v1402 = vpow.pop %v1401
      %v1403 = vmul.f32 %v1303, 1.442695
      %v1404 = vpow.pop %v1403
      %v1405 = vmul.f32 %v1304, 1.442695
      %v1406 = vpow.pop %v1405
      %v1407 = vmul.f32 %v1305, 1.442695
      %v1408 = vpow.pop %v1407
      %v1409 = vmul.f32 %v1306, 1.442695
      %v1410 = vpow.pop %v1409
      %v1411 = vmul.f32 %v1307, 1.442695
      %v1412 = vpow.pop %v1411
      %v1413 = vmul.f32 %v1308, 1.442695
      %v1414 = vpow.pop %v1413
      %v1415 = vmul.f32 %v1309, 1.442695
      %v1416 = vpow.pop %v1415
      %v1417 = vmul.f32 %v1310, 1.442695
      %v1418 = vpow.pop %v1417
      %v1419 = vmul.f32 %v1311, 1.442695
      %v1420 = vpow.pop %v1419
      %v1421 = vmul.f32 %v1312, 1.442695
      %v1422 = vpow.pop %v1421
      %v1423 = vmul.f32 %v1313, 1.442695
      %v1424 = vpow.pop %v1423
      %v1425 = vmul.f32 %v1314, 1.442695
      %v1426 = vpow.pop %v1425
      %v1427 = vmul.f32 %v1315, 1.442695
      %v1428 = vpow.pop %v1427
      %v1429 = vmul.f32 %v1316, 1.442695
      %v1430 = vpow.pop %v1429
      %v1431 = vmul.f32 %v1317, 1.442695
      %v1432 = vpow.pop %v1431
      %v1433 = vmul.f32 %v1318, 1.442695
      %v1434 = vpow.pop %v1433
      %v1435 = vmul.f32 %v1319, 1.442695
      %v1436 = vpow.pop %v1435
      %v1437 = vmul.f32 %v1320, 1.442695
      %v1438 = vpow.pop %v1437
      %v1439 = vmul.f32 %v1321, 1.442695
      %v1440 = vpow.pop %v1439
      %v1441 = vmul.f32 %v1322, 1.442695
      %v1442 = vpow.pop %v1441
      %v1443 = vmul.f32 %v1323, 1.442695
      %v1444 = vpow.pop %v1443
      %v1445 = vmul.f32 %v1324, 1.442695
      %v1446 = vpow.pop %v1445
      %v1447 = vmul.f32 %v1325, 1.442695
      %v1448 = vpow.pop %v1447
      %v1449 = vmul.f32 %v1326, 1.442695
      %v1450 = vpow.pop %v1449
      %v1451 = vmul.f32 %v1327, 1.442695
      %v1452 = vpow.pop %v1451
      %v1453 = vmul.f32 %v1328, 1.442695
      %v1454 = vpow.pop %v1453
      %v1455 = vmul.f32 %v1329, 1.442695
      %v1456 = vpow.pop %v1455
      %v1457 = vmul.f32 %v1330, 1.442695
      %v1458 = vpow.pop %v1457
      %v1459 = vadd.f32 %v1332, %v1334
      %1460 = vadd.xlane.f32.xlu0 %v1459
      %v1461 = vpop.xlane.xlu0 %1460
      %v1462 = vadd.f32 %v1336, %v1338
      %1463 = vadd.xlane.f32.xlu0 %v1462
      %v1464 = vpop.xlane.xlu0 %1463
      %v1465 = vadd.f32 %v1340, %v1342
      %1466 = vadd.xlane.f32.xlu0 %v1465
      %v1467 = vpop.xlane.xlu0 %1466
      %v1468 = vadd.f32 %v1344, %v1346
      %1469 = vadd.xlane.f32.xlu0 %v1468
      %v1470 = vpop.xlane.xlu0 %1469
      %v1471 = vadd.f32 %v1348, %v1350
      %1472 = vadd.xlane.f32.xlu0 %v1471
      %v1473 = vpop.xlane.xlu0 %1472
      %v1474 = vadd.f32 %v1352, %v1354
      %1475 = vadd.xlane.f32.xlu0 %v1474
      %v1476 = vpop.xlane.xlu0 %1475
      %v1477 = vadd.f32 %v1356, %v1358
      %1478 = vadd.xlane.f32.xlu0 %v1477
      %v1479 = vpop.xlane.xlu0 %1478
      %v1480 = vadd.f32 %v1360, %v1362
      %1481 = vadd.xlane.f32.xlu0 %v1480
      %v1482 = vpop.xlane.xlu0 %1481
      %v1483 = vadd.f32 %v1364, %v1366
      %1484 = vadd.xlane.f32.xlu0 %v1483
      %v1485 = vpop.xlane.xlu0 %1484
      %v1486 = vadd.f32 %v1368, %v1370
      %1487 = vadd.xlane.f32.xlu0 %v1486
      %v1488 = vpop.xlane.xlu0 %1487
      %v1489 = vadd.f32 %v1372, %v1374
      %1490 = vadd.xlane.f32.xlu0 %v1489
      %v1491 = vpop.xlane.xlu0 %1490
      %v1492 = vadd.f32 %v1376, %v1378
      %1493 = vadd.xlane.f32.xlu0 %v1492
      %v1494 = vpop.xlane.xlu0 %1493
      %v1495 = vadd.f32 %v1380, %v1382
      %1496 = vadd.xlane.f32.xlu0 %v1495
      %v1497 = vpop.xlane.xlu0 %1496
      %v1498 = vadd.f32 %v1384, %v1386
      %1499 = vadd.xlane.f32.xlu0 %v1498
      %v1500 = vpop.xlane.xlu0 %1499
      %v1501 = vadd.f32 %v1388, %v1390
      %1502 = vadd.xlane.f32.xlu0 %v1501
      %v1503 = vpop.xlane.xlu0 %1502
      %v1504 = vadd.f32 %v1392, %v1394
      %1505 = vadd.xlane.f32.xlu0 %v1504
      %v1506 = vpop.xlane.xlu0 %1505
      %v1507 = vadd.f32 %v1396, %v1398
      %1508 = vadd.xlane.f32.xlu0 %v1507
      %v1509 = vpop.xlane.xlu0 %1508
      %v1510 = vadd.f32 %v1400, %v1402
      %1511 = vadd.xlane.f32.xlu0 %v1510
      %v1512 = vpop.xlane.xlu0 %1511
      %v1513 = vadd.f32 %v1404, %v1406
      %1514 = vadd.xlane.f32.xlu0 %v1513
      %v1515 = vpop.xlane.xlu0 %1514
      %v1516 = vadd.f32 %v1408, %v1410
      %1517 = vadd.xlane.f32.xlu0 %v1516
      %v1518 = vpop.xlane.xlu0 %1517
      %v1519 = vadd.f32 %v1412, %v1414
      %1520 = vadd.xlane.f32.xlu0 %v1519
      %v1521 = vpop.xlane.xlu0 %1520
      %v1522 = vadd.f32 %v1416, %v1418
      %1523 = vadd.xlane.f32.xlu0 %v1522
      %v1524 = vpop.xlane.xlu0 %1523
      %v1525 = vadd.f32 %v1420, %v1422
      %1526 = vadd.xlane.f32.xlu0 %v1525
      %v1527 = vpop.xlane.xlu0 %1526
      %v1528 = vadd.f32 %v1424, %v1426
      %1529 = vadd.xlane.f32.xlu0 %v1528
      %v1530 = vpop.xlane.xlu0 %1529
      %v1531 = vadd.f32 %v1428, %v1430
      %1532 = vadd.xlane.f32.xlu0 %v1531
      %v1533 = vpop.xlane.xlu0 %1532
      %v1534 = vadd.f32 %v1432, %v1434
      %1535 = vadd.xlane.f32.xlu0 %v1534
      %v1536 = vpop.xlane.xlu0 %1535
      %v1537 = vadd.f32 %v1436, %v1438
      %1538 = vadd.xlane.f32.xlu0 %v1537
      %v1539 = vpop.xlane.xlu0 %1538
      %v1540 = vadd.f32 %v1440, %v1442
      %1541 = vadd.xlane.f32.xlu0 %v1540
      %v1542 = vpop.xlane.xlu0 %1541
      %v1543 = vadd.f32 %v1444, %v1446
      %1544 = vadd.xlane.f32.xlu0 %v1543
      %v1545 = vpop.xlane.xlu0 %1544
      %v1546 = vadd.f32 %v1448, %v1450
      %1547 = vadd.xlane.f32.xlu0 %v1546
      %v1548 = vpop.xlane.xlu0 %1547
      %v1549 = vadd.f32 %v1452, %v1454
      %1550 = vadd.xlane.f32.xlu0 %v1549
      %v1551 = vpop.xlane.xlu0 %1550
      %v1552 = vadd.f32 %v1456, %v1458
      %1553 = vadd.xlane.f32.xlu0 %v1552
      %v1554 = vpop.xlane.xlu0 %1553
      %v1555 = vpack.c.bf16 %v1336, %v1332
      %v1556 = vpack.c.bf16 %v1338, %v1334
      %v1557 = vpack.c.bf16 %v1344, %v1340
      %v1558 = vpack.c.bf16 %v1346, %v1342
      %v1559 = vpack.c.bf16 %v1352, %v1348
      %v1560 = vpack.c.bf16 %v1354, %v1350
      %v1561 = vpack.c.bf16 %v1360, %v1356
      %v1562 = vpack.c.bf16 %v1362, %v1358
      %v1563 = vpack.c.bf16 %v1368, %v1364
      %v1564 = vpack.c.bf16 %v1370, %v1366
      %v1565 = vpack.c.bf16 %v1376, %v1372
      %v1566 = vpack.c.bf16 %v1378, %v1374
      %v1567 = vpack.c.bf16 %v1384, %v1380
      %v1568 = vpack.c.bf16 %v1386, %v1382
      %v1569 = vpack.c.bf16 %v1392, %v1388
      %v1570 = vpack.c.bf16 %v1394, %v1390
      %v1571 = vpack.c.bf16 %v1400, %v1396
      %v1572 = vpack.c.bf16 %v1402, %v1398
      %v1573 = vpack.c.bf16 %v1408, %v1404
      %v1574 = vpack.c.bf16 %v1410, %v1406
      %v1575 = vpack.c.bf16 %v1416, %v1412
      %v1576 = vpack.c.bf16 %v1418, %v1414
      %v1577 = vpack.c.bf16 %v1424, %v1420
      %v1578 = vpack.c.bf16 %v1426, %v1422
      %v1579 = vpack.c.bf16 %v1432, %v1428
      %v1580 = vpack.c.bf16 %v1434, %v1430
      %v1581 = vpack.c.bf16 %v1440, %v1436
      %v1582 = vpack.c.bf16 %v1442, %v1438
      %v1583 = vpack.c.bf16 %v1448, %v1444
      %v1584 = vpack.c.bf16 %v1450, %v1446
      %v1585 = vpack.c.bf16 %v1456, %v1452
      %v1586 = vpack.c.bf16 %v1458, %v1454
      %1587 = vmatprep.subr.bf16.mxu0 0
      %1588 = vmatpush1.bf16.msra.mxu0 %v904
      %1589 = vmatprep.subr.bf16.mxu0 0
      %1590 = vmatpush1.bf16.msra.mxu0 %v903
      %1591 = vmatprep.subr.bf16.mxu0 0
      %1592 = vmatpush1.bf16.msra.mxu0 %v902
      %1593 = vmatprep.subr.bf16.mxu0 0
      %1594 = vmatpush1.bf16.msra.mxu0 %v901
      %1595 = vmatprep.subr.bf16.mxu0 0
      %1596 = vmatpush1.bf16.msra.mxu0 %v900
      %1597 = vmatprep.subr.bf16.mxu0 0
      %1598 = vmatpush1.bf16.msra.mxu0 %v899
      %1599 = vmatprep.subr.bf16.mxu0 0
      %1600 = vmatpush1.bf16.msra.mxu0 %v898
      %1601 = vmatprep.subr.bf16.mxu0 0
      %1602 = vmatpush1.bf16.msra.mxu0 %v897
      %1603 = vmatprep.subr.bf16.mxu0 0
      %1604 = vmatpush2.bf16.msra.mxu0 %v912
      %1605 = vmatprep.subr.bf16.mxu0 0
      %1606 = vmatpush2.bf16.msra.mxu0 %v911
      %1607 = vmatprep.subr.bf16.mxu0 0
      %1608 = vmatpush2.bf16.msra.mxu0 %v910
      %1609 = vmatprep.subr.bf16.mxu0 0
      %1610 = vmatpush2.bf16.msra.mxu0 %v909
      %1611 = vmatprep.subr.bf16.mxu0 0
      %1612 = vmatpush2.bf16.msra.mxu0 %v908
      %1613 = vmatprep.subr.bf16.mxu0 0
      %1614 = vmatpush2.bf16.msra.mxu0 %v907
      %1615 = vmatprep.subr.bf16.mxu0 0
      %1616 = vmatpush2.bf16.msra.mxu0 %v906
      %1617 = vmatprep.subr.bf16.mxu0 0
      %1618 = vmatpush2.bf16.msra.mxu0 %v905
      %1619 = vmatprep.mubr.bf16.mxu0 %v1556
      %1620 = vmatmul.mubr.bf16.gmra.mxu0 %v1555
      %v1621 = vpop.f32.mrf.mxu0
      %v1622 = vadd.f32 0.0, %v1621
      %v1623 = vpop.f32.mrf.mxu0
      %v1624 = vpop.f32.mrf.mxu0
      %v1625 = vadd.f32 0.0, %v1624
      %v1626 = vpop.f32.mrf.mxu0
      %1627 = vmatprep.mubr.bf16.mxu0 %v1558
      %1628 = vmatmul.mubr.bf16.gmra.mxu0 %v1557
      %v1629 = vpop.f32.mrf.mxu0
      %v1630 = vadd.f32 0.0, %v1629
      %v1631 = vpop.f32.mrf.mxu0
      %v1632 = vpop.f32.mrf.mxu0
      %v1633 = vadd.f32 0.0, %v1632
      %v1634 = vpop.f32.mrf.mxu0
      %1635 = vmatprep.mubr.bf16.mxu0 %v1560
      %1636 = vmatmul.mubr.bf16.gmra.mxu0 %v1559
      %v1637 = vpop.f32.mrf.mxu0
      %v1638 = vadd.f32 0.0, %v1637
      %v1639 = vpop.f32.mrf.mxu0
      %v1640 = vpop.f32.mrf.mxu0
      %v1641 = vadd.f32 0.0, %v1640
      %v1642 = vpop.f32.mrf.mxu0
      %1643 = vmatprep.mubr.bf16.mxu0 %v1562
      %1644 = vmatmul.mubr.bf16.gmra.mxu0 %v1561
      %v1645 = vpop.f32.mrf.mxu0
      %v1646 = vadd.f32 0.0, %v1645
      %v1647 = vpop.f32.mrf.mxu0
      %v1648 = vpop.f32.mrf.mxu0
      %v1649 = vadd.f32 0.0, %v1648
      %v1650 = vpop.f32.mrf.mxu0
      %1651 = vmatprep.mubr.bf16.mxu0 %v1564
      %1652 = vmatmul.mubr.bf16.gmra.mxu0 %v1563
      %v1653 = vpop.f32.mrf.mxu0
      %v1654 = vadd.f32 0.0, %v1653
      %v1655 = vpop.f32.mrf.mxu0
      %v1656 = vpop.f32.mrf.mxu0
      %v1657 = vadd.f32 0.0, %v1656
      %v1658 = vpop.f32.mrf.mxu0
      %1659 = vmatprep.mubr.bf16.mxu0 %v1566
      %1660 = vmatmul.mubr.bf16.gmra.mxu0 %v1565
      %v1661 = vpop.f32.mrf.mxu0
      %v1662 = vadd.f32 0.0, %v1661
      %v1663 = vpop.f32.mrf.mxu0
      %v1664 = vpop.f32.mrf.mxu0
      %v1665 = vadd.f32 0.0, %v1664
      %v1666 = vpop.f32.mrf.mxu0
      %1667 = vmatprep.mubr.bf16.mxu0 %v1568
      %1668 = vmatmul.mubr.bf16.gmra.mxu0 %v1567
      %v1669 = vpop.f32.mrf.mxu0
      %v1670 = vadd.f32 0.0, %v1669
      %v1671 = vpop.f32.mrf.mxu0
      %v1672 = vpop.f32.mrf.mxu0
      %v1673 = vadd.f32 0.0, %v1672
      %v1674 = vpop.f32.mrf.mxu0
      %1675 = vmatprep.mubr.bf16.mxu0 %v1570
      %1676 = vmatmul.mubr.bf16.gmra.mxu0 %v1569
      %v1677 = vpop.f32.mrf.mxu0
      %v1678 = vadd.f32 0.0, %v1677
      %v1679 = vpop.f32.mrf.mxu0
      %v1680 = vpop.f32.mrf.mxu0
      %v1681 = vadd.f32 0.0, %v1680
      %v1682 = vpop.f32.mrf.mxu0
      %1683 = vmatprep.mubr.bf16.mxu0 %v1572
      %1684 = vmatmul.mubr.bf16.gmra.mxu0 %v1571
      %v1685 = vpop.f32.mrf.mxu0
      %v1686 = vadd.f32 0.0, %v1685
      %v1687 = vpop.f32.mrf.mxu0
      %v1688 = vpop.f32.mrf.mxu0
      %v1689 = vadd.f32 0.0, %v1688
      %v1690 = vpop.f32.mrf.mxu0
      %1691 = vmatprep.mubr.bf16.mxu0 %v1574
      %1692 = vmatmul.mubr.bf16.gmra.mxu0 %v1573
      %v1693 = vpop.f32.mrf.mxu0
      %v1694 = vadd.f32 0.0, %v1693
      %v1695 = vpop.f32.mrf.mxu0
      %v1696 = vpop.f32.mrf.mxu0
      %v1697 = vadd.f32 0.0, %v1696
      %v1698 = vpop.f32.mrf.mxu0
      %1699 = vmatprep.mubr.bf16.mxu0 %v1576
      %1700 = vmatmul.mubr.bf16.gmra.mxu0 %v1575
      %v1701 = vpop.f32.mrf.mxu0
      %v1702 = vadd.f32 0.0, %v1701
      %v1703 = vpop.f32.mrf.mxu0
      %v1704 = vpop.f32.mrf.mxu0
      %v1705 = vadd.f32 0.0, %v1704
      %v1706 = vpop.f32.mrf.mxu0
      %1707 = vmatprep.mubr.bf16.mxu0 %v1578
      %1708 = vmatmul.mubr.bf16.gmra.mxu0 %v1577
      %v1709 = vpop.f32.mrf.mxu0
      %v1710 = vadd.f32 0.0, %v1709
      %v1711 = vpop.f32.mrf.mxu0
      %v1712 = vpop.f32.mrf.mxu0
      %v1713 = vadd.f32 0.0, %v1712
      %v1714 = vpop.f32.mrf.mxu0
      %1715 = vmatprep.mubr.bf16.mxu0 %v1580
      %1716 = vmatmul.mubr.bf16.gmra.mxu0 %v1579
      %v1717 = vpop.f32.mrf.mxu0
      %v1718 = vadd.f32 0.0, %v1717
      %v1719 = vpop.f32.mrf.mxu0
      %v1720 = vpop.f32.mrf.mxu0
      %v1721 = vadd.f32 0.0, %v1720
      %v1722 = vpop.f32.mrf.mxu0
      %1723 = vmatprep.mubr.bf16.mxu0 %v1582
      %1724 = vmatmul.mubr.bf16.gmra.mxu0 %v1581
      %v1725 = vpop.f32.mrf.mxu0
      %v1726 = vadd.f32 0.0, %v1725
      %v1727 = vpop.f32.mrf.mxu0
      %v1728 = vpop.f32.mrf.mxu0
      %v1729 = vadd.f32 0.0, %v1728
      %v1730 = vpop.f32.mrf.mxu0
      %1731 = vmatprep.mubr.bf16.mxu0 %v1584
      %1732 = vmatmul.mubr.bf16.gmra.mxu0 %v1583
      %v1733 = vpop.f32.mrf.mxu0
      %v1734 = vadd.f32 0.0, %v1733
      %v1735 = vpop.f32.mrf.mxu0
      %v1736 = vpop.f32.mrf.mxu0
      %v1737 = vadd.f32 0.0, %v1736
      %v1738 = vpop.f32.mrf.mxu0
      %1739 = vmatprep.mubr.bf16.mxu0 %v1586
      %1740 = vmatmul.mubr.bf16.gmra.mxu0 %v1585
      %v1741 = vpop.f32.mrf.mxu0
      %v1742 = vadd.f32 0.0, %v1741
      %v1743 = vpop.f32.mrf.mxu0
      %v1744 = vpop.f32.mrf.mxu0
      %v1745 = vadd.f32 0.0, %v1744
      %v1746 = vpop.f32.mrf.mxu0
      %1747 = vdwg.mxu0
      %v1748 = vrcp.pop %v1461
      %v1749 = vrcp.pop %v1464
      %v1750 = vrcp.pop %v1467
      %v1751 = vrcp.pop %v1470
      %v1752 = vrcp.pop %v1473
      %v1753 = vrcp.pop %v1476
      %v1754 = vrcp.pop %v1479
      %v1755 = vrcp.pop %v1482
      %v1756 = vrcp.pop %v1485
      %v1757 = vrcp.pop %v1488
      %v1758 = vrcp.pop %v1491
      %v1759 = vrcp.pop %v1494
      %v1760 = vrcp.pop %v1497
      %v1761 = vrcp.pop %v1500
      %v1762 = vrcp.pop %v1503
      %v1763 = vrcp.pop %v1506
      %v1764 = vrcp.pop %v1509
      %v1765 = vrcp.pop %v1512
      %v1766 = vrcp.pop %v1515
      %v1767 = vrcp.pop %v1518
      %v1768 = vrcp.pop %v1521
      %v1769 = vrcp.pop %v1524
      %v1770 = vrcp.pop %v1527
      %v1771 = vrcp.pop %v1530
      %v1772 = vrcp.pop %v1533
      %v1773 = vrcp.pop %v1536
      %v1774 = vrcp.pop %v1539
      %v1775 = vrcp.pop %v1542
      %v1776 = vrcp.pop %v1545
      %v1777 = vrcp.pop %v1548
      %v1778 = vrcp.pop %v1551
      %v1779 = vrcp.pop %v1554
      %v1780 = vmul.f32 %v1622, %v1748
      %v1781 = vmul.f32 %v1625, %v1749
      %v1782 = vmul.f32 %v1630, %v1750
      %v1783 = vmul.f32 %v1633, %v1751
      %v1784 = vmul.f32 %v1638, %v1752
      %v1785 = vmul.f32 %v1641, %v1753
      %v1786 = vmul.f32 %v1646, %v1754
      %v1787 = vmul.f32 %v1649, %v1755
      %v1788 = vmul.f32 %v1654, %v1756
      %v1789 = vmul.f32 %v1657, %v1757
      %v1790 = vmul.f32 %v1662, %v1758
      %v1791 = vmul.f32 %v1665, %v1759
      %v1792 = vmul.f32 %v1670, %v1760
      %v1793 = vmul.f32 %v1673, %v1761
      %v1794 = vmul.f32 %v1678, %v1762
      %v1795 = vmul.f32 %v1681, %v1763
      %v1796 = vmul.f32 %v1686, %v1764
      %v1797 = vmul.f32 %v1689, %v1765
      %v1798 = vmul.f32 %v1694, %v1766
      %v1799 = vmul.f32 %v1697, %v1767
      %v1800 = vmul.f32 %v1702, %v1768
      %v1801 = vmul.f32 %v1705, %v1769
      %v1802 = vmul.f32 %v1710, %v1770
      %v1803 = vmul.f32 %v1713, %v1771
      %v1804 = vmul.f32 %v1718, %v1772
      %v1805 = vmul.f32 %v1721, %v1773
      %v1806 = vmul.f32 %v1726, %v1774
      %v1807 = vmul.f32 %v1729, %v1775
      %v1808 = vmul.f32 %v1734, %v1776
      %v1809 = vmul.f32 %v1737, %v1777
      %v1810 = vmul.f32 %v1742, %v1778
      %v1811 = vmul.f32 %v1745, %v1779
      %1812 = vst.msk [vmem:[#allocation2] sm:$0xff] %vm929, %v1780
      %1813 = vst.msk [vmem:[#allocation2 + $0x8] sm:$0xff] %vm929, %v1781
      %1814 = vst.msk [vmem:[#allocation2 + $0x10] sm:$0xff] %vm929, %v1782
      %1815 = vst.msk [vmem:[#allocation2 + $0x18] sm:$0xff] %vm929, %v1783
      %1816 = vst.msk [vmem:[#allocation2 + $0x20] sm:$0xff] %vm929, %v1784
      %1817 = vst.msk [vmem:[#allocation2 + $0x28] sm:$0xff] %vm929, %v1785
      %1818 = vst.msk [vmem:[#allocation2 + $0x30] sm:$0xff] %vm929, %v1786
      %1819 = vst.msk [vmem:[#allocation2 + $0x38] sm:$0xff] %vm929, %v1787
      %1820 = vst.msk [vmem:[#allocation2 + $0x40] sm:$0xff] %vm929, %v1788
      %1821 = vst.msk [vmem:[#allocation2 + $0x48] sm:$0xff] %vm929, %v1789
      %1822 = vst.msk [vmem:[#allocation2 + $0x50] sm:$0xff] %vm929, %v1790
      %1823 = vst.msk [vmem:[#allocation2 + $0x58] sm:$0xff] %vm929, %v1791
      %1824 = vst.msk [vmem:[#allocation2 + $0x60] sm:$0xff] %vm929, %v1792
      %1825 = vst.msk [vmem:[#allocation2 + $0x68] sm:$0xff] %vm929, %v1793
      %1826 = vst.msk [vmem:[#allocation2 + $0x70] sm:$0xff] %vm929, %v1794
      %1827 = vst.msk [vmem:[#allocation2 + $0x78] sm:$0xff] %vm929, %v1795
      %1828 = vst.msk [vmem:[#allocation2 + $0x80] sm:$0xff] %vm929, %v1796
      %1829 = vst.msk [vmem:[#allocation2 + $0x88] sm:$0xff] %vm929, %v1797
      %1830 = vst.msk [vmem:[#allocation2 + $0x90] sm:$0xff] %vm929, %v1798
      %1831 = vst.msk [vmem:[#allocation2 + $0x98] sm:$0xff] %vm929, %v1799
      %1832 = vst.msk [vmem:[#allocation2 + $0xa0] sm:$0xff] %vm929, %v1800
      %1833 = vst.msk [vmem:[#allocation2 + $0xa8] sm:$0xff] %vm929, %v1801
      %1834 = vst.msk [vmem:[#allocation2 + $0xb0] sm:$0xff] %vm929, %v1802
      %1835 = vst.msk [vmem:[#allocation2 + $0xb8] sm:$0xff] %vm929, %v1803
      %1836 = vst.msk [vmem:[#allocation2 + $0xc0] sm:$0xff] %vm929, %v1804
      %1837 = vst.msk [vmem:[#allocation2 + $0xc8] sm:$0xff] %vm929, %v1805
      %1838 = vst.msk [vmem:[#allocation2 + $0xd0] sm:$0xff] %vm929, %v1806
      %1839 = vst.msk [vmem:[#allocation2 + $0xd8] sm:$0xff] %vm929, %v1807
      %1840 = vst.msk [vmem:[#allocation2 + $0xe0] sm:$0xff] %vm929, %v1808
      %1841 = vst.msk [vmem:[#allocation2 + $0xe8] sm:$0xff] %vm929, %v1809
      %1842 = vst.msk [vmem:[#allocation2 + $0xf0] sm:$0xff] %vm929, %v1810
      %1843 = vst.msk [vmem:[#allocation2 + $0xf8] sm:$0xff] %vm929, %v1811
      %1860 = vrot.lane.b32.xlu0 %v817, 96
      %v1861 = vpop.permute.xlu0 %1860
      %1862 = vrot.lane.b32.xlu0 %v818, 96
      %v1863 = vpop.permute.xlu0 %1862
      %1864 = vrot.lane.b32.xlu0 %v819, 96
      %v1865 = vpop.permute.xlu0 %1864
      %1866 = vrot.lane.b32.xlu0 %v820, 96
      %v1867 = vpop.permute.xlu0 %1866
      %1868 = vrot.lane.b32.xlu0 %v821, 96
      %v1869 = vpop.permute.xlu0 %1868
      %1870 = vrot.lane.b32.xlu0 %v822, 96
      %v1871 = vpop.permute.xlu0 %1870
      %1872 = vrot.lane.b32.xlu0 %v823, 96
      %v1873 = vpop.permute.xlu0 %1872
      %1874 = vrot.lane.b32.xlu0 %v824, 96
      %v1875 = vpop.permute.xlu0 %1874
      %1876 = vrot.lane.b32.xlu0 %v825, 96
      %v1877 = vpop.permute.xlu0 %1876
      %1878 = vrot.lane.b32.xlu0 %v826, 96
      %v1879 = vpop.permute.xlu0 %1878
      %1880 = vrot.lane.b32.xlu0 %v827, 96
      %v1881 = vpop.permute.xlu0 %1880
      %1882 = vrot.lane.b32.xlu0 %v828, 96
      %v1883 = vpop.permute.xlu0 %1882
      %1884 = vrot.lane.b32.xlu0 %v829, 96
      %v1885 = vpop.permute.xlu0 %1884
      %1886 = vrot.lane.b32.xlu0 %v830, 96
      %v1887 = vpop.permute.xlu0 %1886
      %1888 = vrot.lane.b32.xlu0 %v831, 96
      %v1889 = vpop.permute.xlu0 %1888
      %1890 = vrot.lane.b32.xlu0 %v832, 96
      %v1891 = vpop.permute.xlu0 %1890
      %v1893 = vsel %vm929, %v1861, 0
      %v1896 = vsel %vm929, %v1863, 0
      %v1899 = vsel %vm929, %v1865, 0
      %v1902 = vsel %vm929, %v1867, 0
      %v1905 = vsel %vm929, %v1869, 0
      %v1908 = vsel %vm929, %v1871, 0
      %v1911 = vsel %vm929, %v1873, 0
      %v1914 = vsel %vm929, %v1875, 0
      %v1917 = vsel %vm929, %v1877, 0
      %v1920 = vsel %vm929, %v1879, 0
      %v1923 = vsel %vm929, %v1881, 0
      %v1926 = vsel %vm929, %v1883, 0
      %v1929 = vsel %vm929, %v1885, 0
      %v1932 = vsel %vm929, %v1887, 0
      %v1935 = vsel %vm929, %v1889, 0
      %v1938 = vsel %vm929, %v1891, 0
      %1940 = vmatprep.subr.bf16.mxu0 0
      %1941 = vmatpush1.bf16.msra.mxu0 0
      %1942 = vmatprep.subr.bf16.mxu0 0
      %1943 = vmatpush1.bf16.msra.mxu0 0
      %1944 = vmatprep.subr.bf16.mxu0 0
      %1945 = vmatpush1.bf16.msra.mxu0 0
      %1946 = vmatprep.subr.bf16.mxu0 0
      %1947 = vmatpush1.bf16.msra.mxu0 0
      %1948 = vmatprep.subr.bf16.mxu0 0
      %1949 = vmatpush1.bf16.msra.mxu0 0
      %1950 = vmatprep.subr.bf16.mxu0 0
      %1951 = vmatpush1.bf16.msra.mxu0 0
      %1952 = vmatprep.subr.bf16.mxu0 %v920
      %1953 = vmatpush1.bf16.msra.mxu0 %v919
      %1954 = vmatprep.subr.bf16.mxu0 %v918
      %1955 = vmatpush1.bf16.msra.mxu0 %v917
      %1956 = vmatprep.subr.bf16.mxu0 0
      %1957 = vmatpush2.bf16.msra.mxu0 0
      %1958 = vmatprep.subr.bf16.mxu0 0
      %1959 = vmatpush2.bf16.msra.mxu0 0
      %1960 = vmatprep.subr.bf16.mxu0 0
      %1961 = vmatpush2.bf16.msra.mxu0 0
      %1962 = vmatprep.subr.bf16.mxu0 0
      %1963 = vmatpush2.bf16.msra.mxu0 0
      %1964 = vmatprep.subr.bf16.mxu0 0
      %1965 = vmatpush2.bf16.msra.mxu0 0
      %1966 = vmatprep.subr.bf16.mxu0 0
      %1967 = vmatpush2.bf16.msra.mxu0 0
      %1968 = vmatprep.subr.bf16.mxu0 0
      %1969 = vmatpush2.bf16.msra.mxu0 0
      %1970 = vmatprep.subr.bf16.mxu0 0
      %1971 = vmatpush2.bf16.msra.mxu0 0
      %1972 = vmatprep.mubr.bf16.mxu0 0
      %1973 = vmatmul.mubr.bf16.gmra.mxu0 %v1893
      %v1974 = vpop.f32.mrf.mxu0
      %v1975 = vadd.f32 0.0, %v1974
      %v1976 = vpop.f32.mrf.mxu0
      %v1977 = vadd.f32 0.0, %v1976
      %v1978 = vpop.f32.mrf.mxu0
      %v1979 = vadd.f32 0.0, %v1978
      %v1980 = vpop.f32.mrf.mxu0
      %v1981 = vadd.f32 0.0, %v1980
      %1982 = vmatprep.mubr.bf16.mxu0 0
      %1983 = vmatmul.mubr.bf16.gmra.mxu0 %v1896
      %v1984 = vpop.f32.mrf.mxu0
      %v1985 = vadd.f32 0.0, %v1984
      %v1986 = vpop.f32.mrf.mxu0
      %v1987 = vadd.f32 0.0, %v1986
      %v1988 = vpop.f32.mrf.mxu0
      %v1989 = vadd.f32 0.0, %v1988
      %v1990 = vpop.f32.mrf.mxu0
      %v1991 = vadd.f32 0.0, %v1990
      %1992 = vmatprep.mubr.bf16.mxu0 0
      %1993 = vmatmul.mubr.bf16.gmra.mxu0 %v1899
      %v1994 = vpop.f32.mrf.mxu0
      %v1995 = vadd.f32 0.0, %v1994
      %v1996 = vpop.f32.mrf.mxu0
      %v1997 = vadd.f32 0.0, %v1996
      %v1998 = vpop.f32.mrf.mxu0
      %v1999 = vadd.f32 0.0, %v1998
      %v2000 = vpop.f32.mrf.mxu0
      %v2001 = vadd.f32 0.0, %v2000
      %2002 = vmatprep.mubr.bf16.mxu0 0
      %2003 = vmatmul.mubr.bf16.gmra.mxu0 %v1902
      %v2004 = vpop.f32.mrf.mxu0
      %v2005 = vadd.f32 0.0, %v2004
      %v2006 = vpop.f32.mrf.mxu0
      %v2007 = vadd.f32 0.0, %v2006
      %v2008 = vpop.f32.mrf.mxu0
      %v2009 = vadd.f32 0.0, %v2008
      %v2010 = vpop.f32.mrf.mxu0
      %v2011 = vadd.f32 0.0, %v2010
      %2012 = vmatprep.mubr.bf16.mxu0 0
      %2013 = vmatmul.mubr.bf16.gmra.mxu0 %v1905
      %v2014 = vpop.f32.mrf.mxu0
      %v2015 = vadd.f32 0.0, %v2014
      %v2016 = vpop.f32.mrf.mxu0
      %v2017 = vadd.f32 0.0, %v2016
      %v2018 = vpop.f32.mrf.mxu0
      %v2019 = vadd.f32 0.0, %v2018
      %v2020 = vpop.f32.mrf.mxu0
      %v2021 = vadd.f32 0.0, %v2020
      %2022 = vmatprep.mubr.bf16.mxu0 0
      %2023 = vmatmul.mubr.bf16.gmra.mxu0 %v1908
      %v2024 = vpop.f32.mrf.mxu0
      %v2025 = vadd.f32 0.0, %v2024
      %v2026 = vpop.f32.mrf.mxu0
      %v2027 = vadd.f32 0.0, %v2026
      %v2028 = vpop.f32.mrf.mxu0
      %v2029 = vadd.f32 0.0, %v2028
      %v2030 = vpop.f32.mrf.mxu0
      %v2031 = vadd.f32 0.0, %v2030
      %2032 = vmatprep.mubr.bf16.mxu0 0
      %2033 = vmatmul.mubr.bf16.gmra.mxu0 %v1911
      %v2034 = vpop.f32.mrf.mxu0
      %v2035 = vadd.f32 0.0, %v2034
      %v2036 = vpop.f32.mrf.mxu0
      %v2037 = vadd.f32 0.0, %v2036
      %v2038 = vpop.f32.mrf.mxu0
      %v2039 = vadd.f32 0.0, %v2038
      %v2040 = vpop.f32.mrf.mxu0
      %v2041 = vadd.f32 0.0, %v2040
      %2042 = vmatprep.mubr.bf16.mxu0 0
      %2043 = vmatmul.mubr.bf16.gmra.mxu0 %v1914
      %v2044 = vpop.f32.mrf.mxu0
      %v2045 = vadd.f32 0.0, %v2044
      %v2046 = vpop.f32.mrf.mxu0
      %v2047 = vadd.f32 0.0, %v2046
      %v2048 = vpop.f32.mrf.mxu0
      %v2049 = vadd.f32 0.0, %v2048
      %v2050 = vpop.f32.mrf.mxu0
      %v2051 = vadd.f32 0.0, %v2050
      %2052 = vmatprep.mubr.bf16.mxu0 0
      %2053 = vmatmul.mubr.bf16.gmra.mxu0 %v1917
      %v2054 = vpop.f32.mrf.mxu0
      %v2055 = vadd.f32 0.0, %v2054
      %v2056 = vpop.f32.mrf.mxu0
      %v2057 = vadd.f32 0.0, %v2056
      %v2058 = vpop.f32.mrf.mxu0
      %v2059 = vadd.f32 0.0, %v2058
      %v2060 = vpop.f32.mrf.mxu0
      %v2061 = vadd.f32 0.0, %v2060
      %2062 = vmatprep.mubr.bf16.mxu0 0
      %2063 = vmatmul.mubr.bf16.gmra.mxu0 %v1920
      %v2064 = vpop.f32.mrf.mxu0
      %v2065 = vadd.f32 0.0, %v2064
      %v2066 = vpop.f32.mrf.mxu0
      %v2067 = vadd.f32 0.0, %v2066
      %v2068 = vpop.f32.mrf.mxu0
      %v2069 = vadd.f32 0.0, %v2068
      %v2070 = vpop.f32.mrf.mxu0
      %v2071 = vadd.f32 0.0, %v2070
      %2072 = vmatprep.mubr.bf16.mxu0 0
      %2073 = vmatmul.mubr.bf16.gmra.mxu0 %v1923
      %v2074 = vpop.f32.mrf.mxu0
      %v2075 = vadd.f32 0.0, %v2074
      %v2076 = vpop.f32.mrf.mxu0
      %v2077 = vadd.f32 0.0, %v2076
      %v2078 = vpop.f32.mrf.mxu0
      %v2079 = vadd.f32 0.0, %v2078
      %v2080 = vpop.f32.mrf.mxu0
      %v2081 = vadd.f32 0.0, %v2080
      %2082 = vmatprep.mubr.bf16.mxu0 0
      %2083 = vmatmul.mubr.bf16.gmra.mxu0 %v1926
      %v2084 = vpop.f32.mrf.mxu0
      %v2085 = vadd.f32 0.0, %v2084
      %v2086 = vpop.f32.mrf.mxu0
      %v2087 = vadd.f32 0.0, %v2086
      %v2088 = vpop.f32.mrf.mxu0
      %v2089 = vadd.f32 0.0, %v2088
      %v2090 = vpop.f32.mrf.mxu0
      %v2091 = vadd.f32 0.0, %v2090
      %2092 = vmatprep.mubr.bf16.mxu0 0
      %2093 = vmatmul.mubr.bf16.gmra.mxu0 %v1929
      %v2094 = vpop.f32.mrf.mxu0
      %v2095 = vadd.f32 0.0, %v2094
      %v2096 = vpop.f32.mrf.mxu0
      %v2097 = vadd.f32 0.0, %v2096
      %v2098 = vpop.f32.mrf.mxu0
      %v2099 = vadd.f32 0.0, %v2098
      %v2100 = vpop.f32.mrf.mxu0
      %v2101 = vadd.f32 0.0, %v2100
      %2102 = vmatprep.mubr.bf16.mxu0 0
      %2103 = vmatmul.mubr.bf16.gmra.mxu0 %v1932
      %v2104 = vpop.f32.mrf.mxu0
      %v2105 = vadd.f32 0.0, %v2104
      %v2106 = vpop.f32.mrf.mxu0
      %v2107 = vadd.f32 0.0, %v2106
      %v2108 = vpop.f32.mrf.mxu0
      %v2109 = vadd.f32 0.0, %v2108
      %v2110 = vpop.f32.mrf.mxu0
      %v2111 = vadd.f32 0.0, %v2110
      %2112 = vmatprep.mubr.bf16.mxu0 0
      %2113 = vmatmul.mubr.bf16.gmra.mxu0 %v1935
      %v2114 = vpop.f32.mrf.mxu0
      %v2115 = vadd.f32 0.0, %v2114
      %v2116 = vpop.f32.mrf.mxu0
      %v2117 = vadd.f32 0.0, %v2116
      %v2118 = vpop.f32.mrf.mxu0
      %v2119 = vadd.f32 0.0, %v2118
      %v2120 = vpop.f32.mrf.mxu0
      %v2121 = vadd.f32 0.0, %v2120
      %2122 = vmatprep.mubr.bf16.mxu0 0
      %2123 = vmatmul.mubr.bf16.gmra.mxu0 %v1938
      %v2124 = vpop.f32.mrf.mxu0
      %v2125 = vadd.f32 0.0, %v2124
      %v2126 = vpop.f32.mrf.mxu0
      %v2127 = vadd.f32 0.0, %v2126
      %v2128 = vpop.f32.mrf.mxu0
      %v2129 = vadd.f32 0.0, %v2128
      %v2130 = vpop.f32.mrf.mxu0
      %v2131 = vadd.f32 0.0, %v2130
      %2132 = vdwg.mxu0
      %v2133 = vmax.f32 %v1975, %v1977
      %2134 = vmax.xlane.f32.xlu0 %v2133
      %v2135 = vpop.xlane.xlu0 %2134
      %v2136 = vmax.f32 %v1979, %v1981
      %2137 = vmax.xlane.f32.xlu0 %v2136
      %v2138 = vpop.xlane.xlu0 %2137
      %v2139 = vmax.f32 %v1985, %v1987
      %2140 = vmax.xlane.f32.xlu0 %v2139
      %v2141 = vpop.xlane.xlu0 %2140
      %v2142 = vmax.f32 %v1989, %v1991
      %2143 = vmax.xlane.f32.xlu0 %v2142
      %v2144 = vpop.xlane.xlu0 %2143
      %v2145 = vmax.f32 %v1995, %v1997
      %2146 = vmax.xlane.f32.xlu0 %v2145
      %v2147 = vpop.xlane.xlu0 %2146
      %v2148 = vmax.f32 %v1999, %v2001
      %2149 = vmax.xlane.f32.xlu0 %v2148
      %v2150 = vpop.xlane.xlu0 %2149
      %v2151 = vmax.f32 %v2005, %v2007
      %2152 = vmax.xlane.f32.xlu0 %v2151
      %v2153 = vpop.xlane.xlu0 %2152
      %v2154 = vmax.f32 %v2009, %v2011
      %2155 = vmax.xlane.f32.xlu0 %v2154
      %v2156 = vpop.xlane.xlu0 %2155
      %v2157 = vmax.f32 %v2015, %v2017
      %2158 = vmax.xlane.f32.xlu0 %v2157
      %v2159 = vpop.xlane.xlu0 %2158
      %v2160 = vmax.f32 %v2019, %v2021
      %2161 = vmax.xlane.f32.xlu0 %v2160
      %v2162 = vpop.xlane.xlu0 %2161
      %v2163 = vmax.f32 %v2025, %v2027
      %2164 = vmax.xlane.f32.xlu0 %v2163
      %v2165 = vpop.xlane.xlu0 %2164
      %v2166 = vmax.f32 %v2029, %v2031
      %2167 = vmax.xlane.f32.xlu0 %v2166
      %v2168 = vpop.xlane.xlu0 %2167
      %v2169 = vmax.f32 %v2035, %v2037
      %2170 = vmax.xlane.f32.xlu0 %v2169
      %v2171 = vpop.xlane.xlu0 %2170
      %v2172 = vmax.f32 %v2039, %v2041
      %2173 = vmax.xlane.f32.xlu0 %v2172
      %v2174 = vpop.xlane.xlu0 %2173
      %v2175 = vmax.f32 %v2045, %v2047
      %2176 = vmax.xlane.f32.xlu0 %v2175
      %v2177 = vpop.xlane.xlu0 %2176
      %v2178 = vmax.f32 %v2049, %v2051
      %2179 = vmax.xlane.f32.xlu0 %v2178
      %v2180 = vpop.xlane.xlu0 %2179
      %v2181 = vmax.f32 %v2055, %v2057
      %2182 = vmax.xlane.f32.xlu0 %v2181
      %v2183 = vpop.xlane.xlu0 %2182
      %v2184 = vmax.f32 %v2059, %v2061
      %2185 = vmax.xlane.f32.xlu0 %v2184
      %v2186 = vpop.xlane.xlu0 %2185
      %v2187 = vmax.f32 %v2065, %v2067
      %2188 = vmax.xlane.f32.xlu0 %v2187
      %v2189 = vpop.xlane.xlu0 %2188
      %v2190 = vmax.f32 %v2069, %v2071
      %2191 = vmax.xlane.f32.xlu0 %v2190
      %v2192 = vpop.xlane.xlu0 %2191
      %v2193 = vmax.f32 %v2075, %v2077
      %2194 = vmax.xlane.f32.xlu0 %v2193
      %v2195 = vpop.xlane.xlu0 %2194
      %v2196 = vmax.f32 %v2079, %v2081
      %2197 = vmax.xlane.f32.xlu0 %v2196
      %v2198 = vpop.xlane.xlu0 %2197
      %v2199 = vmax.f32 %v2085, %v2087
      %2200 = vmax.xlane.f32.xlu0 %v2199
      %v2201 = vpop.xlane.xlu0 %2200
      %v2202 = vmax.f32 %v2089, %v2091
      %2203 = vmax.xlane.f32.xlu0 %v2202
      %v2204 = vpop.xlane.xlu0 %2203
      %v2205 = vmax.f32 %v2095, %v2097
      %2206 = vmax.xlane.f32.xlu0 %v2205
      %v2207 = vpop.xlane.xlu0 %2206
      %v2208 = vmax.f32 %v2099, %v2101
      %2209 = vmax.xlane.f32.xlu0 %v2208
      %v2210 = vpop.xlane.xlu0 %2209
      %v2211 = vmax.f32 %v2105, %v2107
      %2212 = vmax.xlane.f32.xlu0 %v2211
      %v2213 = vpop.xlane.xlu0 %2212
      %v2214 = vmax.f32 %v2109, %v2111
      %2215 = vmax.xlane.f32.xlu0 %v2214
      %v2216 = vpop.xlane.xlu0 %2215
      %v2217 = vmax.f32 %v2115, %v2117
      %2218 = vmax.xlane.f32.xlu0 %v2217
      %v2219 = vpop.xlane.xlu0 %2218
      %v2220 = vmax.f32 %v2119, %v2121
      %2221 = vmax.xlane.f32.xlu0 %v2220
      %v2222 = vpop.xlane.xlu0 %2221
      %v2223 = vmax.f32 %v2125, %v2127
      %2224 = vmax.xlane.f32.xlu0 %v2223
      %v2225 = vpop.xlane.xlu0 %2224
      %v2226 = vmax.f32 %v2129, %v2131
      %2227 = vmax.xlane.f32.xlu0 %v2226
      %v2228 = vpop.xlane.xlu0 %2227
      %v2229 = vsub.f32 %v1975, %v2135
      %v2230 = vsub.f32 %v1977, %v2135
      %v2231 = vsub.f32 %v1979, %v2138
      %v2232 = vsub.f32 %v1981, %v2138
      %v2233 = vsub.f32 %v1985, %v2141
      %v2234 = vsub.f32 %v1987, %v2141
      %v2235 = vsub.f32 %v1989, %v2144
      %v2236 = vsub.f32 %v1991, %v2144
      %v2237 = vsub.f32 %v1995, %v2147
      %v2238 = vsub.f32 %v1997, %v2147
      %v2239 = vsub.f32 %v1999, %v2150
      %v2240 = vsub.f32 %v2001, %v2150
      %v2241 = vsub.f32 %v2005, %v2153
      %v2242 = vsub.f32 %v2007, %v2153
      %v2243 = vsub.f32 %v2009, %v2156
      %v2244 = vsub.f32 %v2011, %v2156
      %v2245 = vsub.f32 %v2015, %v2159
      %v2246 = vsub.f32 %v2017, %v2159
      %v2247 = vsub.f32 %v2019, %v2162
      %v2248 = vsub.f32 %v2021, %v2162
      %v2249 = vsub.f32 %v2025, %v2165
      %v2250 = vsub.f32 %v2027, %v2165
      %v2251 = vsub.f32 %v2029, %v2168
      %v2252 = vsub.f32 %v2031, %v2168
      %v2253 = vsub.f32 %v2035, %v2171
      %v2254 = vsub.f32 %v2037, %v2171
      %v2255 = vsub.f32 %v2039, %v2174
      %v2256 = vsub.f32 %v2041, %v2174
      %v2257 = vsub.f32 %v2045, %v2177
      %v2258 = vsub.f32 %v2047, %v2177
      %v2259 = vsub.f32 %v2049, %v2180
      %v2260 = vsub.f32 %v2051, %v2180
      %v2261 = vsub.f32 %v2055, %v2183
      %v2262 = vsub.f32 %v2057, %v2183
      %v2263 = vsub.f32 %v2059, %v2186
      %v2264 = vsub.f32 %v2061, %v2186
      %v2265 = vsub.f32 %v2065, %v2189
      %v2266 = vsub.f32 %v2067, %v2189
      %v2267 = vsub.f32 %v2069, %v2192
      %v2268 = vsub.f32 %v2071, %v2192
      %v2269 = vsub.f32 %v2075, %v2195
      %v2270 = vsub.f32 %v2077, %v2195
      %v2271 = vsub.f32 %v2079, %v2198
      %v2272 = vsub.f32 %v2081, %v2198
      %v2273 = vsub.f32 %v2085, %v2201
      %v2274 = vsub.f32 %v2087, %v2201
      %v2275 = vsub.f32 %v2089, %v2204
      %v2276 = vsub.f32 %v2091, %v2204
      %v2277 = vsub.f32 %v2095, %v2207
      %v2278 = vsub.f32 %v2097, %v2207
      %v2279 = vsub.f32 %v2099, %v2210
      %v2280 = vsub.f32 %v2101, %v2210
      %v2281 = vsub.f32 %v2105, %v2213
      %v2282 = vsub.f32 %v2107, %v2213
      %v2283 = vsub.f32 %v2109, %v2216
      %v2284 = vsub.f32 %v2111, %v2216
      %v2285 = vsub.f32 %v2115, %v2219
      %v2286 = vsub.f32 %v2117, %v2219
      %v2287 = vsub.f32 %v2119, %v2222
      %v2288 = vsub.f32 %v2121, %v2222
      %v2289 = vsub.f32 %v2125, %v2225
      %v2290 = vsub.f32 %v2127, %v2225
      %v2291 = vsub.f32 %v2129, %v2228
      %v2292 = vsub.f32 %v2131, %v2228
      %v2293 = vmul.f32 %v2229, 1.442695
      %v2294 = vpow.pop %v2293
      %v2295 = vmul.f32 %v2230, 1.442695
      %v2296 = vpow.pop %v2295
      %v2297 = vmul.f32 %v2231, 1.442695
      %v2298 = vpow.pop %v2297
      %v2299 = vmul.f32 %v2232, 1.442695
      %v2300 = vpow.pop %v2299
      %v2301 = vmul.f32 %v2233, 1.442695
      %v2302 = vpow.pop %v2301
      %v2303 = vmul.f32 %v2234, 1.442695
      %v2304 = vpow.pop %v2303
      %v2305 = vmul.f32 %v2235, 1.442695
      %v2306 = vpow.pop %v2305
      %v2307 = vmul.f32 %v2236, 1.442695
      %v2308 = vpow.pop %v2307
      %v2309 = vmul.f32 %v2237, 1.442695
      %v2310 = vpow.pop %v2309
      %v2311 = vmul.f32 %v2238, 1.442695
      %v2312 = vpow.pop %v2311
      %v2313 = vmul.f32 %v2239, 1.442695
      %v2314 = vpow.pop %v2313
      %v2315 = vmul.f32 %v2240, 1.442695
      %v2316 = vpow.pop %v2315
      %v2317 = vmul.f32 %v2241, 1.442695
      %v2318 = vpow.pop %v2317
      %v2319 = vmul.f32 %v2242, 1.442695
      %v2320 = vpow.pop %v2319
      %v2321 = vmul.f32 %v2243, 1.442695
      %v2322 = vpow.pop %v2321
      %v2323 = vmul.f32 %v2244, 1.442695
      %v2324 = vpow.pop %v2323
      %v2325 = vmul.f32 %v2245, 1.442695
      %v2326 = vpow.pop %v2325
      %v2327 = vmul.f32 %v2246, 1.442695
      %v2328 = vpow.pop %v2327
      %v2329 = vmul.f32 %v2247, 1.442695
      %v2330 = vpow.pop %v2329
      %v2331 = vmul.f32 %v2248, 1.442695
      %v2332 = vpow.pop %v2331
      %v2333 = vmul.f32 %v2249, 1.442695
      %v2334 = vpow.pop %v2333
      %v2335 = vmul.f32 %v2250, 1.442695
      %v2336 = vpow.pop %v2335
      %v2337 = vmul.f32 %v2251, 1.442695
      %v2338 = vpow.pop %v2337
      %v2339 = vmul.f32 %v2252, 1.442695
      %v2340 = vpow.pop %v2339
      %v2341 = vmul.f32 %v2253, 1.442695
      %v2342 = vpow.pop %v2341
      %v2343 = vmul.f32 %v2254, 1.442695
      %v2344 = vpow.pop %v2343
      %v2345 = vmul.f32 %v2255, 1.442695
      %v2346 = vpow.pop %v2345
      %v2347 = vmul.f32 %v2256, 1.442695
      %v2348 = vpow.pop %v2347
      %v2349 = vmul.f32 %v2257, 1.442695
      %v2350 = vpow.pop %v2349
      %v2351 = vmul.f32 %v2258, 1.442695
      %v2352 = vpow.pop %v2351
      %v2353 = vmul.f32 %v2259, 1.442695
      %v2354 = vpow.pop %v2353
      %v2355 = vmul.f32 %v2260, 1.442695
      %v2356 = vpow.pop %v2355
      %v2357 = vmul.f32 %v2261, 1.442695
      %v2358 = vpow.pop %v2357
      %v2359 = vmul.f32 %v2262, 1.442695
      %v2360 = vpow.pop %v2359
      %v2361 = vmul.f32 %v2263, 1.442695
      %v2362 = vpow.pop %v2361
      %v2363 = vmul.f32 %v2264, 1.442695
      %v2364 = vpow.pop %v2363
      %v2365 = vmul.f32 %v2265, 1.442695
      %v2366 = vpow.pop %v2365
      %v2367 = vmul.f32 %v2266, 1.442695
      %v2368 = vpow.pop %v2367
      %v2369 = vmul.f32 %v2267, 1.442695
      %v2370 = vpow.pop %v2369
      %v2371 = vmul.f32 %v2268, 1.442695
      %v2372 = vpow.pop %v2371
      %v2373 = vmul.f32 %v2269, 1.442695
      %v2374 = vpow.pop %v2373
      %v2375 = vmul.f32 %v2270, 1.442695
      %v2376 = vpow.pop %v2375
      %v2377 = vmul.f32 %v2271, 1.442695
      %v2378 = vpow.pop %v2377
      %v2379 = vmul.f32 %v2272, 1.442695
      %v2380 = vpow.pop %v2379
      %v2381 = vmul.f32 %v2273, 1.442695
      %v2382 = vpow.pop %v2381
      %v2383 = vmul.f32 %v2274, 1.442695
      %v2384 = vpow.pop %v2383
      %v2385 = vmul.f32 %v2275, 1.442695
      %v2386 = vpow.pop %v2385
      %v2387 = vmul.f32 %v2276, 1.442695
      %v2388 = vpow.pop %v2387
      %v2389 = vmul.f32 %v2277, 1.442695
      %v2390 = vpow.pop %v2389
      %v2391 = vmul.f32 %v2278, 1.442695
      %v2392 = vpow.pop %v2391
      %v2393 = vmul.f32 %v2279, 1.442695
      %v2394 = vpow.pop %v2393
      %v2395 = vmul.f32 %v2280, 1.442695
      %v2396 = vpow.pop %v2395
      %v2397 = vmul.f32 %v2281, 1.442695
      %v2398 = vpow.pop %v2397
      %v2399 = vmul.f32 %v2282, 1.442695
      %v2400 = vpow.pop %v2399
      %v2401 = vmul.f32 %v2283, 1.442695
      %v2402 = vpow.pop %v2401
      %v2403 = vmul.f32 %v2284, 1.442695
      %v2404 = vpow.pop %v2403
      %v2405 = vmul.f32 %v2285, 1.442695
      %v2406 = vpow.pop %v2405
      %v2407 = vmul.f32 %v2286, 1.442695
      %v2408 = vpow.pop %v2407
      %v2409 = vmul.f32 %v2287, 1.442695
      %v2410 = vpow.pop %v2409
      %v2411 = vmul.f32 %v2288, 1.442695
      %v2412 = vpow.pop %v2411
      %v2413 = vmul.f32 %v2289, 1.442695
      %v2414 = vpow.pop %v2413
      %v2415 = vmul.f32 %v2290, 1.442695
      %v2416 = vpow.pop %v2415
      %v2417 = vmul.f32 %v2291, 1.442695
      %v2418 = vpow.pop %v2417
      %v2419 = vmul.f32 %v2292, 1.442695
      %v2420 = vpow.pop %v2419
      %v2421 = vadd.f32 %v2294, %v2296
      %2422 = vadd.xlane.f32.xlu0 %v2421
      %v2423 = vpop.xlane.xlu0 %2422
      %v2424 = vadd.f32 %v2298, %v2300
      %2425 = vadd.xlane.f32.xlu0 %v2424
      %v2426 = vpop.xlane.xlu0 %2425
      %v2427 = vadd.f32 %v2302, %v2304
      %2428 = vadd.xlane.f32.xlu0 %v2427
      %v2429 = vpop.xlane.xlu0 %2428
      %v2430 = vadd.f32 %v2306, %v2308
      %2431 = vadd.xlane.f32.xlu0 %v2430
      %v2432 = vpop.xlane.xlu0 %2431
      %v2433 = vadd.f32 %v2310, %v2312
      %2434 = vadd.xlane.f32.xlu0 %v2433
      %v2435 = vpop.xlane.xlu0 %2434
      %v2436 = vadd.f32 %v2314, %v2316
      %2437 = vadd.xlane.f32.xlu0 %v2436
      %v2438 = vpop.xlane.xlu0 %2437
      %v2439 = vadd.f32 %v2318, %v2320
      %2440 = vadd.xlane.f32.xlu0 %v2439
      %v2441 = vpop.xlane.xlu0 %2440
      %v2442 = vadd.f32 %v2322, %v2324
      %2443 = vadd.xlane.f32.xlu0 %v2442
      %v2444 = vpop.xlane.xlu0 %2443
      %v2445 = vadd.f32 %v2326, %v2328
      %2446 = vadd.xlane.f32.xlu0 %v2445
      %v2447 = vpop.xlane.xlu0 %2446
      %v2448 = vadd.f32 %v2330, %v2332
      %2449 = vadd.xlane.f32.xlu0 %v2448
      %v2450 = vpop.xlane.xlu0 %2449
      %v2451 = vadd.f32 %v2334, %v2336
      %2452 = vadd.xlane.f32.xlu0 %v2451
      %v2453 = vpop.xlane.xlu0 %2452
      %v2454 = vadd.f32 %v2338, %v2340
      %2455 = vadd.xlane.f32.xlu0 %v2454
      %v2456 = vpop.xlane.xlu0 %2455
      %v2457 = vadd.f32 %v2342, %v2344
      %2458 = vadd.xlane.f32.xlu0 %v2457
      %v2459 = vpop.xlane.xlu0 %2458
      %v2460 = vadd.f32 %v2346, %v2348
      %2461 = vadd.xlane.f32.xlu0 %v2460
      %v2462 = vpop.xlane.xlu0 %2461
      %v2463 = vadd.f32 %v2350, %v2352
      %2464 = vadd.xlane.f32.xlu0 %v2463
      %v2465 = vpop.xlane.xlu0 %2464
      %v2466 = vadd.f32 %v2354, %v2356
      %2467 = vadd.xlane.f32.xlu0 %v2466
      %v2468 = vpop.xlane.xlu0 %2467
      %v2469 = vadd.f32 %v2358, %v2360
      %2470 = vadd.xlane.f32.xlu0 %v2469
      %v2471 = vpop.xlane.xlu0 %2470
      %v2472 = vadd.f32 %v2362, %v2364
      %2473 = vadd.xlane.f32.xlu0 %v2472
      %v2474 = vpop.xlane.xlu0 %2473
      %v2475 = vadd.f32 %v2366, %v2368
      %2476 = vadd.xlane.f32.xlu0 %v2475
      %v2477 = vpop.xlane.xlu0 %2476
      %v2478 = vadd.f32 %v2370, %v2372
      %2479 = vadd.xlane.f32.xlu0 %v2478
      %v2480 = vpop.xlane.xlu0 %2479
      %v2481 = vadd.f32 %v2374, %v2376
      %2482 = vadd.xlane.f32.xlu0 %v2481
      %v2483 = vpop.xlane.xlu0 %2482
      %v2484 = vadd.f32 %v2378, %v2380
      %2485 = vadd.xlane.f32.xlu0 %v2484
      %v2486 = vpop.xlane.xlu0 %2485
      %v2487 = vadd.f32 %v2382, %v2384
      %2488 = vadd.xlane.f32.xlu0 %v2487
      %v2489 = vpop.xlane.xlu0 %2488
      %v2490 = vadd.f32 %v2386, %v2388
      %2491 = vadd.xlane.f32.xlu0 %v2490
      %v2492 = vpop.xlane.xlu0 %2491
      %v2493 = vadd.f32 %v2390, %v2392
      %2494 = vadd.xlane.f32.xlu0 %v2493
      %v2495 = vpop.xlane.xlu0 %2494
      %v2496 = vadd.f32 %v2394, %v2396
      %2497 = vadd.xlane.f32.xlu0 %v2496
      %v2498 = vpop.xlane.xlu0 %2497
      %v2499 = vadd.f32 %v2398, %v2400
      %2500 = vadd.xlane.f32.xlu0 %v2499
      %v2501 = vpop.xlane.xlu0 %2500
      %v2502 = vadd.f32 %v2402, %v2404
      %2503 = vadd.xlane.f32.xlu0 %v2502
      %v2504 = vpop.xlane.xlu0 %2503
      %v2505 = vadd.f32 %v2406, %v2408
      %2506 = vadd.xlane.f32.xlu0 %v2505
      %v2507 = vpop.xlane.xlu0 %2506
      %v2508 = vadd.f32 %v2410, %v2412
      %2509 = vadd.xlane.f32.xlu0 %v2508
      %v2510 = vpop.xlane.xlu0 %2509
      %v2511 = vadd.f32 %v2414, %v2416
      %2512 = vadd.xlane.f32.xlu0 %v2511
      %v2513 = vpop.xlane.xlu0 %2512
      %v2514 = vadd.f32 %v2418, %v2420
      %2515 = vadd.xlane.f32.xlu0 %v2514
      %v2516 = vpop.xlane.xlu0 %2515
      %v2517 = vpack.c.bf16 %v2298, %v2294
      %v2518 = vpack.c.bf16 %v2300, %v2296
      %v2519 = vpack.c.bf16 %v2306, %v2302
      %v2520 = vpack.c.bf16 %v2308, %v2304
      %v2521 = vpack.c.bf16 %v2314, %v2310
      %v2522 = vpack.c.bf16 %v2316, %v2312
      %v2523 = vpack.c.bf16 %v2322, %v2318
      %v2524 = vpack.c.bf16 %v2324, %v2320
      %v2525 = vpack.c.bf16 %v2330, %v2326
      %v2526 = vpack.c.bf16 %v2332, %v2328
      %v2527 = vpack.c.bf16 %v2338, %v2334
      %v2528 = vpack.c.bf16 %v2340, %v2336
      %v2529 = vpack.c.bf16 %v2346, %v2342
      %v2530 = vpack.c.bf16 %v2348, %v2344
      %v2531 = vpack.c.bf16 %v2354, %v2350
      %v2532 = vpack.c.bf16 %v2356, %v2352
      %v2533 = vpack.c.bf16 %v2362, %v2358
      %v2534 = vpack.c.bf16 %v2364, %v2360
      %v2535 = vpack.c.bf16 %v2370, %v2366
      %v2536 = vpack.c.bf16 %v2372, %v2368
      %v2537 = vpack.c.bf16 %v2378, %v2374
      %v2538 = vpack.c.bf16 %v2380, %v2376
      %v2539 = vpack.c.bf16 %v2386, %v2382
      %v2540 = vpack.c.bf16 %v2388, %v2384
      %v2541 = vpack.c.bf16 %v2394, %v2390
      %v2542 = vpack.c.bf16 %v2396, %v2392
      %v2543 = vpack.c.bf16 %v2402, %v2398
      %v2544 = vpack.c.bf16 %v2404, %v2400
      %v2545 = vpack.c.bf16 %v2410, %v2406
      %v2546 = vpack.c.bf16 %v2412, %v2408
      %v2547 = vpack.c.bf16 %v2418, %v2414
      %v2548 = vpack.c.bf16 %v2420, %v2416
      %2565 = vrot.lane.b32.xlu0 %v897, 96
      %v2566 = vpop.permute.xlu0 %2565
      %2567 = vrot.lane.b32.xlu0 %v898, 96
      %v2568 = vpop.permute.xlu0 %2567
      %2569 = vrot.lane.b32.xlu0 %v899, 96
      %v2570 = vpop.permute.xlu0 %2569
      %2571 = vrot.lane.b32.xlu0 %v900, 96
      %v2572 = vpop.permute.xlu0 %2571
      %2573 = vrot.lane.b32.xlu0 %v901, 96
      %v2574 = vpop.permute.xlu0 %2573
      %2575 = vrot.lane.b32.xlu0 %v902, 96
      %v2576 = vpop.permute.xlu0 %2575
      %2577 = vrot.lane.b32.xlu0 %v903, 96
      %v2578 = vpop.permute.xlu0 %2577
      %2579 = vrot.lane.b32.xlu0 %v904, 96
      %v2580 = vpop.permute.xlu0 %2579
      %2581 = vrot.lane.b32.xlu0 %v905, 96
      %v2582 = vpop.permute.xlu0 %2581
      %2583 = vrot.lane.b32.xlu0 %v906, 96
      %v2584 = vpop.permute.xlu0 %2583
      %2585 = vrot.lane.b32.xlu0 %v907, 96
      %v2586 = vpop.permute.xlu0 %2585
      %2587 = vrot.lane.b32.xlu0 %v908, 96
      %v2588 = vpop.permute.xlu0 %2587
      %2589 = vrot.lane.b32.xlu0 %v909, 96
      %v2590 = vpop.permute.xlu0 %2589
      %2591 = vrot.lane.b32.xlu0 %v910, 96
      %v2592 = vpop.permute.xlu0 %2591
      %2593 = vrot.lane.b32.xlu0 %v911, 96
      %v2594 = vpop.permute.xlu0 %2593
      %2595 = vrot.lane.b32.xlu0 %v912, 96
      %v2596 = vpop.permute.xlu0 %2595
      %2613 = vmatprep.subr.bf16.mxu0 0
      %2614 = vmatpush1.bf16.msra.mxu0 %v2580
      %2615 = vmatprep.subr.bf16.mxu0 0
      %2616 = vmatpush1.bf16.msra.mxu0 %v2578
      %2617 = vmatprep.subr.bf16.mxu0 0
      %2618 = vmatpush1.bf16.msra.mxu0 %v2576
      %2619 = vmatprep.subr.bf16.mxu0 0
      %2620 = vmatpush1.bf16.msra.mxu0 %v2574
      %2621 = vmatprep.subr.bf16.mxu0 0
      %2622 = vmatpush1.bf16.msra.mxu0 %v2572
      %2623 = vmatprep.subr.bf16.mxu0 0
      %2624 = vmatpush1.bf16.msra.mxu0 %v2570
      %2625 = vmatprep.subr.bf16.mxu0 0
      %2626 = vmatpush1.bf16.msra.mxu0 %v2568
      %2627 = vmatprep.subr.bf16.mxu0 0
      %2628 = vmatpush1.bf16.msra.mxu0 %v2566
      %2629 = vmatprep.subr.bf16.mxu0 0
      %2630 = vmatpush2.bf16.msra.mxu0 %v2596
      %2631 = vmatprep.subr.bf16.mxu0 0
      %2632 = vmatpush2.bf16.msra.mxu0 %v2594
      %2633 = vmatprep.subr.bf16.mxu0 0
      %2634 = vmatpush2.bf16.msra.mxu0 %v2592
      %2635 = vmatprep.subr.bf16.mxu0 0
      %2636 = vmatpush2.bf16.msra.mxu0 %v2590
      %2637 = vmatprep.subr.bf16.mxu0 0
      %2638 = vmatpush2.bf16.msra.mxu0 %v2588
      %2639 = vmatprep.subr.bf16.mxu0 0
      %2640 = vmatpush2.bf16.msra.mxu0 %v2586
      %2641 = vmatprep.subr.bf16.mxu0 0
      %2642 = vmatpush2.bf16.msra.mxu0 %v2584
      %2643 = vmatprep.subr.bf16.mxu0 0
      %2644 = vmatpush2.bf16.msra.mxu0 %v2582
      %2645 = vmatprep.mubr.bf16.mxu0 %v2518
      %2646 = vmatmul.mubr.bf16.gmra.mxu0 %v2517
      %v2647 = vpop.f32.mrf.mxu0
      %v2648 = vadd.f32 0.0, %v2647
      %v2649 = vpop.f32.mrf.mxu0
      %v2650 = vpop.f32.mrf.mxu0
      %v2651 = vadd.f32 0.0, %v2650
      %v2652 = vpop.f32.mrf.mxu0
      %2653 = vmatprep.mubr.bf16.mxu0 %v2520
      %2654 = vmatmul.mubr.bf16.gmra.mxu0 %v2519
      %v2655 = vpop.f32.mrf.mxu0
      %v2656 = vadd.f32 0.0, %v2655
      %v2657 = vpop.f32.mrf.mxu0
      %v2658 = vpop.f32.mrf.mxu0
      %v2659 = vadd.f32 0.0, %v2658
      %v2660 = vpop.f32.mrf.mxu0
      %2661 = vmatprep.mubr.bf16.mxu0 %v2522
      %2662 = vmatmul.mubr.bf16.gmra.mxu0 %v2521
      %v2663 = vpop.f32.mrf.mxu0
      %v2664 = vadd.f32 0.0, %v2663
      %v2665 = vpop.f32.mrf.mxu0
      %v2666 = vpop.f32.mrf.mxu0
      %v2667 = vadd.f32 0.0, %v2666
      %v2668 = vpop.f32.mrf.mxu0
      %2669 = vmatprep.mubr.bf16.mxu0 %v2524
      %2670 = vmatmul.mubr.bf16.gmra.mxu0 %v2523
      %v2671 = vpop.f32.mrf.mxu0
      %v2672 = vadd.f32 0.0, %v2671
      %v2673 = vpop.f32.mrf.mxu0
      %v2674 = vpop.f32.mrf.mxu0
      %v2675 = vadd.f32 0.0, %v2674
      %v2676 = vpop.f32.mrf.mxu0
      %2677 = vmatprep.mubr.bf16.mxu0 %v2526
      %2678 = vmatmul.mubr.bf16.gmra.mxu0 %v2525
      %v2679 = vpop.f32.mrf.mxu0
      %v2680 = vadd.f32 0.0, %v2679
      %v2681 = vpop.f32.mrf.mxu0
      %v2682 = vpop.f32.mrf.mxu0
      %v2683 = vadd.f32 0.0, %v2682
      %v2684 = vpop.f32.mrf.mxu0
      %2685 = vmatprep.mubr.bf16.mxu0 %v2528
      %2686 = vmatmul.mubr.bf16.gmra.mxu0 %v2527
      %v2687 = vpop.f32.mrf.mxu0
      %v2688 = vadd.f32 0.0, %v2687
      %v2689 = vpop.f32.mrf.mxu0
      %v2690 = vpop.f32.mrf.mxu0
      %v2691 = vadd.f32 0.0, %v2690
      %v2692 = vpop.f32.mrf.mxu0
      %2693 = vmatprep.mubr.bf16.mxu0 %v2530
      %2694 = vmatmul.mubr.bf16.gmra.mxu0 %v2529
      %v2695 = vpop.f32.mrf.mxu0
      %v2696 = vadd.f32 0.0, %v2695
      %v2697 = vpop.f32.mrf.mxu0
      %v2698 = vpop.f32.mrf.mxu0
      %v2699 = vadd.f32 0.0, %v2698
      %v2700 = vpop.f32.mrf.mxu0
      %2701 = vmatprep.mubr.bf16.mxu0 %v2532
      %2702 = vmatmul.mubr.bf16.gmra.mxu0 %v2531
      %v2703 = vpop.f32.mrf.mxu0
      %v2704 = vadd.f32 0.0, %v2703
      %v2705 = vpop.f32.mrf.mxu0
      %v2706 = vpop.f32.mrf.mxu0
      %v2707 = vadd.f32 0.0, %v2706
      %v2708 = vpop.f32.mrf.mxu0
      %2709 = vmatprep.mubr.bf16.mxu0 %v2534
      %2710 = vmatmul.mubr.bf16.gmra.mxu0 %v2533
      %v2711 = vpop.f32.mrf.mxu0
      %v2712 = vadd.f32 0.0, %v2711
      %v2713 = vpop.f32.mrf.mxu0
      %v2714 = vpop.f32.mrf.mxu0
      %v2715 = vadd.f32 0.0, %v2714
      %v2716 = vpop.f32.mrf.mxu0
      %2717 = vmatprep.mubr.bf16.mxu0 %v2536
      %2718 = vmatmul.mubr.bf16.gmra.mxu0 %v2535
      %v2719 = vpop.f32.mrf.mxu0
      %v2720 = vadd.f32 0.0, %v2719
      %v2721 = vpop.f32.mrf.mxu0
      %v2722 = vpop.f32.mrf.mxu0
      %v2723 = vadd.f32 0.0, %v2722
      %v2724 = vpop.f32.mrf.mxu0
      %2725 = vmatprep.mubr.bf16.mxu0 %v2538
      %2726 = vmatmul.mubr.bf16.gmra.mxu0 %v2537
      %v2727 = vpop.f32.mrf.mxu0
      %v2728 = vadd.f32 0.0, %v2727
      %v2729 = vpop.f32.mrf.mxu0
      %v2730 = vpop.f32.mrf.mxu0
      %v2731 = vadd.f32 0.0, %v2730
      %v2732 = vpop.f32.mrf.mxu0
      %2733 = vmatprep.mubr.bf16.mxu0 %v2540
      %2734 = vmatmul.mubr.bf16.gmra.mxu0 %v2539
      %v2735 = vpop.f32.mrf.mxu0
      %v2736 = vadd.f32 0.0, %v2735
      %v2737 = vpop.f32.mrf.mxu0
      %v2738 = vpop.f32.mrf.mxu0
      %v2739 = vadd.f32 0.0, %v2738
      %v2740 = vpop.f32.mrf.mxu0
      %2741 = vmatprep.mubr.bf16.mxu0 %v2542
      %2742 = vmatmul.mubr.bf16.gmra.mxu0 %v2541
      %v2743 = vpop.f32.mrf.mxu0
      %v2744 = vadd.f32 0.0, %v2743
      %v2745 = vpop.f32.mrf.mxu0
      %v2746 = vpop.f32.mrf.mxu0
      %v2747 = vadd.f32 0.0, %v2746
      %v2748 = vpop.f32.mrf.mxu0
      %2749 = vmatprep.mubr.bf16.mxu0 %v2544
      %2750 = vmatmul.mubr.bf16.gmra.mxu0 %v2543
      %v2751 = vpop.f32.mrf.mxu0
      %v2752 = vadd.f32 0.0, %v2751
      %v2753 = vpop.f32.mrf.mxu0
      %v2754 = vpop.f32.mrf.mxu0
      %v2755 = vadd.f32 0.0, %v2754
      %v2756 = vpop.f32.mrf.mxu0
      %2757 = vmatprep.mubr.bf16.mxu0 %v2546
      %2758 = vmatmul.mubr.bf16.gmra.mxu0 %v2545
      %v2759 = vpop.f32.mrf.mxu0
      %v2760 = vadd.f32 0.0, %v2759
      %v2761 = vpop.f32.mrf.mxu0
      %v2762 = vpop.f32.mrf.mxu0
      %v2763 = vadd.f32 0.0, %v2762
      %v2764 = vpop.f32.mrf.mxu0
      %2765 = vmatprep.mubr.bf16.mxu0 %v2548
      %2766 = vmatmul.mubr.bf16.gmra.mxu0 %v2547
      %v2767 = vpop.f32.mrf.mxu0
      %v2768 = vadd.f32 0.0, %v2767
      %v2769 = vpop.f32.mrf.mxu0
      %v2770 = vpop.f32.mrf.mxu0
      %v2771 = vadd.f32 0.0, %v2770
      %v2772 = vpop.f32.mrf.mxu0
      %2773 = vdwg.mxu0
      %v2774 = vrcp.pop %v2423
      %v2775 = vrcp.pop %v2426
      %v2776 = vrcp.pop %v2429
      %v2777 = vrcp.pop %v2432
      %v2778 = vrcp.pop %v2435
      %v2779 = vrcp.pop %v2438
      %v2780 = vrcp.pop %v2441
      %v2781 = vrcp.pop %v2444
      %v2782 = vrcp.pop %v2447
      %v2783 = vrcp.pop %v2450
      %v2784 = vrcp.pop %v2453
      %v2785 = vrcp.pop %v2456
      %v2786 = vrcp.pop %v2459
      %v2787 = vrcp.pop %v2462
      %v2788 = vrcp.pop %v2465
      %v2789 = vrcp.pop %v2468
      %v2790 = vrcp.pop %v2471
      %v2791 = vrcp.pop %v2474
      %v2792 = vrcp.pop %v2477
      %v2793 = vrcp.pop %v2480
      %v2794 = vrcp.pop %v2483
      %v2795 = vrcp.pop %v2486
      %v2796 = vrcp.pop %v2489
      %v2797 = vrcp.pop %v2492
      %v2798 = vrcp.pop %v2495
      %v2799 = vrcp.pop %v2498
      %v2800 = vrcp.pop %v2501
      %v2801 = vrcp.pop %v2504
      %v2802 = vrcp.pop %v2507
      %v2803 = vrcp.pop %v2510
      %v2804 = vrcp.pop %v2513
      %v2805 = vrcp.pop %v2516
      %v2806 = vmul.f32 %v2648, %v2774
      %v2807 = vmul.f32 %v2651, %v2775
      %v2808 = vmul.f32 %v2656, %v2776
      %v2809 = vmul.f32 %v2659, %v2777
      %v2810 = vmul.f32 %v2664, %v2778
      %v2811 = vmul.f32 %v2667, %v2779
      %v2812 = vmul.f32 %v2672, %v2780
      %v2813 = vmul.f32 %v2675, %v2781
      %v2814 = vmul.f32 %v2680, %v2782
      %v2815 = vmul.f32 %v2683, %v2783
      %v2816 = vmul.f32 %v2688, %v2784
      %v2817 = vmul.f32 %v2691, %v2785
      %v2818 = vmul.f32 %v2696, %v2786
      %v2819 = vmul.f32 %v2699, %v2787
      %v2820 = vmul.f32 %v2704, %v2788
      %v2821 = vmul.f32 %v2707, %v2789
      %v2822 = vmul.f32 %v2712, %v2790
      %v2823 = vmul.f32 %v2715, %v2791
      %v2824 = vmul.f32 %v2720, %v2792
      %v2825 = vmul.f32 %v2723, %v2793
      %v2826 = vmul.f32 %v2728, %v2794
      %v2827 = vmul.f32 %v2731, %v2795
      %v2828 = vmul.f32 %v2736, %v2796
      %v2829 = vmul.f32 %v2739, %v2797
      %v2830 = vmul.f32 %v2744, %v2798
      %v2831 = vmul.f32 %v2747, %v2799
      %v2832 = vmul.f32 %v2752, %v2800
      %v2833 = vmul.f32 %v2755, %v2801
      %v2834 = vmul.f32 %v2760, %v2802
      %v2835 = vmul.f32 %v2763, %v2803
      %v2836 = vmul.f32 %v2768, %v2804
      %v2837 = vmul.f32 %v2771, %v2805
      %2870 = vrot.lane.b32.xlu0 %v2806, 32
      %v2871 = vpop.permute.xlu0 %2870
      %2872 = vrot.lane.b32.xlu0 %v2807, 32
      %v2873 = vpop.permute.xlu0 %2872
      %2874 = vrot.lane.b32.xlu0 %v2808, 32
      %v2875 = vpop.permute.xlu0 %2874
      %2876 = vrot.lane.b32.xlu0 %v2809, 32
      %v2877 = vpop.permute.xlu0 %2876
      %2878 = vrot.lane.b32.xlu0 %v2810, 32
      %v2879 = vpop.permute.xlu0 %2878
      %2880 = vrot.lane.b32.xlu0 %v2811, 32
      %v2881 = vpop.permute.xlu0 %2880
      %2882 = vrot.lane.b32.xlu0 %v2812, 32
      %v2883 = vpop.permute.xlu0 %2882
      %2884 = vrot.lane.b32.xlu0 %v2813, 32
      %v2885 = vpop.permute.xlu0 %2884
      %2886 = vrot.lane.b32.xlu0 %v2814, 32
      %v2887 = vpop.permute.xlu0 %2886
      %2888 = vrot.lane.b32.xlu0 %v2815, 32
      %v2889 = vpop.permute.xlu0 %2888
      %2890 = vrot.lane.b32.xlu0 %v2816, 32
      %v2891 = vpop.permute.xlu0 %2890
      %2892 = vrot.lane.b32.xlu0 %v2817, 32
      %v2893 = vpop.permute.xlu0 %2892
      %2894 = vrot.lane.b32.xlu0 %v2818, 32
      %v2895 = vpop.permute.xlu0 %2894
      %2896 = vrot.lane.b32.xlu0 %v2819, 32
      %v2897 = vpop.permute.xlu0 %2896
      %2898 = vrot.lane.b32.xlu0 %v2820, 32
      %v2899 = vpop.permute.xlu0 %2898
      %2900 = vrot.lane.b32.xlu0 %v2821, 32
      %v2901 = vpop.permute.xlu0 %2900
      %2902 = vrot.lane.b32.xlu0 %v2822, 32
      %v2903 = vpop.permute.xlu0 %2902
      %2904 = vrot.lane.b32.xlu0 %v2823, 32
      %v2905 = vpop.permute.xlu0 %2904
      %2906 = vrot.lane.b32.xlu0 %v2824, 32
      %v2907 = vpop.permute.xlu0 %2906
      %2908 = vrot.lane.b32.xlu0 %v2825, 32
      %v2909 = vpop.permute.xlu0 %2908
      %2910 = vrot.lane.b32.xlu0 %v2826, 32
      %v2911 = vpop.permute.xlu0 %2910
      %2912 = vrot.lane.b32.xlu0 %v2827, 32
      %v2913 = vpop.permute.xlu0 %2912
      %2914 = vrot.lane.b32.xlu0 %v2828, 32
      %v2915 = vpop.permute.xlu0 %2914
      %2916 = vrot.lane.b32.xlu0 %v2829, 32
      %v2917 = vpop.permute.xlu0 %2916
      %2918 = vrot.lane.b32.xlu0 %v2830, 32
      %v2919 = vpop.permute.xlu0 %2918
      %2920 = vrot.lane.b32.xlu0 %v2831, 32
      %v2921 = vpop.permute.xlu0 %2920
      %2922 = vrot.lane.b32.xlu0 %v2832, 32
      %v2923 = vpop.permute.xlu0 %2922
      %2924 = vrot.lane.b32.xlu0 %v2833, 32
      %v2925 = vpop.permute.xlu0 %2924
      %2926 = vrot.lane.b32.xlu0 %v2834, 32
      %v2927 = vpop.permute.xlu0 %2926
      %2928 = vrot.lane.b32.xlu0 %v2835, 32
      %v2929 = vpop.permute.xlu0 %2928
      %2930 = vrot.lane.b32.xlu0 %v2836, 32
      %v2931 = vpop.permute.xlu0 %2930
      %2932 = vrot.lane.b32.xlu0 %v2837, 32
      %v2933 = vpop.permute.xlu0 %2932
      %vm2966 = vcmask 523520
      %2967 = vst.msk [vmem:[#allocation2] sm:$0xff] %vm2966, %v2871
      %2968 = vst.msk [vmem:[#allocation2 + $0x8] sm:$0xff] %vm2966, %v2873
      %2969 = vst.msk [vmem:[#allocation2 + $0x10] sm:$0xff] %vm2966, %v2875
      %2970 = vst.msk [vmem:[#allocation2 + $0x18] sm:$0xff] %vm2966, %v2877
      %2971 = vst.msk [vmem:[#allocation2 + $0x20] sm:$0xff] %vm2966, %v2879
      %2972 = vst.msk [vmem:[#allocation2 + $0x28] sm:$0xff] %vm2966, %v2881
      %2973 = vst.msk [vmem:[#allocation2 + $0x30] sm:$0xff] %vm2966, %v2883
      %2974 = vst.msk [vmem:[#allocation2 + $0x38] sm:$0xff] %vm2966, %v2885
      %2975 = vst.msk [vmem:[#allocation2 + $0x40] sm:$0xff] %vm2966, %v2887
      %2976 = vst.msk [vmem:[#allocation2 + $0x48] sm:$0xff] %vm2966, %v2889
      %2977 = vst.msk [vmem:[#allocation2 + $0x50] sm:$0xff] %vm2966, %v2891
      %2978 = vst.msk [vmem:[#allocation2 + $0x58] sm:$0xff] %vm2966, %v2893
      %2979 = vst.msk [vmem:[#allocation2 + $0x60] sm:$0xff] %vm2966, %v2895
      %2980 = vst.msk [vmem:[#allocation2 + $0x68] sm:$0xff] %vm2966, %v2897
      %2981 = vst.msk [vmem:[#allocation2 + $0x70] sm:$0xff] %vm2966, %v2899
      %2982 = vst.msk [vmem:[#allocation2 + $0x78] sm:$0xff] %vm2966, %v2901
      %2983 = vst.msk [vmem:[#allocation2 + $0x80] sm:$0xff] %vm2966, %v2903
      %2984 = vst.msk [vmem:[#allocation2 + $0x88] sm:$0xff] %vm2966, %v2905
      %2985 = vst.msk [vmem:[#allocation2 + $0x90] sm:$0xff] %vm2966, %v2907
      %2986 = vst.msk [vmem:[#allocation2 + $0x98] sm:$0xff] %vm2966, %v2909
      %2987 = vst.msk [vmem:[#allocation2 + $0xa0] sm:$0xff] %vm2966, %v2911
      %2988 = vst.msk [vmem:[#allocation2 + $0xa8] sm:$0xff] %vm2966, %v2913
      %2989 = vst.msk [vmem:[#allocation2 + $0xb0] sm:$0xff] %vm2966, %v2915
      %2990 = vst.msk [vmem:[#allocation2 + $0xb8] sm:$0xff] %vm2966, %v2917
      %2991 = vst.msk [vmem:[#allocation2 + $0xc0] sm:$0xff] %vm2966, %v2919
      %2992 = vst.msk [vmem:[#allocation2 + $0xc8] sm:$0xff] %vm2966, %v2921
      %2993 = vst.msk [vmem:[#allocation2 + $0xd0] sm:$0xff] %vm2966, %v2923
      %2994 = vst.msk [vmem:[#allocation2 + $0xd8] sm:$0xff] %vm2966, %v2925
      %2995 = vst.msk [vmem:[#allocation2 + $0xe0] sm:$0xff] %vm2966, %v2927
      %2996 = vst.msk [vmem:[#allocation2 + $0xe8] sm:$0xff] %vm2966, %v2929
      %2997 = vst.msk [vmem:[#allocation2 + $0xf0] sm:$0xff] %vm2966, %v2931
      %2998 = vst.msk [vmem:[#allocation2 + $0xf8] sm:$0xff] %vm2966, %v2933
      %2999 = vrot.lane.b32.xlu0 %v817, 64
      %v3000 = vpop.permute.xlu0 %2999
      %3001 = vrot.lane.b32.xlu0 %v818, 64
      %v3002 = vpop.permute.xlu0 %3001
      %3003 = vrot.lane.b32.xlu0 %v819, 64
      %v3004 = vpop.permute.xlu0 %3003
      %3005 = vrot.lane.b32.xlu0 %v820, 64
      %v3006 = vpop.permute.xlu0 %3005
      %3007 = vrot.lane.b32.xlu0 %v821, 64
      %v3008 = vpop.permute.xlu0 %3007
      %3009 = vrot.lane.b32.xlu0 %v822, 64
      %v3010 = vpop.permute.xlu0 %3009
      %3011 = vrot.lane.b32.xlu0 %v823, 64
      %v3012 = vpop.permute.xlu0 %3011
      %3013 = vrot.lane.b32.xlu0 %v824, 64
      %v3014 = vpop.permute.xlu0 %3013
      %3015 = vrot.lane.b32.xlu0 %v825, 64
      %v3016 = vpop.permute.xlu0 %3015
      %3017 = vrot.lane.b32.xlu0 %v826, 64
      %v3018 = vpop.permute.xlu0 %3017
      %3019 = vrot.lane.b32.xlu0 %v827, 64
      %v3020 = vpop.permute.xlu0 %3019
      %3021 = vrot.lane.b32.xlu0 %v828, 64
      %v3022 = vpop.permute.xlu0 %3021
      %3023 = vrot.lane.b32.xlu0 %v829, 64
      %v3024 = vpop.permute.xlu0 %3023
      %3025 = vrot.lane.b32.xlu0 %v830, 64
      %v3026 = vpop.permute.xlu0 %3025
      %3027 = vrot.lane.b32.xlu0 %v831, 64
      %v3028 = vpop.permute.xlu0 %3027
      %3029 = vrot.lane.b32.xlu0 %v832, 64
      %v3030 = vpop.permute.xlu0 %3029
      %v3032 = vsel %vm929, %v3000, 0
      %v3035 = vsel %vm929, %v3002, 0
      %v3038 = vsel %vm929, %v3004, 0
      %v3041 = vsel %vm929, %v3006, 0
      %v3044 = vsel %vm929, %v3008, 0
      %v3047 = vsel %vm929, %v3010, 0
      %v3050 = vsel %vm929, %v3012, 0
      %v3053 = vsel %vm929, %v3014, 0
      %v3056 = vsel %vm929, %v3016, 0
      %v3059 = vsel %vm929, %v3018, 0
      %v3062 = vsel %vm929, %v3020, 0
      %v3065 = vsel %vm929, %v3022, 0
      %v3068 = vsel %vm929, %v3024, 0
      %v3071 = vsel %vm929, %v3026, 0
      %v3074 = vsel %vm929, %v3028, 0
      %v3077 = vsel %vm929, %v3030, 0
      %3079 = vmatprep.subr.bf16.mxu0 0
      %3080 = vmatpush1.bf16.msra.mxu0 0
      %3081 = vmatprep.subr.bf16.mxu0 0
      %3082 = vmatpush1.bf16.msra.mxu0 0
      %3083 = vmatprep.subr.bf16.mxu0 0
      %3084 = vmatpush1.bf16.msra.mxu0 0
      %3085 = vmatprep.subr.bf16.mxu0 0
      %3086 = vmatpush1.bf16.msra.mxu0 0
      %3087 = vmatprep.subr.bf16.mxu0 0
      %3088 = vmatpush1.bf16.msra.mxu0 0
      %3089 = vmatprep.subr.bf16.mxu0 0
      %3090 = vmatpush1.bf16.msra.mxu0 0
      %3091 = vmatprep.subr.bf16.mxu0 %v924
      %3092 = vmatpush1.bf16.msra.mxu0 %v923
      %3093 = vmatprep.subr.bf16.mxu0 %v922
      %3094 = vmatpush1.bf16.msra.mxu0 %v921
      %3095 = vmatprep.subr.bf16.mxu0 0
      %3096 = vmatpush2.bf16.msra.mxu0 0
      %3097 = vmatprep.subr.bf16.mxu0 0
      %3098 = vmatpush2.bf16.msra.mxu0 0
      %3099 = vmatprep.subr.bf16.mxu0 0
      %3100 = vmatpush2.bf16.msra.mxu0 0
      %3101 = vmatprep.subr.bf16.mxu0 0
      %3102 = vmatpush2.bf16.msra.mxu0 0
      %3103 = vmatprep.subr.bf16.mxu0 0
      %3104 = vmatpush2.bf16.msra.mxu0 0
      %3105 = vmatprep.subr.bf16.mxu0 0
      %3106 = vmatpush2.bf16.msra.mxu0 0
      %3107 = vmatprep.subr.bf16.mxu0 0
      %3108 = vmatpush2.bf16.msra.mxu0 0
      %3109 = vmatprep.subr.bf16.mxu0 0
      %3110 = vmatpush2.bf16.msra.mxu0 0
      %3111 = vmatprep.mubr.bf16.mxu0 0
      %3112 = vmatmul.mubr.bf16.gmra.mxu0 %v3032
      %v3113 = vpop.f32.mrf.mxu0
      %v3114 = vadd.f32 0.0, %v3113
      %v3115 = vpop.f32.mrf.mxu0
      %v3116 = vadd.f32 0.0, %v3115
      %v3117 = vpop.f32.mrf.mxu0
      %v3118 = vadd.f32 0.0, %v3117
      %v3119 = vpop.f32.mrf.mxu0
      %v3120 = vadd.f32 0.0, %v3119
      %3121 = vmatprep.mubr.bf16.mxu0 0
      %3122 = vmatmul.mubr.bf16.gmra.mxu0 %v3035
      %v3123 = vpop.f32.mrf.mxu0
      %v3124 = vadd.f32 0.0, %v3123
      %v3125 = vpop.f32.mrf.mxu0
      %v3126 = vadd.f32 0.0, %v3125
      %v3127 = vpop.f32.mrf.mxu0
      %v3128 = vadd.f32 0.0, %v3127
      %v3129 = vpop.f32.mrf.mxu0
      %v3130 = vadd.f32 0.0, %v3129
      %3131 = vmatprep.mubr.bf16.mxu0 0
      %3132 = vmatmul.mubr.bf16.gmra.mxu0 %v3038
      %v3133 = vpop.f32.mrf.mxu0
      %v3134 = vadd.f32 0.0, %v3133
      %v3135 = vpop.f32.mrf.mxu0
      %v3136 = vadd.f32 0.0, %v3135
      %v3137 = vpop.f32.mrf.mxu0
      %v3138 = vadd.f32 0.0, %v3137
      %v3139 = vpop.f32.mrf.mxu0
      %v3140 = vadd.f32 0.0, %v3139
      %3141 = vmatprep.mubr.bf16.mxu0 0
      %3142 = vmatmul.mubr.bf16.gmra.mxu0 %v3041
      %v3143 = vpop.f32.mrf.mxu0
      %v3144 = vadd.f32 0.0, %v3143
      %v3145 = vpop.f32.mrf.mxu0
      %v3146 = vadd.f32 0.0, %v3145
      %v3147 = vpop.f32.mrf.mxu0
      %v3148 = vadd.f32 0.0, %v3147
      %v3149 = vpop.f32.mrf.mxu0
      %v3150 = vadd.f32 0.0, %v3149
      %3151 = vmatprep.mubr.bf16.mxu0 0
      %3152 = vmatmul.mubr.bf16.gmra.mxu0 %v3044
      %v3153 = vpop.f32.mrf.mxu0
      %v3154 = vadd.f32 0.0, %v3153
      %v3155 = vpop.f32.mrf.mxu0
      %v3156 = vadd.f32 0.0, %v3155
      %v3157 = vpop.f32.mrf.mxu0
      %v3158 = vadd.f32 0.0, %v3157
      %v3159 = vpop.f32.mrf.mxu0
      %v3160 = vadd.f32 0.0, %v3159
      %3161 = vmatprep.mubr.bf16.mxu0 0
      %3162 = vmatmul.mubr.bf16.gmra.mxu0 %v3047
      %v3163 = vpop.f32.mrf.mxu0
      %v3164 = vadd.f32 0.0, %v3163
      %v3165 = vpop.f32.mrf.mxu0
      %v3166 = vadd.f32 0.0, %v3165
      %v3167 = vpop.f32.mrf.mxu0
      %v3168 = vadd.f32 0.0, %v3167
      %v3169 = vpop.f32.mrf.mxu0
      %v3170 = vadd.f32 0.0, %v3169
      %3171 = vmatprep.mubr.bf16.mxu0 0
      %3172 = vmatmul.mubr.bf16.gmra.mxu0 %v3050
      %v3173 = vpop.f32.mrf.mxu0
      %v3174 = vadd.f32 0.0, %v3173
      %v3175 = vpop.f32.mrf.mxu0
      %v3176 = vadd.f32 0.0, %v3175
      %v3177 = vpop.f32.mrf.mxu0
      %v3178 = vadd.f32 0.0, %v3177
      %v3179 = vpop.f32.mrf.mxu0
      %v3180 = vadd.f32 0.0, %v3179
      %3181 = vmatprep.mubr.bf16.mxu0 0
      %3182 = vmatmul.mubr.bf16.gmra.mxu0 %v3053
      %v3183 = vpop.f32.mrf.mxu0
      %v3184 = vadd.f32 0.0, %v3183
      %v3185 = vpop.f32.mrf.mxu0
      %v3186 = vadd.f32 0.0, %v3185
      %v3187 = vpop.f32.mrf.mxu0
      %v3188 = vadd.f32 0.0, %v3187
      %v3189 = vpop.f32.mrf.mxu0
      %v3190 = vadd.f32 0.0, %v3189
      %3191 = vmatprep.mubr.bf16.mxu0 0
      %3192 = vmatmul.mubr.bf16.gmra.mxu0 %v3056
      %v3193 = vpop.f32.mrf.mxu0
      %v3194 = vadd.f32 0.0, %v3193
      %v3195 = vpop.f32.mrf.mxu0
      %v3196 = vadd.f32 0.0, %v3195
      %v3197 = vpop.f32.mrf.mxu0
      %v3198 = vadd.f32 0.0, %v3197
      %v3199 = vpop.f32.mrf.mxu0
      %v3200 = vadd.f32 0.0, %v3199
      %3201 = vmatprep.mubr.bf16.mxu0 0
      %3202 = vmatmul.mubr.bf16.gmra.mxu0 %v3059
      %v3203 = vpop.f32.mrf.mxu0
      %v3204 = vadd.f32 0.0, %v3203
      %v3205 = vpop.f32.mrf.mxu0
      %v3206 = vadd.f32 0.0, %v3205
      %v3207 = vpop.f32.mrf.mxu0
      %v3208 = vadd.f32 0.0, %v3207
      %v3209 = vpop.f32.mrf.mxu0
      %v3210 = vadd.f32 0.0, %v3209
      %3211 = vmatprep.mubr.bf16.mxu0 0
      %3212 = vmatmul.mubr.bf16.gmra.mxu0 %v3062
      %v3213 = vpop.f32.mrf.mxu0
      %v3214 = vadd.f32 0.0, %v3213
      %v3215 = vpop.f32.mrf.mxu0
      %v3216 = vadd.f32 0.0, %v3215
      %v3217 = vpop.f32.mrf.mxu0
      %v3218 = vadd.f32 0.0, %v3217
      %v3219 = vpop.f32.mrf.mxu0
      %v3220 = vadd.f32 0.0, %v3219
      %3221 = vmatprep.mubr.bf16.mxu0 0
      %3222 = vmatmul.mubr.bf16.gmra.mxu0 %v3065
      %v3223 = vpop.f32.mrf.mxu0
      %v3224 = vadd.f32 0.0, %v3223
      %v3225 = vpop.f32.mrf.mxu0
      %v3226 = vadd.f32 0.0, %v3225
      %v3227 = vpop.f32.mrf.mxu0
      %v3228 = vadd.f32 0.0, %v3227
      %v3229 = vpop.f32.mrf.mxu0
      %v3230 = vadd.f32 0.0, %v3229
      %3231 = vmatprep.mubr.bf16.mxu0 0
      %3232 = vmatmul.mubr.bf16.gmra.mxu0 %v3068
      %v3233 = vpop.f32.mrf.mxu0
      %v3234 = vadd.f32 0.0, %v3233
      %v3235 = vpop.f32.mrf.mxu0
      %v3236 = vadd.f32 0.0, %v3235
      %v3237 = vpop.f32.mrf.mxu0
      %v3238 = vadd.f32 0.0, %v3237
      %v3239 = vpop.f32.mrf.mxu0
      %v3240 = vadd.f32 0.0, %v3239
      %3241 = vmatprep.mubr.bf16.mxu0 0
      %3242 = vmatmul.mubr.bf16.gmra.mxu0 %v3071
      %v3243 = vpop.f32.mrf.mxu0
      %v3244 = vadd.f32 0.0, %v3243
      %v3245 = vpop.f32.mrf.mxu0
      %v3246 = vadd.f32 0.0, %v3245
      %v3247 = vpop.f32.mrf.mxu0
      %v3248 = vadd.f32 0.0, %v3247
      %v3249 = vpop.f32.mrf.mxu0
      %v3250 = vadd.f32 0.0, %v3249
      %3251 = vmatprep.mubr.bf16.mxu0 0
      %3252 = vmatmul.mubr.bf16.gmra.mxu0 %v3074
      %v3253 = vpop.f32.mrf.mxu0
      %v3254 = vadd.f32 0.0, %v3253
      %v3255 = vpop.f32.mrf.mxu0
      %v3256 = vadd.f32 0.0, %v3255
      %v3257 = vpop.f32.mrf.mxu0
      %v3258 = vadd.f32 0.0, %v3257
      %v3259 = vpop.f32.mrf.mxu0
      %v3260 = vadd.f32 0.0, %v3259
      %3261 = vmatprep.mubr.bf16.mxu0 0
      %3262 = vmatmul.mubr.bf16.gmra.mxu0 %v3077
      %v3263 = vpop.f32.mrf.mxu0
      %v3264 = vadd.f32 0.0, %v3263
      %v3265 = vpop.f32.mrf.mxu0
      %v3266 = vadd.f32 0.0, %v3265
      %v3267 = vpop.f32.mrf.mxu0
      %v3268 = vadd.f32 0.0, %v3267
      %v3269 = vpop.f32.mrf.mxu0
      %v3270 = vadd.f32 0.0, %v3269
      %3271 = vdwg.mxu0
      %v3272 = vmax.f32 %v3114, %v3116
      %3273 = vmax.xlane.f32.xlu0 %v3272
      %v3274 = vpop.xlane.xlu0 %3273
      %v3275 = vmax.f32 %v3118, %v3120
      %3276 = vmax.xlane.f32.xlu0 %v3275
      %v3277 = vpop.xlane.xlu0 %3276
      %v3278 = vmax.f32 %v3124, %v3126
      %3279 = vmax.xlane.f32.xlu0 %v3278
      %v3280 = vpop.xlane.xlu0 %3279
      %v3281 = vmax.f32 %v3128, %v3130
      %3282 = vmax.xlane.f32.xlu0 %v3281
      %v3283 = vpop.xlane.xlu0 %3282
      %v3284 = vmax.f32 %v3134, %v3136
      %3285 = vmax.xlane.f32.xlu0 %v3284
      %v3286 = vpop.xlane.xlu0 %3285
      %v3287 = vmax.f32 %v3138, %v3140
      %3288 = vmax.xlane.f32.xlu0 %v3287
      %v3289 = vpop.xlane.xlu0 %3288
      %v3290 = vmax.f32 %v3144, %v3146
      %3291 = vmax.xlane.f32.xlu0 %v3290
      %v3292 = vpop.xlane.xlu0 %3291
      %v3293 = vmax.f32 %v3148, %v3150
      %3294 = vmax.xlane.f32.xlu0 %v3293
      %v3295 = vpop.xlane.xlu0 %3294
      %v3296 = vmax.f32 %v3154, %v3156
      %3297 = vmax.xlane.f32.xlu0 %v3296
      %v3298 = vpop.xlane.xlu0 %3297
      %v3299 = vmax.f32 %v3158, %v3160
      %3300 = vmax.xlane.f32.xlu0 %v3299
      %v3301 = vpop.xlane.xlu0 %3300
      %v3302 = vmax.f32 %v3164, %v3166
      %3303 = vmax.xlane.f32.xlu0 %v3302
      %v3304 = vpop.xlane.xlu0 %3303
      %v3305 = vmax.f32 %v3168, %v3170
      %3306 = vmax.xlane.f32.xlu0 %v3305
      %v3307 = vpop.xlane.xlu0 %3306
      %v3308 = vmax.f32 %v3174, %v3176
      %3309 = vmax.xlane.f32.xlu0 %v3308
      %v3310 = vpop.xlane.xlu0 %3309
      %v3311 = vmax.f32 %v3178, %v3180
      %3312 = vmax.xlane.f32.xlu0 %v3311
      %v3313 = vpop.xlane.xlu0 %3312
      %v3314 = vmax.f32 %v3184, %v3186
      %3315 = vmax.xlane.f32.xlu0 %v3314
      %v3316 = vpop.xlane.xlu0 %3315
      %v3317 = vmax.f32 %v3188, %v3190
      %3318 = vmax.xlane.f32.xlu0 %v3317
      %v3319 = vpop.xlane.xlu0 %3318
      %v3320 = vmax.f32 %v3194, %v3196
      %3321 = vmax.xlane.f32.xlu0 %v3320
      %v3322 = vpop.xlane.xlu0 %3321
      %v3323 = vmax.f32 %v3198, %v3200
      %3324 = vmax.xlane.f32.xlu0 %v3323
      %v3325 = vpop.xlane.xlu0 %3324
      %v3326 = vmax.f32 %v3204, %v3206
      %3327 = vmax.xlane.f32.xlu0 %v3326
      %v3328 = vpop.xlane.xlu0 %3327
      %v3329 = vmax.f32 %v3208, %v3210
      %3330 = vmax.xlane.f32.xlu0 %v3329
      %v3331 = vpop.xlane.xlu0 %3330
      %v3332 = vmax.f32 %v3214, %v3216
      %3333 = vmax.xlane.f32.xlu0 %v3332
      %v3334 = vpop.xlane.xlu0 %3333
      %v3335 = vmax.f32 %v3218, %v3220
      %3336 = vmax.xlane.f32.xlu0 %v3335
      %v3337 = vpop.xlane.xlu0 %3336
      %v3338 = vmax.f32 %v3224, %v3226
      %3339 = vmax.xlane.f32.xlu0 %v3338
      %v3340 = vpop.xlane.xlu0 %3339
      %v3341 = vmax.f32 %v3228, %v3230
      %3342 = vmax.xlane.f32.xlu0 %v3341
      %v3343 = vpop.xlane.xlu0 %3342
      %v3344 = vmax.f32 %v3234, %v3236
      %3345 = vmax.xlane.f32.xlu0 %v3344
      %v3346 = vpop.xlane.xlu0 %3345
      %v3347 = vmax.f32 %v3238, %v3240
      %3348 = vmax.xlane.f32.xlu0 %v3347
      %v3349 = vpop.xlane.xlu0 %3348
      %v3350 = vmax.f32 %v3244, %v3246
      %3351 = vmax.xlane.f32.xlu0 %v3350
      %v3352 = vpop.xlane.xlu0 %3351
      %v3353 = vmax.f32 %v3248, %v3250
      %3354 = vmax.xlane.f32.xlu0 %v3353
      %v3355 = vpop.xlane.xlu0 %3354
      %v3356 = vmax.f32 %v3254, %v3256
      %3357 = vmax.xlane.f32.xlu0 %v3356
      %v3358 = vpop.xlane.xlu0 %3357
      %v3359 = vmax.f32 %v3258, %v3260
      %3360 = vmax.xlane.f32.xlu0 %v3359
      %v3361 = vpop.xlane.xlu0 %3360
      %v3362 = vmax.f32 %v3264, %v3266
      %3363 = vmax.xlane.f32.xlu0 %v3362
      %v3364 = vpop.xlane.xlu0 %3363
      %v3365 = vmax.f32 %v3268, %v3270
      %3366 = vmax.xlane.f32.xlu0 %v3365
      %v3367 = vpop.xlane.xlu0 %3366
      %v3368 = vsub.f32 %v3114, %v3274
      %v3369 = vsub.f32 %v3116, %v3274
      %v3370 = vsub.f32 %v3118, %v3277
      %v3371 = vsub.f32 %v3120, %v3277
      %v3372 = vsub.f32 %v3124, %v3280
      %v3373 = vsub.f32 %v3126, %v3280
      %v3374 = vsub.f32 %v3128, %v3283
      %v3375 = vsub.f32 %v3130, %v3283
      %v3376 = vsub.f32 %v3134, %v3286
      %v3377 = vsub.f32 %v3136, %v3286
      %v3378 = vsub.f32 %v3138, %v3289
      %v3379 = vsub.f32 %v3140, %v3289
      %v3380 = vsub.f32 %v3144, %v3292
      %v3381 = vsub.f32 %v3146, %v3292
      %v3382 = vsub.f32 %v3148, %v3295
      %v3383 = vsub.f32 %v3150, %v3295
      %v3384 = vsub.f32 %v3154, %v3298
      %v3385 = vsub.f32 %v3156, %v3298
      %v3386 = vsub.f32 %v3158, %v3301
      %v3387 = vsub.f32 %v3160, %v3301
      %v3388 = vsub.f32 %v3164, %v3304
      %v3389 = vsub.f32 %v3166, %v3304
      %v3390 = vsub.f32 %v3168, %v3307
      %v3391 = vsub.f32 %v3170, %v3307
      %v3392 = vsub.f32 %v3174, %v3310
      %v3393 = vsub.f32 %v3176, %v3310
      %v3394 = vsub.f32 %v3178, %v3313
      %v3395 = vsub.f32 %v3180, %v3313
      %v3396 = vsub.f32 %v3184, %v3316
      %v3397 = vsub.f32 %v3186, %v3316
      %v3398 = vsub.f32 %v3188, %v3319
      %v3399 = vsub.f32 %v3190, %v3319
      %v3400 = vsub.f32 %v3194, %v3322
      %v3401 = vsub.f32 %v3196, %v3322
      %v3402 = vsub.f32 %v3198, %v3325
      %v3403 = vsub.f32 %v3200, %v3325
      %v3404 = vsub.f32 %v3204, %v3328
      %v3405 = vsub.f32 %v3206, %v3328
      %v3406 = vsub.f32 %v3208, %v3331
      %v3407 = vsub.f32 %v3210, %v3331
      %v3408 = vsub.f32 %v3214, %v3334
      %v3409 = vsub.f32 %v3216, %v3334
      %v3410 = vsub.f32 %v3218, %v3337
      %v3411 = vsub.f32 %v3220, %v3337
      %v3412 = vsub.f32 %v3224, %v3340
      %v3413 = vsub.f32 %v3226, %v3340
      %v3414 = vsub.f32 %v3228, %v3343
      %v3415 = vsub.f32 %v3230, %v3343
      %v3416 = vsub.f32 %v3234, %v3346
      %v3417 = vsub.f32 %v3236, %v3346
      %v3418 = vsub.f32 %v3238, %v3349
      %v3419 = vsub.f32 %v3240, %v3349
      %v3420 = vsub.f32 %v3244, %v3352
      %v3421 = vsub.f32 %v3246, %v3352
      %v3422 = vsub.f32 %v3248, %v3355
      %v3423 = vsub.f32 %v3250, %v3355
      %v3424 = vsub.f32 %v3254, %v3358
      %v3425 = vsub.f32 %v3256, %v3358
      %v3426 = vsub.f32 %v3258, %v3361
      %v3427 = vsub.f32 %v3260, %v3361
      %v3428 = vsub.f32 %v3264, %v3364
      %v3429 = vsub.f32 %v3266, %v3364
      %v3430 = vsub.f32 %v3268, %v3367
      %v3431 = vsub.f32 %v3270, %v3367
      %v3432 = vmul.f32 %v3368, 1.442695
      %v3433 = vpow.pop %v3432
      %v3434 = vmul.f32 %v3369, 1.442695
      %v3435 = vpow.pop %v3434
      %v3436 = vmul.f32 %v3370, 1.442695
      %v3437 = vpow.pop %v3436
      %v3438 = vmul.f32 %v3371, 1.442695
      %v3439 = vpow.pop %v3438
      %v3440 = vmul.f32 %v3372, 1.442695
      %v3441 = vpow.pop %v3440
      %v3442 = vmul.f32 %v3373, 1.442695
      %v3443 = vpow.pop %v3442
      %v3444 = vmul.f32 %v3374, 1.442695
      %v3445 = vpow.pop %v3444
      %v3446 = vmul.f32 %v3375, 1.442695
      %v3447 = vpow.pop %v3446
      %v3448 = vmul.f32 %v3376, 1.442695
      %v3449 = vpow.pop %v3448
      %v3450 = vmul.f32 %v3377, 1.442695
      %v3451 = vpow.pop %v3450
      %v3452 = vmul.f32 %v3378, 1.442695
      %v3453 = vpow.pop %v3452
      %v3454 = vmul.f32 %v3379, 1.442695
      %v3455 = vpow.pop %v3454
      %v3456 = vmul.f32 %v3380, 1.442695
      %v3457 = vpow.pop %v3456
      %v3458 = vmul.f32 %v3381, 1.442695
      %v3459 = vpow.pop %v3458
      %v3460 = vmul.f32 %v3382, 1.442695
      %v3461 = vpow.pop %v3460
      %v3462 = vmul.f32 %v3383, 1.442695
      %v3463 = vpow.pop %v3462
      %v3464 = vmul.f32 %v3384, 1.442695
      %v3465 = vpow.pop %v3464
      %v3466 = vmul.f32 %v3385, 1.442695
      %v3467 = vpow.pop %v3466
      %v3468 = vmul.f32 %v3386, 1.442695
      %v3469 = vpow.pop %v3468
      %v3470 = vmul.f32 %v3387, 1.442695
      %v3471 = vpow.pop %v3470
      %v3472 = vmul.f32 %v3388, 1.442695
      %v3473 = vpow.pop %v3472
      %v3474 = vmul.f32 %v3389, 1.442695
      %v3475 = vpow.pop %v3474
      %v3476 = vmul.f32 %v3390, 1.442695
      %v3477 = vpow.pop %v3476
      %v3478 = vmul.f32 %v3391, 1.442695
      %v3479 = vpow.pop %v3478
      %v3480 = vmul.f32 %v3392, 1.442695
      %v3481 = vpow.pop %v3480
      %v3482 = vmul.f32 %v3393, 1.442695
      %v3483 = vpow.pop %v3482
      %v3484 = vmul.f32 %v3394, 1.442695
      %v3485 = vpow.pop %v3484
      %v3486 = vmul.f32 %v3395, 1.442695
      %v3487 = vpow.pop %v3486
      %v3488 = vmul.f32 %v3396, 1.442695
      %v3489 = vpow.pop %v3488
      %v3490 = vmul.f32 %v3397, 1.442695
      %v3491 = vpow.pop %v3490
      %v3492 = vmul.f32 %v3398, 1.442695
      %v3493 = vpow.pop %v3492
      %v3494 = vmul.f32 %v3399, 1.442695
      %v3495 = vpow.pop %v3494
      %v3496 = vmul.f32 %v3400, 1.442695
      %v3497 = vpow.pop %v3496
      %v3498 = vmul.f32 %v3401, 1.442695
      %v3499 = vpow.pop %v3498
      %v3500 = vmul.f32 %v3402, 1.442695
      %v3501 = vpow.pop %v3500
      %v3502 = vmul.f32 %v3403, 1.442695
      %v3503 = vpow.pop %v3502
      %v3504 = vmul.f32 %v3404, 1.442695
      %v3505 = vpow.pop %v3504
      %v3506 = vmul.f32 %v3405, 1.442695
      %v3507 = vpow.pop %v3506
      %v3508 = vmul.f32 %v3406, 1.442695
      %v3509 = vpow.pop %v3508
      %v3510 = vmul.f32 %v3407, 1.442695
      %v3511 = vpow.pop %v3510
      %v3512 = vmul.f32 %v3408, 1.442695
      %v3513 = vpow.pop %v3512
      %v3514 = vmul.f32 %v3409, 1.442695
      %v3515 = vpow.pop %v3514
      %v3516 = vmul.f32 %v3410, 1.442695
      %v3517 = vpow.pop %v3516
      %v3518 = vmul.f32 %v3411, 1.442695
      %v3519 = vpow.pop %v3518
      %v3520 = vmul.f32 %v3412, 1.442695
      %v3521 = vpow.pop %v3520
      %v3522 = vmul.f32 %v3413, 1.442695
      %v3523 = vpow.pop %v3522
      %v3524 = vmul.f32 %v3414, 1.442695
      %v3525 = vpow.pop %v3524
      %v3526 = vmul.f32 %v3415, 1.442695
      %v3527 = vpow.pop %v3526
      %v3528 = vmul.f32 %v3416, 1.442695
      %v3529 = vpow.pop %v3528
      %v3530 = vmul.f32 %v3417, 1.442695
      %v3531 = vpow.pop %v3530
      %v3532 = vmul.f32 %v3418, 1.442695
      %v3533 = vpow.pop %v3532
      %v3534 = vmul.f32 %v3419, 1.442695
      %v3535 = vpow.pop %v3534
      %v3536 = vmul.f32 %v3420, 1.442695
      %v3537 = vpow.pop %v3536
      %v3538 = vmul.f32 %v3421, 1.442695
      %v3539 = vpow.pop %v3538
      %v3540 = vmul.f32 %v3422, 1.442695
      %v3541 = vpow.pop %v3540
      %v3542 = vmul.f32 %v3423, 1.442695
      %v3543 = vpow.pop %v3542
      %v3544 = vmul.f32 %v3424, 1.442695
      %v3545 = vpow.pop %v3544
      %v3546 = vmul.f32 %v3425, 1.442695
      %v3547 = vpow.pop %v3546
      %v3548 = vmul.f32 %v3426, 1.442695
      %v3549 = vpow.pop %v3548
      %v3550 = vmul.f32 %v3427, 1.442695
      %v3551 = vpow.pop %v3550
      %v3552 = vmul.f32 %v3428, 1.442695
      %v3553 = vpow.pop %v3552
      %v3554 = vmul.f32 %v3429, 1.442695
      %v3555 = vpow.pop %v3554
      %v3556 = vmul.f32 %v3430, 1.442695
      %v3557 = vpow.pop %v3556
      %v3558 = vmul.f32 %v3431, 1.442695
      %v3559 = vpow.pop %v3558
      %v3560 = vadd.f32 %v3433, %v3435
      %3561 = vadd.xlane.f32.xlu0 %v3560
      %v3562 = vpop.xlane.xlu0 %3561
      %v3563 = vadd.f32 %v3437, %v3439
      %3564 = vadd.xlane.f32.xlu0 %v3563
      %v3565 = vpop.xlane.xlu0 %3564
      %v3566 = vadd.f32 %v3441, %v3443
      %3567 = vadd.xlane.f32.xlu0 %v3566
      %v3568 = vpop.xlane.xlu0 %3567
      %v3569 = vadd.f32 %v3445, %v3447
      %3570 = vadd.xlane.f32.xlu0 %v3569
      %v3571 = vpop.xlane.xlu0 %3570
      %v3572 = vadd.f32 %v3449, %v3451
      %3573 = vadd.xlane.f32.xlu0 %v3572
      %v3574 = vpop.xlane.xlu0 %3573
      %v3575 = vadd.f32 %v3453, %v3455
      %3576 = vadd.xlane.f32.xlu0 %v3575
      %v3577 = vpop.xlane.xlu0 %3576
      %v3578 = vadd.f32 %v3457, %v3459
      %3579 = vadd.xlane.f32.xlu0 %v3578
      %v3580 = vpop.xlane.xlu0 %3579
      %v3581 = vadd.f32 %v3461, %v3463
      %3582 = vadd.xlane.f32.xlu0 %v3581
      %v3583 = vpop.xlane.xlu0 %3582
      %v3584 = vadd.f32 %v3465, %v3467
      %3585 = vadd.xlane.f32.xlu0 %v3584
      %v3586 = vpop.xlane.xlu0 %3585
      %v3587 = vadd.f32 %v3469, %v3471
      %3588 = vadd.xlane.f32.xlu0 %v3587
      %v3589 = vpop.xlane.xlu0 %3588
      %v3590 = vadd.f32 %v3473, %v3475
      %3591 = vadd.xlane.f32.xlu0 %v3590
      %v3592 = vpop.xlane.xlu0 %3591
      %v3593 = vadd.f32 %v3477, %v3479
      %3594 = vadd.xlane.f32.xlu0 %v3593
      %v3595 = vpop.xlane.xlu0 %3594
      %v3596 = vadd.f32 %v3481, %v3483
      %3597 = vadd.xlane.f32.xlu0 %v3596
      %v3598 = vpop.xlane.xlu0 %3597
      %v3599 = vadd.f32 %v3485, %v3487
      %3600 = vadd.xlane.f32.xlu0 %v3599
      %v3601 = vpop.xlane.xlu0 %3600
      %v3602 = vadd.f32 %v3489, %v3491
      %3603 = vadd.xlane.f32.xlu0 %v3602
      %v3604 = vpop.xlane.xlu0 %3603
      %v3605 = vadd.f32 %v3493, %v3495
      %3606 = vadd.xlane.f32.xlu0 %v3605
      %v3607 = vpop.xlane.xlu0 %3606
      %v3608 = vadd.f32 %v3497, %v3499
      %3609 = vadd.xlane.f32.xlu0 %v3608
      %v3610 = vpop.xlane.xlu0 %3609
      %v3611 = vadd.f32 %v3501, %v3503
      %3612 = vadd.xlane.f32.xlu0 %v3611
      %v3613 = vpop.xlane.xlu0 %3612
      %v3614 = vadd.f32 %v3505, %v3507
      %3615 = vadd.xlane.f32.xlu0 %v3614
      %v3616 = vpop.xlane.xlu0 %3615
      %v3617 = vadd.f32 %v3509, %v3511
      %3618 = vadd.xlane.f32.xlu0 %v3617
      %v3619 = vpop.xlane.xlu0 %3618
      %v3620 = vadd.f32 %v3513, %v3515
      %3621 = vadd.xlane.f32.xlu0 %v3620
      %v3622 = vpop.xlane.xlu0 %3621
      %v3623 = vadd.f32 %v3517, %v3519
      %3624 = vadd.xlane.f32.xlu0 %v3623
      %v3625 = vpop.xlane.xlu0 %3624
      %v3626 = vadd.f32 %v3521, %v3523
      %3627 = vadd.xlane.f32.xlu0 %v3626
      %v3628 = vpop.xlane.xlu0 %3627
      %v3629 = vadd.f32 %v3525, %v3527
      %3630 = vadd.xlane.f32.xlu0 %v3629
      %v3631 = vpop.xlane.xlu0 %3630
      %v3632 = vadd.f32 %v3529, %v3531
      %3633 = vadd.xlane.f32.xlu0 %v3632
      %v3634 = vpop.xlane.xlu0 %3633
      %v3635 = vadd.f32 %v3533, %v3535
      %3636 = vadd.xlane.f32.xlu0 %v3635
      %v3637 = vpop.xlane.xlu0 %3636
      %v3638 = vadd.f32 %v3537, %v3539
      %3639 = vadd.xlane.f32.xlu0 %v3638
      %v3640 = vpop.xlane.xlu0 %3639
      %v3641 = vadd.f32 %v3541, %v3543
      %3642 = vadd.xlane.f32.xlu0 %v3641
      %v3643 = vpop.xlane.xlu0 %3642
      %v3644 = vadd.f32 %v3545, %v3547
      %3645 = vadd.xlane.f32.xlu0 %v3644
      %v3646 = vpop.xlane.xlu0 %3645
      %v3647 = vadd.f32 %v3549, %v3551
      %3648 = vadd.xlane.f32.xlu0 %v3647
      %v3649 = vpop.xlane.xlu0 %3648
      %v3650 = vadd.f32 %v3553, %v3555
      %3651 = vadd.xlane.f32.xlu0 %v3650
      %v3652 = vpop.xlane.xlu0 %3651
      %v3653 = vadd.f32 %v3557, %v3559
      %3654 = vadd.xlane.f32.xlu0 %v3653
      %v3655 = vpop.xlane.xlu0 %3654
      %v3656 = vpack.c.bf16 %v3437, %v3433
      %v3657 = vpack.c.bf16 %v3439, %v3435
      %v3658 = vpack.c.bf16 %v3445, %v3441
      %v3659 = vpack.c.bf16 %v3447, %v3443
      %v3660 = vpack.c.bf16 %v3453, %v3449
      %v3661 = vpack.c.bf16 %v3455, %v3451
      %v3662 = vpack.c.bf16 %v3461, %v3457
      %v3663 = vpack.c.bf16 %v3463, %v3459
      %v3664 = vpack.c.bf16 %v3469, %v3465
      %v3665 = vpack.c.bf16 %v3471, %v3467
      %v3666 = vpack.c.bf16 %v3477, %v3473
      %v3667 = vpack.c.bf16 %v3479, %v3475
      %v3668 = vpack.c.bf16 %v3485, %v3481
      %v3669 = vpack.c.bf16 %v3487, %v3483
      %v3670 = vpack.c.bf16 %v3493, %v3489
      %v3671 = vpack.c.bf16 %v3495, %v3491
      %v3672 = vpack.c.bf16 %v3501, %v3497
      %v3673 = vpack.c.bf16 %v3503, %v3499
      %v3674 = vpack.c.bf16 %v3509, %v3505
      %v3675 = vpack.c.bf16 %v3511, %v3507
      %v3676 = vpack.c.bf16 %v3517, %v3513
      %v3677 = vpack.c.bf16 %v3519, %v3515
      %v3678 = vpack.c.bf16 %v3525, %v3521
      %v3679 = vpack.c.bf16 %v3527, %v3523
      %v3680 = vpack.c.bf16 %v3533, %v3529
      %v3681 = vpack.c.bf16 %v3535, %v3531
      %v3682 = vpack.c.bf16 %v3541, %v3537
      %v3683 = vpack.c.bf16 %v3543, %v3539
      %v3684 = vpack.c.bf16 %v3549, %v3545
      %v3685 = vpack.c.bf16 %v3551, %v3547
      %v3686 = vpack.c.bf16 %v3557, %v3553
      %v3687 = vpack.c.bf16 %v3559, %v3555
      %3688 = vrot.lane.b32.xlu0 %v897, 64
      %v3689 = vpop.permute.xlu0 %3688
      %3690 = vrot.lane.b32.xlu0 %v898, 64
      %v3691 = vpop.permute.xlu0 %3690
      %3692 = vrot.lane.b32.xlu0 %v899, 64
      %v3693 = vpop.permute.xlu0 %3692
      %3694 = vrot.lane.b32.xlu0 %v900, 64
      %v3695 = vpop.permute.xlu0 %3694
      %3696 = vrot.lane.b32.xlu0 %v901, 64
      %v3697 = vpop.permute.xlu0 %3696
      %3698 = vrot.lane.b32.xlu0 %v902, 64
      %v3699 = vpop.permute.xlu0 %3698
      %3700 = vrot.lane.b32.xlu0 %v903, 64
      %v3701 = vpop.permute.xlu0 %3700
      %3702 = vrot.lane.b32.xlu0 %v904, 64
      %v3703 = vpop.permute.xlu0 %3702
      %3704 = vrot.lane.b32.xlu0 %v905, 64
      %v3705 = vpop.permute.xlu0 %3704
      %3706 = vrot.lane.b32.xlu0 %v906, 64
      %v3707 = vpop.permute.xlu0 %3706
      %3708 = vrot.lane.b32.xlu0 %v907, 64
      %v3709 = vpop.permute.xlu0 %3708
      %3710 = vrot.lane.b32.xlu0 %v908, 64
      %v3711 = vpop.permute.xlu0 %3710
      %3712 = vrot.lane.b32.xlu0 %v909, 64
      %v3713 = vpop.permute.xlu0 %3712
      %3714 = vrot.lane.b32.xlu0 %v910, 64
      %v3715 = vpop.permute.xlu0 %3714
      %3716 = vrot.lane.b32.xlu0 %v911, 64
      %v3717 = vpop.permute.xlu0 %3716
      %3718 = vrot.lane.b32.xlu0 %v912, 64
      %v3719 = vpop.permute.xlu0 %3718
      %3736 = vmatprep.subr.bf16.mxu0 0
      %3737 = vmatpush1.bf16.msra.mxu0 %v3703
      %3738 = vmatprep.subr.bf16.mxu0 0
      %3739 = vmatpush1.bf16.msra.mxu0 %v3701
      %3740 = vmatprep.subr.bf16.mxu0 0
      %3741 = vmatpush1.bf16.msra.mxu0 %v3699
      %3742 = vmatprep.subr.bf16.mxu0 0
      %3743 = vmatpush1.bf16.msra.mxu0 %v3697
      %3744 = vmatprep.subr.bf16.mxu0 0
      %3745 = vmatpush1.bf16.msra.mxu0 %v3695
      %3746 = vmatprep.subr.bf16.mxu0 0
      %3747 = vmatpush1.bf16.msra.mxu0 %v3693
      %3748 = vmatprep.subr.bf16.mxu0 0
      %3749 = vmatpush1.bf16.msra.mxu0 %v3691
      %3750 = vmatprep.subr.bf16.mxu0 0
      %3751 = vmatpush1.bf16.msra.mxu0 %v3689
      %3752 = vmatprep.subr.bf16.mxu0 0
      %3753 = vmatpush2.bf16.msra.mxu0 %v3719
      %3754 = vmatprep.subr.bf16.mxu0 0
      %3755 = vmatpush2.bf16.msra.mxu0 %v3717
      %3756 = vmatprep.subr.bf16.mxu0 0
      %3757 = vmatpush2.bf16.msra.mxu0 %v3715
      %3758 = vmatprep.subr.bf16.mxu0 0
      %3759 = vmatpush2.bf16.msra.mxu0 %v3713
      %3760 = vmatprep.subr.bf16.mxu0 0
      %3761 = vmatpush2.bf16.msra.mxu0 %v3711
      %3762 = vmatprep.subr.bf16.mxu0 0
      %3763 = vmatpush2.bf16.msra.mxu0 %v3709
      %3764 = vmatprep.subr.bf16.mxu0 0
      %3765 = vmatpush2.bf16.msra.mxu0 %v3707
      %3766 = vmatprep.subr.bf16.mxu0 0
      %3767 = vmatpush2.bf16.msra.mxu0 %v3705
      %3768 = vmatprep.mubr.bf16.mxu0 %v3657
      %3769 = vmatmul.mubr.bf16.gmra.mxu0 %v3656
      %v3770 = vpop.f32.mrf.mxu0
      %v3771 = vadd.f32 0.0, %v3770
      %v3772 = vpop.f32.mrf.mxu0
      %v3773 = vpop.f32.mrf.mxu0
      %v3774 = vadd.f32 0.0, %v3773
      %v3775 = vpop.f32.mrf.mxu0
      %3776 = vmatprep.mubr.bf16.mxu0 %v3659
      %3777 = vmatmul.mubr.bf16.gmra.mxu0 %v3658
      %v3778 = vpop.f32.mrf.mxu0
      %v3779 = vadd.f32 0.0, %v3778
      %v3780 = vpop.f32.mrf.mxu0
      %v3781 = vpop.f32.mrf.mxu0
      %v3782 = vadd.f32 0.0, %v3781
      %v3783 = vpop.f32.mrf.mxu0
      %3784 = vmatprep.mubr.bf16.mxu0 %v3661
      %3785 = vmatmul.mubr.bf16.gmra.mxu0 %v3660
      %v3786 = vpop.f32.mrf.mxu0
      %v3787 = vadd.f32 0.0, %v3786
      %v3788 = vpop.f32.mrf.mxu0
      %v3789 = vpop.f32.mrf.mxu0
      %v3790 = vadd.f32 0.0, %v3789
      %v3791 = vpop.f32.mrf.mxu0
      %3792 = vmatprep.mubr.bf16.mxu0 %v3663
      %3793 = vmatmul.mubr.bf16.gmra.mxu0 %v3662
      %v3794 = vpop.f32.mrf.mxu0
      %v3795 = vadd.f32 0.0, %v3794
      %v3796 = vpop.f32.mrf.mxu0
      %v3797 = vpop.f32.mrf.mxu0
      %v3798 = vadd.f32 0.0, %v3797
      %v3799 = vpop.f32.mrf.mxu0
      %3800 = vmatprep.mubr.bf16.mxu0 %v3665
      %3801 = vmatmul.mubr.bf16.gmra.mxu0 %v3664
      %v3802 = vpop.f32.mrf.mxu0
      %v3803 = vadd.f32 0.0, %v3802
      %v3804 = vpop.f32.mrf.mxu0
      %v3805 = vpop.f32.mrf.mxu0
      %v3806 = vadd.f32 0.0, %v3805
      %v3807 = vpop.f32.mrf.mxu0
      %3808 = vmatprep.mubr.bf16.mxu0 %v3667
      %3809 = vmatmul.mubr.bf16.gmra.mxu0 %v3666
      %v3810 = vpop.f32.mrf.mxu0
      %v3811 = vadd.f32 0.0, %v3810
      %v3812 = vpop.f32.mrf.mxu0
      %v3813 = vpop.f32.mrf.mxu0
      %v3814 = vadd.f32 0.0, %v3813
      %v3815 = vpop.f32.mrf.mxu0
      %3816 = vmatprep.mubr.bf16.mxu0 %v3669
      %3817 = vmatmul.mubr.bf16.gmra.mxu0 %v3668
      %v3818 = vpop.f32.mrf.mxu0
      %v3819 = vadd.f32 0.0, %v3818
      %v3820 = vpop.f32.mrf.mxu0
      %v3821 = vpop.f32.mrf.mxu0
      %v3822 = vadd.f32 0.0, %v3821
      %v3823 = vpop.f32.mrf.mxu0
      %3824 = vmatprep.mubr.bf16.mxu0 %v3671
      %3825 = vmatmul.mubr.bf16.gmra.mxu0 %v3670
      %v3826 = vpop.f32.mrf.mxu0
      %v3827 = vadd.f32 0.0, %v3826
      %v3828 = vpop.f32.mrf.mxu0
      %v3829 = vpop.f32.mrf.mxu0
      %v3830 = vadd.f32 0.0, %v3829
      %v3831 = vpop.f32.mrf.mxu0
      %3832 = vmatprep.mubr.bf16.mxu0 %v3673
      %3833 = vmatmul.mubr.bf16.gmra.mxu0 %v3672
      %v3834 = vpop.f32.mrf.mxu0
      %v3835 = vadd.f32 0.0, %v3834
      %v3836 = vpop.f32.mrf.mxu0
      %v3837 = vpop.f32.mrf.mxu0
      %v3838 = vadd.f32 0.0, %v3837
      %v3839 = vpop.f32.mrf.mxu0
      %3840 = vmatprep.mubr.bf16.mxu0 %v3675
      %3841 = vmatmul.mubr.bf16.gmra.mxu0 %v3674
      %v3842 = vpop.f32.mrf.mxu0
      %v3843 = vadd.f32 0.0, %v3842
      %v3844 = vpop.f32.mrf.mxu0
      %v3845 = vpop.f32.mrf.mxu0
      %v3846 = vadd.f32 0.0, %v3845
      %v3847 = vpop.f32.mrf.mxu0
      %3848 = vmatprep.mubr.bf16.mxu0 %v3677
      %3849 = vmatmul.mubr.bf16.gmra.mxu0 %v3676
      %v3850 = vpop.f32.mrf.mxu0
      %v3851 = vadd.f32 0.0, %v3850
      %v3852 = vpop.f32.mrf.mxu0
      %v3853 = vpop.f32.mrf.mxu0
      %v3854 = vadd.f32 0.0, %v3853
      %v3855 = vpop.f32.mrf.mxu0
      %3856 = vmatprep.mubr.bf16.mxu0 %v3679
      %3857 = vmatmul.mubr.bf16.gmra.mxu0 %v3678
      %v3858 = vpop.f32.mrf.mxu0
      %v3859 = vadd.f32 0.0, %v3858
      %v3860 = vpop.f32.mrf.mxu0
      %v3861 = vpop.f32.mrf.mxu0
      %v3862 = vadd.f32 0.0, %v3861
      %v3863 = vpop.f32.mrf.mxu0
      %3864 = vmatprep.mubr.bf16.mxu0 %v3681
      %3865 = vmatmul.mubr.bf16.gmra.mxu0 %v3680
      %v3866 = vpop.f32.mrf.mxu0
      %v3867 = vadd.f32 0.0, %v3866
      %v3868 = vpop.f32.mrf.mxu0
      %v3869 = vpop.f32.mrf.mxu0
      %v3870 = vadd.f32 0.0, %v3869
      %v3871 = vpop.f32.mrf.mxu0
      %3872 = vmatprep.mubr.bf16.mxu0 %v3683
      %3873 = vmatmul.mubr.bf16.gmra.mxu0 %v3682
      %v3874 = vpop.f32.mrf.mxu0
      %v3875 = vadd.f32 0.0, %v3874
      %v3876 = vpop.f32.mrf.mxu0
      %v3877 = vpop.f32.mrf.mxu0
      %v3878 = vadd.f32 0.0, %v3877
      %v3879 = vpop.f32.mrf.mxu0
      %3880 = vmatprep.mubr.bf16.mxu0 %v3685
      %3881 = vmatmul.mubr.bf16.gmra.mxu0 %v3684
      %v3882 = vpop.f32.mrf.mxu0
      %v3883 = vadd.f32 0.0, %v3882
      %v3884 = vpop.f32.mrf.mxu0
      %v3885 = vpop.f32.mrf.mxu0
      %v3886 = vadd.f32 0.0, %v3885
      %v3887 = vpop.f32.mrf.mxu0
      %3888 = vmatprep.mubr.bf16.mxu0 %v3687
      %3889 = vmatmul.mubr.bf16.gmra.mxu0 %v3686
      %v3890 = vpop.f32.mrf.mxu0
      %v3891 = vadd.f32 0.0, %v3890
      %v3892 = vpop.f32.mrf.mxu0
      %v3893 = vpop.f32.mrf.mxu0
      %v3894 = vadd.f32 0.0, %v3893
      %v3895 = vpop.f32.mrf.mxu0
      %3896 = vdwg.mxu0
      %v3897 = vrcp.pop %v3562
      %v3898 = vrcp.pop %v3565
      %v3899 = vrcp.pop %v3568
      %v3900 = vrcp.pop %v3571
      %v3901 = vrcp.pop %v3574
      %v3902 = vrcp.pop %v3577
      %v3903 = vrcp.pop %v3580
      %v3904 = vrcp.pop %v3583
      %v3905 = vrcp.pop %v3586
      %v3906 = vrcp.pop %v3589
      %v3907 = vrcp.pop %v3592
      %v3908 = vrcp.pop %v3595
      %v3909 = vrcp.pop %v3598
      %v3910 = vrcp.pop %v3601
      %v3911 = vrcp.pop %v3604
      %v3912 = vrcp.pop %v3607
      %v3913 = vrcp.pop %v3610
      %v3914 = vrcp.pop %v3613
      %v3915 = vrcp.pop %v3616
      %v3916 = vrcp.pop %v3619
      %v3917 = vrcp.pop %v3622
      %v3918 = vrcp.pop %v3625
      %v3919 = vrcp.pop %v3628
      %v3920 = vrcp.pop %v3631
      %v3921 = vrcp.pop %v3634
      %v3922 = vrcp.pop %v3637
      %v3923 = vrcp.pop %v3640
      %v3924 = vrcp.pop %v3643
      %v3925 = vrcp.pop %v3646
      %v3926 = vrcp.pop %v3649
      %v3927 = vrcp.pop %v3652
      %v3928 = vrcp.pop %v3655
      %v3929 = vmul.f32 %v3771, %v3897
      %v3930 = vmul.f32 %v3774, %v3898
      %v3931 = vmul.f32 %v3779, %v3899
      %v3932 = vmul.f32 %v3782, %v3900
      %v3933 = vmul.f32 %v3787, %v3901
      %v3934 = vmul.f32 %v3790, %v3902
      %v3935 = vmul.f32 %v3795, %v3903
      %v3936 = vmul.f32 %v3798, %v3904
      %v3937 = vmul.f32 %v3803, %v3905
      %v3938 = vmul.f32 %v3806, %v3906
      %v3939 = vmul.f32 %v3811, %v3907
      %v3940 = vmul.f32 %v3814, %v3908
      %v3941 = vmul.f32 %v3819, %v3909
      %v3942 = vmul.f32 %v3822, %v3910
      %v3943 = vmul.f32 %v3827, %v3911
      %v3944 = vmul.f32 %v3830, %v3912
      %v3945 = vmul.f32 %v3835, %v3913
      %v3946 = vmul.f32 %v3838, %v3914
      %v3947 = vmul.f32 %v3843, %v3915
      %v3948 = vmul.f32 %v3846, %v3916
      %v3949 = vmul.f32 %v3851, %v3917
      %v3950 = vmul.f32 %v3854, %v3918
      %v3951 = vmul.f32 %v3859, %v3919
      %v3952 = vmul.f32 %v3862, %v3920
      %v3953 = vmul.f32 %v3867, %v3921
      %v3954 = vmul.f32 %v3870, %v3922
      %v3955 = vmul.f32 %v3875, %v3923
      %v3956 = vmul.f32 %v3878, %v3924
      %v3957 = vmul.f32 %v3883, %v3925
      %v3958 = vmul.f32 %v3886, %v3926
      %v3959 = vmul.f32 %v3891, %v3927
      %v3960 = vmul.f32 %v3894, %v3928
      %3993 = vrot.lane.b32.xlu0 %v3929, 64
      %v3994 = vpop.permute.xlu0 %3993
      %3995 = vrot.lane.b32.xlu0 %v3930, 64
      %v3996 = vpop.permute.xlu0 %3995
      %3997 = vrot.lane.b32.xlu0 %v3931, 64
      %v3998 = vpop.permute.xlu0 %3997
      %3999 = vrot.lane.b32.xlu0 %v3932, 64
      %v4000 = vpop.permute.xlu0 %3999
      %4001 = vrot.lane.b32.xlu0 %v3933, 64
      %v4002 = vpop.permute.xlu0 %4001
      %4003 = vrot.lane.b32.xlu0 %v3934, 64
      %v4004 = vpop.permute.xlu0 %4003
      %4005 = vrot.lane.b32.xlu0 %v3935, 64
      %v4006 = vpop.permute.xlu0 %4005
      %4007 = vrot.lane.b32.xlu0 %v3936, 64
      %v4008 = vpop.permute.xlu0 %4007
      %4009 = vrot.lane.b32.xlu0 %v3937, 64
      %v4010 = vpop.permute.xlu0 %4009
      %4011 = vrot.lane.b32.xlu0 %v3938, 64
      %v4012 = vpop.permute.xlu0 %4011
      %4013 = vrot.lane.b32.xlu0 %v3939, 64
      %v4014 = vpop.permute.xlu0 %4013
      %4015 = vrot.lane.b32.xlu0 %v3940, 64
      %v4016 = vpop.permute.xlu0 %4015
      %4017 = vrot.lane.b32.xlu0 %v3941, 64
      %v4018 = vpop.permute.xlu0 %4017
      %4019 = vrot.lane.b32.xlu0 %v3942, 64
      %v4020 = vpop.permute.xlu0 %4019
      %4021 = vrot.lane.b32.xlu0 %v3943, 64
      %v4022 = vpop.permute.xlu0 %4021
      %4023 = vrot.lane.b32.xlu0 %v3944, 64
      %v4024 = vpop.permute.xlu0 %4023
      %4025 = vrot.lane.b32.xlu0 %v3945, 64
      %v4026 = vpop.permute.xlu0 %4025
      %4027 = vrot.lane.b32.xlu0 %v3946, 64
      %v4028 = vpop.permute.xlu0 %4027
      %4029 = vrot.lane.b32.xlu0 %v3947, 64
      %v4030 = vpop.permute.xlu0 %4029
      %4031 = vrot.lane.b32.xlu0 %v3948, 64
      %v4032 = vpop.permute.xlu0 %4031
      %4033 = vrot.lane.b32.xlu0 %v3949, 64
      %v4034 = vpop.permute.xlu0 %4033
      %4035 = vrot.lane.b32.xlu0 %v3950, 64
      %v4036 = vpop.permute.xlu0 %4035
      %4037 = vrot.lane.b32.xlu0 %v3951, 64
      %v4038 = vpop.permute.xlu0 %4037
      %4039 = vrot.lane.b32.xlu0 %v3952, 64
      %v4040 = vpop.permute.xlu0 %4039
      %4041 = vrot.lane.b32.xlu0 %v3953, 64
      %v4042 = vpop.permute.xlu0 %4041
      %4043 = vrot.lane.b32.xlu0 %v3954, 64
      %v4044 = vpop.permute.xlu0 %4043
      %4045 = vrot.lane.b32.xlu0 %v3955, 64
      %v4046 = vpop.permute.xlu0 %4045
      %4047 = vrot.lane.b32.xlu0 %v3956, 64
      %v4048 = vpop.permute.xlu0 %4047
      %4049 = vrot.lane.b32.xlu0 %v3957, 64
      %v4050 = vpop.permute.xlu0 %4049
      %4051 = vrot.lane.b32.xlu0 %v3958, 64
      %v4052 = vpop.permute.xlu0 %4051
      %4053 = vrot.lane.b32.xlu0 %v3959, 64
      %v4054 = vpop.permute.xlu0 %4053
      %4055 = vrot.lane.b32.xlu0 %v3960, 64
      %v4056 = vpop.permute.xlu0 %4055
      %vm4089 = vcmask 785920
      %4090 = vst.msk [vmem:[#allocation2] sm:$0xff] %vm4089, %v3994
      %4091 = vst.msk [vmem:[#allocation2 + $0x8] sm:$0xff] %vm4089, %v3996
      %4092 = vst.msk [vmem:[#allocation2 + $0x10] sm:$0xff] %vm4089, %v3998
      %4093 = vst.msk [vmem:[#allocation2 + $0x18] sm:$0xff] %vm4089, %v4000
      %4094 = vst.msk [vmem:[#allocation2 + $0x20] sm:$0xff] %vm4089, %v4002
      %4095 = vst.msk [vmem:[#allocation2 + $0x28] sm:$0xff] %vm4089, %v4004
      %4096 = vst.msk [vmem:[#allocation2 + $0x30] sm:$0xff] %vm4089, %v4006
      %4097 = vst.msk [vmem:[#allocation2 + $0x38] sm:$0xff] %vm4089, %v4008
      %4098 = vst.msk [vmem:[#allocation2 + $0x40] sm:$0xff] %vm4089, %v4010
      %4099 = vst.msk [vmem:[#allocation2 + $0x48] sm:$0xff] %vm4089, %v4012
      %4100 = vst.msk [vmem:[#allocation2 + $0x50] sm:$0xff] %vm4089, %v4014
      %4101 = vst.msk [vmem:[#allocation2 + $0x58] sm:$0xff] %vm4089, %v4016
      %4102 = vst.msk [vmem:[#allocation2 + $0x60] sm:$0xff] %vm4089, %v4018
      %4103 = vst.msk [vmem:[#allocation2 + $0x68] sm:$0xff] %vm4089, %v4020
      %4104 = vst.msk [vmem:[#allocation2 + $0x70] sm:$0xff] %vm4089, %v4022
      %4105 = vst.msk [vmem:[#allocation2 + $0x78] sm:$0xff] %vm4089, %v4024
      %4106 = vst.msk [vmem:[#allocation2 + $0x80] sm:$0xff] %vm4089, %v4026
      %4107 = vst.msk [vmem:[#allocation2 + $0x88] sm:$0xff] %vm4089, %v4028
      %4108 = vst.msk [vmem:[#allocation2 + $0x90] sm:$0xff] %vm4089, %v4030
      %4109 = vst.msk [vmem:[#allocation2 + $0x98] sm:$0xff] %vm4089, %v4032
      %4110 = vst.msk [vmem:[#allocation2 + $0xa0] sm:$0xff] %vm4089, %v4034
      %4111 = vst.msk [vmem:[#allocation2 + $0xa8] sm:$0xff] %vm4089, %v4036
      %4112 = vst.msk [vmem:[#allocation2 + $0xb0] sm:$0xff] %vm4089, %v4038
      %4113 = vst.msk [vmem:[#allocation2 + $0xb8] sm:$0xff] %vm4089, %v4040
      %4114 = vst.msk [vmem:[#allocation2 + $0xc0] sm:$0xff] %vm4089, %v4042
      %4115 = vst.msk [vmem:[#allocation2 + $0xc8] sm:$0xff] %vm4089, %v4044
      %4116 = vst.msk [vmem:[#allocation2 + $0xd0] sm:$0xff] %vm4089, %v4046
      %4117 = vst.msk [vmem:[#allocation2 + $0xd8] sm:$0xff] %vm4089, %v4048
      %4118 = vst.msk [vmem:[#allocation2 + $0xe0] sm:$0xff] %vm4089, %v4050
      %4119 = vst.msk [vmem:[#allocation2 + $0xe8] sm:$0xff] %vm4089, %v4052
      %4120 = vst.msk [vmem:[#allocation2 + $0xf0] sm:$0xff] %vm4089, %v4054
      %4121 = vst.msk [vmem:[#allocation2 + $0xf8] sm:$0xff] %vm4089, %v4056
      %4122 = vrot.lane.b32.xlu0 %v817, 32
      %v4123 = vpop.permute.xlu0 %4122
      %4124 = vrot.lane.b32.xlu0 %v818, 32
      %v4125 = vpop.permute.xlu0 %4124
      %4126 = vrot.lane.b32.xlu0 %v819, 32
      %v4127 = vpop.permute.xlu0 %4126
      %4128 = vrot.lane.b32.xlu0 %v820, 32
      %v4129 = vpop.permute.xlu0 %4128
      %4130 = vrot.lane.b32.xlu0 %v821, 32
      %v4131 = vpop.permute.xlu0 %4130
      %4132 = vrot.lane.b32.xlu0 %v822, 32
      %v4133 = vpop.permute.xlu0 %4132
      %4134 = vrot.lane.b32.xlu0 %v823, 32
      %v4135 = vpop.permute.xlu0 %4134
      %4136 = vrot.lane.b32.xlu0 %v824, 32
      %v4137 = vpop.permute.xlu0 %4136
      %4138 = vrot.lane.b32.xlu0 %v825, 32
      %v4139 = vpop.permute.xlu0 %4138
      %4140 = vrot.lane.b32.xlu0 %v826, 32
      %v4141 = vpop.permute.xlu0 %4140
      %4142 = vrot.lane.b32.xlu0 %v827, 32
      %v4143 = vpop.permute.xlu0 %4142
      %4144 = vrot.lane.b32.xlu0 %v828, 32
      %v4145 = vpop.permute.xlu0 %4144
      %4146 = vrot.lane.b32.xlu0 %v829, 32
      %v4147 = vpop.permute.xlu0 %4146
      %4148 = vrot.lane.b32.xlu0 %v830, 32
      %v4149 = vpop.permute.xlu0 %4148
      %4150 = vrot.lane.b32.xlu0 %v831, 32
      %v4151 = vpop.permute.xlu0 %4150
      %4152 = vrot.lane.b32.xlu0 %v832, 32
      %v4153 = vpop.permute.xlu0 %4152
      %v4155 = vsel %vm929, %v4123, 0
      %v4158 = vsel %vm929, %v4125, 0
      %v4161 = vsel %vm929, %v4127, 0
      %v4164 = vsel %vm929, %v4129, 0
      %v4167 = vsel %vm929, %v4131, 0
      %v4170 = vsel %vm929, %v4133, 0
      %v4173 = vsel %vm929, %v4135, 0
      %v4176 = vsel %vm929, %v4137, 0
      %v4179 = vsel %vm929, %v4139, 0
      %v4182 = vsel %vm929, %v4141, 0
      %v4185 = vsel %vm929, %v4143, 0
      %v4188 = vsel %vm929, %v4145, 0
      %v4191 = vsel %vm929, %v4147, 0
      %v4194 = vsel %vm929, %v4149, 0
      %v4197 = vsel %vm929, %v4151, 0
      %v4200 = vsel %vm929, %v4153, 0
      %4202 = vmatprep.subr.bf16.mxu0 0
      %4203 = vmatpush1.bf16.msra.mxu0 0
      %4204 = vmatprep.subr.bf16.mxu0 0
      %4205 = vmatpush1.bf16.msra.mxu0 0
      %4206 = vmatprep.subr.bf16.mxu0 0
      %4207 = vmatpush1.bf16.msra.mxu0 0
      %4208 = vmatprep.subr.bf16.mxu0 0
      %4209 = vmatpush1.bf16.msra.mxu0 0
      %4210 = vmatprep.subr.bf16.mxu0 0
      %4211 = vmatpush1.bf16.msra.mxu0 0
      %4212 = vmatprep.subr.bf16.mxu0 0
      %4213 = vmatpush1.bf16.msra.mxu0 0
      %4214 = vmatprep.subr.bf16.mxu0 %v928
      %4215 = vmatpush1.bf16.msra.mxu0 %v927
      %4216 = vmatprep.subr.bf16.mxu0 %v926
      %4217 = vmatpush1.bf16.msra.mxu0 %v925
      %4218 = vmatprep.subr.bf16.mxu0 0
      %4219 = vmatpush2.bf16.msra.mxu0 0
      %4220 = vmatprep.subr.bf16.mxu0 0
      %4221 = vmatpush2.bf16.msra.mxu0 0
      %4222 = vmatprep.subr.bf16.mxu0 0
      %4223 = vmatpush2.bf16.msra.mxu0 0
      %4224 = vmatprep.subr.bf16.mxu0 0
      %4225 = vmatpush2.bf16.msra.mxu0 0
      %4226 = vmatprep.subr.bf16.mxu0 0
      %4227 = vmatpush2.bf16.msra.mxu0 0
      %4228 = vmatprep.subr.bf16.mxu0 0
      %4229 = vmatpush2.bf16.msra.mxu0 0
      %4230 = vmatprep.subr.bf16.mxu0 0
      %4231 = vmatpush2.bf16.msra.mxu0 0
      %4232 = vmatprep.subr.bf16.mxu0 0
      %4233 = vmatpush2.bf16.msra.mxu0 0
      %4234 = vmatprep.mubr.bf16.mxu0 0
      %4235 = vmatmul.mubr.bf16.gmra.mxu0 %v4155
      %v4236 = vpop.f32.mrf.mxu0
      %v4237 = vadd.f32 0.0, %v4236
      %v4238 = vpop.f32.mrf.mxu0
      %v4239 = vadd.f32 0.0, %v4238
      %v4240 = vpop.f32.mrf.mxu0
      %v4241 = vadd.f32 0.0, %v4240
      %v4242 = vpop.f32.mrf.mxu0
      %v4243 = vadd.f32 0.0, %v4242
      %4244 = vmatprep.mubr.bf16.mxu0 0
      %4245 = vmatmul.mubr.bf16.gmra.mxu0 %v4158
      %v4246 = vpop.f32.mrf.mxu0
      %v4247 = vadd.f32 0.0, %v4246
      %v4248 = vpop.f32.mrf.mxu0
      %v4249 = vadd.f32 0.0, %v4248
      %v4250 = vpop.f32.mrf.mxu0
      %v4251 = vadd.f32 0.0, %v4250
      %v4252 = vpop.f32.mrf.mxu0
      %v4253 = vadd.f32 0.0, %v4252
      %4254 = vmatprep.mubr.bf16.mxu0 0
      %4255 = vmatmul.mubr.bf16.gmra.mxu0 %v4161
      %v4256 = vpop.f32.mrf.mxu0
      %v4257 = vadd.f32 0.0, %v4256
      %v4258 = vpop.f32.mrf.mxu0
      %v4259 = vadd.f32 0.0, %v4258
      %v4260 = vpop.f32.mrf.mxu0
      %v4261 = vadd.f32 0.0, %v4260
      %v4262 = vpop.f32.mrf.mxu0
      %v4263 = vadd.f32 0.0, %v4262
      %4264 = vmatprep.mubr.bf16.mxu0 0
      %4265 = vmatmul.mubr.bf16.gmra.mxu0 %v4164
      %v4266 = vpop.f32.mrf.mxu0
      %v4267 = vadd.f32 0.0, %v4266
      %v4268 = vpop.f32.mrf.mxu0
      %v4269 = vadd.f32 0.0, %v4268
      %v4270 = vpop.f32.mrf.mxu0
      %v4271 = vadd.f32 0.0, %v4270
      %v4272 = vpop.f32.mrf.mxu0
      %v4273 = vadd.f32 0.0, %v4272
      %4274 = vmatprep.mubr.bf16.mxu0 0
      %4275 = vmatmul.mubr.bf16.gmra.mxu0 %v4167
      %v4276 = vpop.f32.mrf.mxu0
      %v4277 = vadd.f32 0.0, %v4276
      %v4278 = vpop.f32.mrf.mxu0
      %v4279 = vadd.f32 0.0, %v4278
      %v4280 = vpop.f32.mrf.mxu0
      %v4281 = vadd.f32 0.0, %v4280
      %v4282 = vpop.f32.mrf.mxu0
      %v4283 = vadd.f32 0.0, %v4282
      %4284 = vmatprep.mubr.bf16.mxu0 0
      %4285 = vmatmul.mubr.bf16.gmra.mxu0 %v4170
      %v4286 = vpop.f32.mrf.mxu0
      %v4287 = vadd.f32 0.0, %v4286
      %v4288 = vpop.f32.mrf.mxu0
      %v4289 = vadd.f32 0.0, %v4288
      %v4290 = vpop.f32.mrf.mxu0
      %v4291 = vadd.f32 0.0, %v4290
      %v4292 = vpop.f32.mrf.mxu0
      %v4293 = vadd.f32 0.0, %v4292
      %4294 = vmatprep.mubr.bf16.mxu0 0
      %4295 = vmatmul.mubr.bf16.gmra.mxu0 %v4173
      %v4296 = vpop.f32.mrf.mxu0
      %v4297 = vadd.f32 0.0, %v4296
      %v4298 = vpop.f32.mrf.mxu0
      %v4299 = vadd.f32 0.0, %v4298
      %v4300 = vpop.f32.mrf.mxu0
      %v4301 = vadd.f32 0.0, %v4300
      %v4302 = vpop.f32.mrf.mxu0
      %v4303 = vadd.f32 0.0, %v4302
      %4304 = vmatprep.mubr.bf16.mxu0 0
      %4305 = vmatmul.mubr.bf16.gmra.mxu0 %v4176
      %v4306 = vpop.f32.mrf.mxu0
      %v4307 = vadd.f32 0.0, %v4306
      %v4308 = vpop.f32.mrf.mxu0
      %v4309 = vadd.f32 0.0, %v4308
      %v4310 = vpop.f32.mrf.mxu0
      %v4311 = vadd.f32 0.0, %v4310
      %v4312 = vpop.f32.mrf.mxu0
      %v4313 = vadd.f32 0.0, %v4312
      %4314 = vmatprep.mubr.bf16.mxu0 0
      %4315 = vmatmul.mubr.bf16.gmra.mxu0 %v4179
      %v4316 = vpop.f32.mrf.mxu0
      %v4317 = vadd.f32 0.0, %v4316
      %v4318 = vpop.f32.mrf.mxu0
      %v4319 = vadd.f32 0.0, %v4318
      %v4320 = vpop.f32.mrf.mxu0
      %v4321 = vadd.f32 0.0, %v4320
      %v4322 = vpop.f32.mrf.mxu0
      %v4323 = vadd.f32 0.0, %v4322
      %4324 = vmatprep.mubr.bf16.mxu0 0
      %4325 = vmatmul.mubr.bf16.gmra.mxu0 %v4182
      %v4326 = vpop.f32.mrf.mxu0
      %v4327 = vadd.f32 0.0, %v4326
      %v4328 = vpop.f32.mrf.mxu0
      %v4329 = vadd.f32 0.0, %v4328
      %v4330 = vpop.f32.mrf.mxu0
      %v4331 = vadd.f32 0.0, %v4330
      %v4332 = vpop.f32.mrf.mxu0
      %v4333 = vadd.f32 0.0, %v4332
      %4334 = vmatprep.mubr.bf16.mxu0 0
      %4335 = vmatmul.mubr.bf16.gmra.mxu0 %v4185
      %v4336 = vpop.f32.mrf.mxu0
      %v4337 = vadd.f32 0.0, %v4336
      %v4338 = vpop.f32.mrf.mxu0
      %v4339 = vadd.f32 0.0, %v4338
      %v4340 = vpop.f32.mrf.mxu0
      %v4341 = vadd.f32 0.0, %v4340
      %v4342 = vpop.f32.mrf.mxu0
      %v4343 = vadd.f32 0.0, %v4342
      %4344 = vmatprep.mubr.bf16.mxu0 0
      %4345 = vmatmul.mubr.bf16.gmra.mxu0 %v4188
      %v4346 = vpop.f32.mrf.mxu0
      %v4347 = vadd.f32 0.0, %v4346
      %v4348 = vpop.f32.mrf.mxu0
      %v4349 = vadd.f32 0.0, %v4348
      %v4350 = vpop.f32.mrf.mxu0
      %v4351 = vadd.f32 0.0, %v4350
      %v4352 = vpop.f32.mrf.mxu0
      %v4353 = vadd.f32 0.0, %v4352
      %4354 = vmatprep.mubr.bf16.mxu0 0
      %4355 = vmatmul.mubr.bf16.gmra.mxu0 %v4191
      %v4356 = vpop.f32.mrf.mxu0
      %v4357 = vadd.f32 0.0, %v4356
      %v4358 = vpop.f32.mrf.mxu0
      %v4359 = vadd.f32 0.0, %v4358
      %v4360 = vpop.f32.mrf.mxu0
      %v4361 = vadd.f32 0.0, %v4360
      %v4362 = vpop.f32.mrf.mxu0
      %v4363 = vadd.f32 0.0, %v4362
      %4364 = vmatprep.mubr.bf16.mxu0 0
      %4365 = vmatmul.mubr.bf16.gmra.mxu0 %v4194
      %v4366 = vpop.f32.mrf.mxu0
      %v4367 = vadd.f32 0.0, %v4366
      %v4368 = vpop.f32.mrf.mxu0
      %v4369 = vadd.f32 0.0, %v4368
      %v4370 = vpop.f32.mrf.mxu0
      %v4371 = vadd.f32 0.0, %v4370
      %v4372 = vpop.f32.mrf.mxu0
      %v4373 = vadd.f32 0.0, %v4372
      %4374 = vmatprep.mubr.bf16.mxu0 0
      %4375 = vmatmul.mubr.bf16.gmra.mxu0 %v4197
      %v4376 = vpop.f32.mrf.mxu0
      %v4377 = vadd.f32 0.0, %v4376
      %v4378 = vpop.f32.mrf.mxu0
      %v4379 = vadd.f32 0.0, %v4378
      %v4380 = vpop.f32.mrf.mxu0
      %v4381 = vadd.f32 0.0, %v4380
      %v4382 = vpop.f32.mrf.mxu0
      %v4383 = vadd.f32 0.0, %v4382
      %4384 = vmatprep.mubr.bf16.mxu0 0
      %4385 = vmatmul.mubr.bf16.gmra.mxu0 %v4200
      %v4386 = vpop.f32.mrf.mxu0
      %v4387 = vadd.f32 0.0, %v4386
      %v4388 = vpop.f32.mrf.mxu0
      %v4389 = vadd.f32 0.0, %v4388
      %v4390 = vpop.f32.mrf.mxu0
      %v4391 = vadd.f32 0.0, %v4390
      %v4392 = vpop.f32.mrf.mxu0
      %v4393 = vadd.f32 0.0, %v4392
      %4394 = vdwg.mxu0
      %v4395 = vmax.f32 %v4237, %v4239
      %4396 = vmax.xlane.f32.xlu0 %v4395
      %v4397 = vpop.xlane.xlu0 %4396
      %v4398 = vmax.f32 %v4241, %v4243
      %4399 = vmax.xlane.f32.xlu0 %v4398
      %v4400 = vpop.xlane.xlu0 %4399
      %v4401 = vmax.f32 %v4247, %v4249
      %4402 = vmax.xlane.f32.xlu0 %v4401
      %v4403 = vpop.xlane.xlu0 %4402
      %v4404 = vmax.f32 %v4251, %v4253
      %4405 = vmax.xlane.f32.xlu0 %v4404
      %v4406 = vpop.xlane.xlu0 %4405
      %v4407 = vmax.f32 %v4257, %v4259
      %4408 = vmax.xlane.f32.xlu0 %v4407
      %v4409 = vpop.xlane.xlu0 %4408
      %v4410 = vmax.f32 %v4261, %v4263
      %4411 = vmax.xlane.f32.xlu0 %v4410
      %v4412 = vpop.xlane.xlu0 %4411
      %v4413 = vmax.f32 %v4267, %v4269
      %4414 = vmax.xlane.f32.xlu0 %v4413
      %v4415 = vpop.xlane.xlu0 %4414
      %v4416 = vmax.f32 %v4271, %v4273
      %4417 = vmax.xlane.f32.xlu0 %v4416
      %v4418 = vpop.xlane.xlu0 %4417
      %v4419 = vmax.f32 %v4277, %v4279
      %4420 = vmax.xlane.f32.xlu0 %v4419
      %v4421 = vpop.xlane.xlu0 %4420
      %v4422 = vmax.f32 %v4281, %v4283
      %4423 = vmax.xlane.f32.xlu0 %v4422
      %v4424 = vpop.xlane.xlu0 %4423
      %v4425 = vmax.f32 %v4287, %v4289
      %4426 = vmax.xlane.f32.xlu0 %v4425
      %v4427 = vpop.xlane.xlu0 %4426
      %v4428 = vmax.f32 %v4291, %v4293
      %4429 = vmax.xlane.f32.xlu0 %v4428
      %v4430 = vpop.xlane.xlu0 %4429
      %v4431 = vmax.f32 %v4297, %v4299
      %4432 = vmax.xlane.f32.xlu0 %v4431
      %v4433 = vpop.xlane.xlu0 %4432
      %v4434 = vmax.f32 %v4301, %v4303
      %4435 = vmax.xlane.f32.xlu0 %v4434
      %v4436 = vpop.xlane.xlu0 %4435
      %v4437 = vmax.f32 %v4307, %v4309
      %4438 = vmax.xlane.f32.xlu0 %v4437
      %v4439 = vpop.xlane.xlu0 %4438
      %v4440 = vmax.f32 %v4311, %v4313
      %4441 = vmax.xlane.f32.xlu0 %v4440
      %v4442 = vpop.xlane.xlu0 %4441
      %v4443 = vmax.f32 %v4317, %v4319
      %4444 = vmax.xlane.f32.xlu0 %v4443
      %v4445 = vpop.xlane.xlu0 %4444
      %v4446 = vmax.f32 %v4321, %v4323
      %4447 = vmax.xlane.f32.xlu0 %v4446
      %v4448 = vpop.xlane.xlu0 %4447
      %v4449 = vmax.f32 %v4327, %v4329
      %4450 = vmax.xlane.f32.xlu0 %v4449
      %v4451 = vpop.xlane.xlu0 %4450
      %v4452 = vmax.f32 %v4331, %v4333
      %4453 = vmax.xlane.f32.xlu0 %v4452
      %v4454 = vpop.xlane.xlu0 %4453
      %v4455 = vmax.f32 %v4337, %v4339
      %4456 = vmax.xlane.f32.xlu0 %v4455
      %v4457 = vpop.xlane.xlu0 %4456
      %v4458 = vmax.f32 %v4341, %v4343
      %4459 = vmax.xlane.f32.xlu0 %v4458
      %v4460 = vpop.xlane.xlu0 %4459
      %v4461 = vmax.f32 %v4347, %v4349
      %4462 = vmax.xlane.f32.xlu0 %v4461
      %v4463 = vpop.xlane.xlu0 %4462
      %v4464 = vmax.f32 %v4351, %v4353
      %4465 = vmax.xlane.f32.xlu0 %v4464
      %v4466 = vpop.xlane.xlu0 %4465
      %v4467 = vmax.f32 %v4357, %v4359
      %4468 = vmax.xlane.f32.xlu0 %v4467
      %v4469 = vpop.xlane.xlu0 %4468
      %v4470 = vmax.f32 %v4361, %v4363
      %4471 = vmax.xlane.f32.xlu0 %v4470
      %v4472 = vpop.xlane.xlu0 %4471
      %v4473 = vmax.f32 %v4367, %v4369
      %4474 = vmax.xlane.f32.xlu0 %v4473
      %v4475 = vpop.xlane.xlu0 %4474
      %v4476 = vmax.f32 %v4371, %v4373
      %4477 = vmax.xlane.f32.xlu0 %v4476
      %v4478 = vpop.xlane.xlu0 %4477
      %v4479 = vmax.f32 %v4377, %v4379
      %4480 = vmax.xlane.f32.xlu0 %v4479
      %v4481 = vpop.xlane.xlu0 %4480
      %v4482 = vmax.f32 %v4381, %v4383
      %4483 = vmax.xlane.f32.xlu0 %v4482
      %v4484 = vpop.xlane.xlu0 %4483
      %v4485 = vmax.f32 %v4387, %v4389
      %4486 = vmax.xlane.f32.xlu0 %v4485
      %v4487 = vpop.xlane.xlu0 %4486
      %v4488 = vmax.f32 %v4391, %v4393
      %4489 = vmax.xlane.f32.xlu0 %v4488
      %v4490 = vpop.xlane.xlu0 %4489
      %v4491 = vsub.f32 %v4237, %v4397
      %v4492 = vsub.f32 %v4239, %v4397
      %v4493 = vsub.f32 %v4241, %v4400
      %v4494 = vsub.f32 %v4243, %v4400
      %v4495 = vsub.f32 %v4247, %v4403
      %v4496 = vsub.f32 %v4249, %v4403
      %v4497 = vsub.f32 %v4251, %v4406
      %v4498 = vsub.f32 %v4253, %v4406
      %v4499 = vsub.f32 %v4257, %v4409
      %v4500 = vsub.f32 %v4259, %v4409
      %v4501 = vsub.f32 %v4261, %v4412
      %v4502 = vsub.f32 %v4263, %v4412
      %v4503 = vsub.f32 %v4267, %v4415
      %v4504 = vsub.f32 %v4269, %v4415
      %v4505 = vsub.f32 %v4271, %v4418
      %v4506 = vsub.f32 %v4273, %v4418
      %v4507 = vsub.f32 %v4277, %v4421
      %v4508 = vsub.f32 %v4279, %v4421
      %v4509 = vsub.f32 %v4281, %v4424
      %v4510 = vsub.f32 %v4283, %v4424
      %v4511 = vsub.f32 %v4287, %v4427
      %v4512 = vsub.f32 %v4289, %v4427
      %v4513 = vsub.f32 %v4291, %v4430
      %v4514 = vsub.f32 %v4293, %v4430
      %v4515 = vsub.f32 %v4297, %v4433
      %v4516 = vsub.f32 %v4299, %v4433
      %v4517 = vsub.f32 %v4301, %v4436
      %v4518 = vsub.f32 %v4303, %v4436
      %v4519 = vsub.f32 %v4307, %v4439
      %v4520 = vsub.f32 %v4309, %v4439
      %v4521 = vsub.f32 %v4311, %v4442
      %v4522 = vsub.f32 %v4313, %v4442
      %v4523 = vsub.f32 %v4317, %v4445
      %v4524 = vsub.f32 %v4319, %v4445
      %v4525 = vsub.f32 %v4321, %v4448
      %v4526 = vsub.f32 %v4323, %v4448
      %v4527 = vsub.f32 %v4327, %v4451
      %v4528 = vsub.f32 %v4329, %v4451
      %v4529 = vsub.f32 %v4331, %v4454
      %v4530 = vsub.f32 %v4333, %v4454
      %v4531 = vsub.f32 %v4337, %v4457
      %v4532 = vsub.f32 %v4339, %v4457
      %v4533 = vsub.f32 %v4341, %v4460
      %v4534 = vsub.f32 %v4343, %v4460
      %v4535 = vsub.f32 %v4347, %v4463
      %v4536 = vsub.f32 %v4349, %v4463
      %v4537 = vsub.f32 %v4351, %v4466
      %v4538 = vsub.f32 %v4353, %v4466
      %v4539 = vsub.f32 %v4357, %v4469
      %v4540 = vsub.f32 %v4359, %v4469
      %v4541 = vsub.f32 %v4361, %v4472
      %v4542 = vsub.f32 %v4363, %v4472
      %v4543 = vsub.f32 %v4367, %v4475
      %v4544 = vsub.f32 %v4369, %v4475
      %v4545 = vsub.f32 %v4371, %v4478
      %v4546 = vsub.f32 %v4373, %v4478
      %v4547 = vsub.f32 %v4377, %v4481
      %v4548 = vsub.f32 %v4379, %v4481
      %v4549 = vsub.f32 %v4381, %v4484
      %v4550 = vsub.f32 %v4383, %v4484
      %v4551 = vsub.f32 %v4387, %v4487
      %v4552 = vsub.f32 %v4389, %v4487
      %v4553 = vsub.f32 %v4391, %v4490
      %v4554 = vsub.f32 %v4393, %v4490
      %v4555 = vmul.f32 %v4491, 1.442695
      %v4556 = vpow.pop %v4555
      %v4557 = vmul.f32 %v4492, 1.442695
      %v4558 = vpow.pop %v4557
      %v4559 = vmul.f32 %v4493, 1.442695
      %v4560 = vpow.pop %v4559
      %v4561 = vmul.f32 %v4494, 1.442695
      %v4562 = vpow.pop %v4561
      %v4563 = vmul.f32 %v4495, 1.442695
      %v4564 = vpow.pop %v4563
      %v4565 = vmul.f32 %v4496, 1.442695
      %v4566 = vpow.pop %v4565
      %v4567 = vmul.f32 %v4497, 1.442695
      %v4568 = vpow.pop %v4567
      %v4569 = vmul.f32 %v4498, 1.442695
      %v4570 = vpow.pop %v4569
      %v4571 = vmul.f32 %v4499, 1.442695
      %v4572 = vpow.pop %v4571
      %v4573 = vmul.f32 %v4500, 1.442695
      %v4574 = vpow.pop %v4573
      %v4575 = vmul.f32 %v4501, 1.442695
      %v4576 = vpow.pop %v4575
      %v4577 = vmul.f32 %v4502, 1.442695
      %v4578 = vpow.pop %v4577
      %v4579 = vmul.f32 %v4503, 1.442695
      %v4580 = vpow.pop %v4579
      %v4581 = vmul.f32 %v4504, 1.442695
      %v4582 = vpow.pop %v4581
      %v4583 = vmul.f32 %v4505, 1.442695
      %v4584 = vpow.pop %v4583
      %v4585 = vmul.f32 %v4506, 1.442695
      %v4586 = vpow.pop %v4585
      %v4587 = vmul.f32 %v4507, 1.442695
      %v4588 = vpow.pop %v4587
      %v4589 = vmul.f32 %v4508, 1.442695
      %v4590 = vpow.pop %v4589
      %v4591 = vmul.f32 %v4509, 1.442695
      %v4592 = vpow.pop %v4591
      %v4593 = vmul.f32 %v4510, 1.442695
      %v4594 = vpow.pop %v4593
      %v4595 = vmul.f32 %v4511, 1.442695
      %v4596 = vpow.pop %v4595
      %v4597 = vmul.f32 %v4512, 1.442695
      %v4598 = vpow.pop %v4597
      %v4599 = vmul.f32 %v4513, 1.442695
      %v4600 = vpow.pop %v4599
      %v4601 = vmul.f32 %v4514, 1.442695
      %v4602 = vpow.pop %v4601
      %v4603 = vmul.f32 %v4515, 1.442695
      %v4604 = vpow.pop %v4603
      %v4605 = vmul.f32 %v4516, 1.442695
      %v4606 = vpow.pop %v4605
      %v4607 = vmul.f32 %v4517, 1.442695
      %v4608 = vpow.pop %v4607
      %v4609 = vmul.f32 %v4518, 1.442695
      %v4610 = vpow.pop %v4609
      %v4611 = vmul.f32 %v4519, 1.442695
      %v4612 = vpow.pop %v4611
      %v4613 = vmul.f32 %v4520, 1.442695
      %v4614 = vpow.pop %v4613
      %v4615 = vmul.f32 %v4521, 1.442695
      %v4616 = vpow.pop %v4615
      %v4617 = vmul.f32 %v4522, 1.442695
      %v4618 = vpow.pop %v4617
      %v4619 = vmul.f32 %v4523, 1.442695
      %v4620 = vpow.pop %v4619
      %v4621 = vmul.f32 %v4524, 1.442695
      %v4622 = vpow.pop %v4621
      %v4623 = vmul.f32 %v4525, 1.442695
      %v4624 = vpow.pop %v4623
      %v4625 = vmul.f32 %v4526, 1.442695
      %v4626 = vpow.pop %v4625
      %v4627 = vmul.f32 %v4527, 1.442695
      %v4628 = vpow.pop %v4627
      %v4629 = vmul.f32 %v4528, 1.442695
      %v4630 = vpow.pop %v4629
      %v4631 = vmul.f32 %v4529, 1.442695
      %v4632 = vpow.pop %v4631
      %v4633 = vmul.f32 %v4530, 1.442695
      %v4634 = vpow.pop %v4633
      %v4635 = vmul.f32 %v4531, 1.442695
      %v4636 = vpow.pop %v4635
      %v4637 = vmul.f32 %v4532, 1.442695
      %v4638 = vpow.pop %v4637
      %v4639 = vmul.f32 %v4533, 1.442695
      %v4640 = vpow.pop %v4639
      %v4641 = vmul.f32 %v4534, 1.442695
      %v4642 = vpow.pop %v4641
      %v4643 = vmul.f32 %v4535, 1.442695
      %v4644 = vpow.pop %v4643
      %v4645 = vmul.f32 %v4536, 1.442695
      %v4646 = vpow.pop %v4645
      %v4647 = vmul.f32 %v4537, 1.442695
      %v4648 = vpow.pop %v4647
      %v4649 = vmul.f32 %v4538, 1.442695
      %v4650 = vpow.pop %v4649
      %v4651 = vmul.f32 %v4539, 1.442695
      %v4652 = vpow.pop %v4651
      %v4653 = vmul.f32 %v4540, 1.442695
      %v4654 = vpow.pop %v4653
      %v4655 = vmul.f32 %v4541, 1.442695
      %v4656 = vpow.pop %v4655
      %v4657 = vmul.f32 %v4542, 1.442695
      %v4658 = vpow.pop %v4657
      %v4659 = vmul.f32 %v4543, 1.442695
      %v4660 = vpow.pop %v4659
      %v4661 = vmul.f32 %v4544, 1.442695
      %v4662 = vpow.pop %v4661
      %v4663 = vmul.f32 %v4545, 1.442695
      %v4664 = vpow.pop %v4663
      %v4665 = vmul.f32 %v4546, 1.442695
      %v4666 = vpow.pop %v4665
      %v4667 = vmul.f32 %v4547, 1.442695
      %v4668 = vpow.pop %v4667
      %v4669 = vmul.f32 %v4548, 1.442695
      %v4670 = vpow.pop %v4669
      %v4671 = vmul.f32 %v4549, 1.442695
      %v4672 = vpow.pop %v4671
      %v4673 = vmul.f32 %v4550, 1.442695
      %v4674 = vpow.pop %v4673
      %v4675 = vmul.f32 %v4551, 1.442695
      %v4676 = vpow.pop %v4675
      %v4677 = vmul.f32 %v4552, 1.442695
      %v4678 = vpow.pop %v4677
      %v4679 = vmul.f32 %v4553, 1.442695
      %v4680 = vpow.pop %v4679
      %v4681 = vmul.f32 %v4554, 1.442695
      %v4682 = vpow.pop %v4681
      %v4683 = vadd.f32 %v4556, %v4558
      %4684 = vadd.xlane.f32.xlu0 %v4683
      %v4685 = vpop.xlane.xlu0 %4684
      %v4686 = vadd.f32 %v4560, %v4562
      %4687 = vadd.xlane.f32.xlu0 %v4686
      %v4688 = vpop.xlane.xlu0 %4687
      %v4689 = vadd.f32 %v4564, %v4566
      %4690 = vadd.xlane.f32.xlu0 %v4689
      %v4691 = vpop.xlane.xlu0 %4690
      %v4692 = vadd.f32 %v4568, %v4570
      %4693 = vadd.xlane.f32.xlu0 %v4692
      %v4694 = vpop.xlane.xlu0 %4693
      %v4695 = vadd.f32 %v4572, %v4574
      %4696 = vadd.xlane.f32.xlu0 %v4695
      %v4697 = vpop.xlane.xlu0 %4696
      %v4698 = vadd.f32 %v4576, %v4578
      %4699 = vadd.xlane.f32.xlu0 %v4698
      %v4700 = vpop.xlane.xlu0 %4699
      %v4701 = vadd.f32 %v4580, %v4582
      %4702 = vadd.xlane.f32.xlu0 %v4701
      %v4703 = vpop.xlane.xlu0 %4702
      %v4704 = vadd.f32 %v4584, %v4586
      %4705 = vadd.xlane.f32.xlu0 %v4704
      %v4706 = vpop.xlane.xlu0 %4705
      %v4707 = vadd.f32 %v4588, %v4590
      %4708 = vadd.xlane.f32.xlu0 %v4707
      %v4709 = vpop.xlane.xlu0 %4708
      %v4710 = vadd.f32 %v4592, %v4594
      %4711 = vadd.xlane.f32.xlu0 %v4710
      %v4712 = vpop.xlane.xlu0 %4711
      %v4713 = vadd.f32 %v4596, %v4598
      %4714 = vadd.xlane.f32.xlu0 %v4713
      %v4715 = vpop.xlane.xlu0 %4714
      %v4716 = vadd.f32 %v4600, %v4602
      %4717 = vadd.xlane.f32.xlu0 %v4716
      %v4718 = vpop.xlane.xlu0 %4717
      %v4719 = vadd.f32 %v4604, %v4606
      %4720 = vadd.xlane.f32.xlu0 %v4719
      %v4721 = vpop.xlane.xlu0 %4720
      %v4722 = vadd.f32 %v4608, %v4610
      %4723 = vadd.xlane.f32.xlu0 %v4722
      %v4724 = vpop.xlane.xlu0 %4723
      %v4725 = vadd.f32 %v4612, %v4614
      %4726 = vadd.xlane.f32.xlu0 %v4725
      %v4727 = vpop.xlane.xlu0 %4726
      %v4728 = vadd.f32 %v4616, %v4618
      %4729 = vadd.xlane.f32.xlu0 %v4728
      %v4730 = vpop.xlane.xlu0 %4729
      %v4731 = vadd.f32 %v4620, %v4622
      %4732 = vadd.xlane.f32.xlu0 %v4731
      %v4733 = vpop.xlane.xlu0 %4732
      %v4734 = vadd.f32 %v4624, %v4626
      %4735 = vadd.xlane.f32.xlu0 %v4734
      %v4736 = vpop.xlane.xlu0 %4735
      %v4737 = vadd.f32 %v4628, %v4630
      %4738 = vadd.xlane.f32.xlu0 %v4737
      %v4739 = vpop.xlane.xlu0 %4738
      %v4740 = vadd.f32 %v4632, %v4634
      %4741 = vadd.xlane.f32.xlu0 %v4740
      %v4742 = vpop.xlane.xlu0 %4741
      %v4743 = vadd.f32 %v4636, %v4638
      %4744 = vadd.xlane.f32.xlu0 %v4743
      %v4745 = vpop.xlane.xlu0 %4744
      %v4746 = vadd.f32 %v4640, %v4642
      %4747 = vadd.xlane.f32.xlu0 %v4746
      %v4748 = vpop.xlane.xlu0 %4747
      %v4749 = vadd.f32 %v4644, %v4646
      %4750 = vadd.xlane.f32.xlu0 %v4749
      %v4751 = vpop.xlane.xlu0 %4750
      %v4752 = vadd.f32 %v4648, %v4650
      %4753 = vadd.xlane.f32.xlu0 %v4752
      %v4754 = vpop.xlane.xlu0 %4753
      %v4755 = vadd.f32 %v4652, %v4654
      %4756 = vadd.xlane.f32.xlu0 %v4755
      %v4757 = vpop.xlane.xlu0 %4756
      %v4758 = vadd.f32 %v4656, %v4658
      %4759 = vadd.xlane.f32.xlu0 %v4758
      %v4760 = vpop.xlane.xlu0 %4759
      %v4761 = vadd.f32 %v4660, %v4662
      %4762 = vadd.xlane.f32.xlu0 %v4761
      %v4763 = vpop.xlane.xlu0 %4762
      %v4764 = vadd.f32 %v4664, %v4666
      %4765 = vadd.xlane.f32.xlu0 %v4764
      %v4766 = vpop.xlane.xlu0 %4765
      %v4767 = vadd.f32 %v4668, %v4670
      %4768 = vadd.xlane.f32.xlu0 %v4767
      %v4769 = vpop.xlane.xlu0 %4768
      %v4770 = vadd.f32 %v4672, %v4674
      %4771 = vadd.xlane.f32.xlu0 %v4770
      %v4772 = vpop.xlane.xlu0 %4771
      %v4773 = vadd.f32 %v4676, %v4678
      %4774 = vadd.xlane.f32.xlu0 %v4773
      %v4775 = vpop.xlane.xlu0 %4774
      %v4776 = vadd.f32 %v4680, %v4682
      %4777 = vadd.xlane.f32.xlu0 %v4776
      %v4778 = vpop.xlane.xlu0 %4777
      %v4779 = vpack.c.bf16 %v4560, %v4556
      %v4780 = vpack.c.bf16 %v4562, %v4558
      %v4781 = vpack.c.bf16 %v4568, %v4564
      %v4782 = vpack.c.bf16 %v4570, %v4566
      %v4783 = vpack.c.bf16 %v4576, %v4572
      %v4784 = vpack.c.bf16 %v4578, %v4574
      %v4785 = vpack.c.bf16 %v4584, %v4580
      %v4786 = vpack.c.bf16 %v4586, %v4582
      %v4787 = vpack.c.bf16 %v4592, %v4588
      %v4788 = vpack.c.bf16 %v4594, %v4590
      %v4789 = vpack.c.bf16 %v4600, %v4596
      %v4790 = vpack.c.bf16 %v4602, %v4598
      %v4791 = vpack.c.bf16 %v4608, %v4604
      %v4792 = vpack.c.bf16 %v4610, %v4606
      %v4793 = vpack.c.bf16 %v4616, %v4612
      %v4794 = vpack.c.bf16 %v4618, %v4614
      %v4795 = vpack.c.bf16 %v4624, %v4620
      %v4796 = vpack.c.bf16 %v4626, %v4622
      %v4797 = vpack.c.bf16 %v4632, %v4628
      %v4798 = vpack.c.bf16 %v4634, %v4630
      %v4799 = vpack.c.bf16 %v4640, %v4636
      %v4800 = vpack.c.bf16 %v4642, %v4638
      %v4801 = vpack.c.bf16 %v4648, %v4644
      %v4802 = vpack.c.bf16 %v4650, %v4646
      %v4803 = vpack.c.bf16 %v4656, %v4652
      %v4804 = vpack.c.bf16 %v4658, %v4654
      %v4805 = vpack.c.bf16 %v4664, %v4660
      %v4806 = vpack.c.bf16 %v4666, %v4662
      %v4807 = vpack.c.bf16 %v4672, %v4668
      %v4808 = vpack.c.bf16 %v4674, %v4670
      %v4809 = vpack.c.bf16 %v4680, %v4676
      %v4810 = vpack.c.bf16 %v4682, %v4678
      %4811 = vrot.lane.b32.xlu0 %v897, 32
      %v4812 = vpop.permute.xlu0 %4811
      %4813 = vrot.lane.b32.xlu0 %v898, 32
      %v4814 = vpop.permute.xlu0 %4813
      %4815 = vrot.lane.b32.xlu0 %v899, 32
      %v4816 = vpop.permute.xlu0 %4815
      %4817 = vrot.lane.b32.xlu0 %v900, 32
      %v4818 = vpop.permute.xlu0 %4817
      %4819 = vrot.lane.b32.xlu0 %v901, 32
      %v4820 = vpop.permute.xlu0 %4819
      %4821 = vrot.lane.b32.xlu0 %v902, 32
      %v4822 = vpop.permute.xlu0 %4821
      %4823 = vrot.lane.b32.xlu0 %v903, 32
      %v4824 = vpop.permute.xlu0 %4823
      %4825 = vrot.lane.b32.xlu0 %v904, 32
      %v4826 = vpop.permute.xlu0 %4825
      %4827 = vrot.lane.b32.xlu0 %v905, 32
      %v4828 = vpop.permute.xlu0 %4827
      %4829 = vrot.lane.b32.xlu0 %v906, 32
      %v4830 = vpop.permute.xlu0 %4829
      %4831 = vrot.lane.b32.xlu0 %v907, 32
      %v4832 = vpop.permute.xlu0 %4831
      %4833 = vrot.lane.b32.xlu0 %v908, 32
      %v4834 = vpop.permute.xlu0 %4833
      %4835 = vrot.lane.b32.xlu0 %v909, 32
      %v4836 = vpop.permute.xlu0 %4835
      %4837 = vrot.lane.b32.xlu0 %v910, 32
      %v4838 = vpop.permute.xlu0 %4837
      %4839 = vrot.lane.b32.xlu0 %v911, 32
      %v4840 = vpop.permute.xlu0 %4839
      %4841 = vrot.lane.b32.xlu0 %v912, 32
      %v4842 = vpop.permute.xlu0 %4841
      %4859 = vmatprep.subr.bf16.mxu0 0
      %4860 = vmatpush1.bf16.msra.mxu0 %v4826
      %4861 = vmatprep.subr.bf16.mxu0 0
      %4862 = vmatpush1.bf16.msra.mxu0 %v4824
      %4863 = vmatprep.subr.bf16.mxu0 0
      %4864 = vmatpush1.bf16.msra.mxu0 %v4822
      %4865 = vmatprep.subr.bf16.mxu0 0
      %4866 = vmatpush1.bf16.msra.mxu0 %v4820
      %4867 = vmatprep.subr.bf16.mxu0 0
      %4868 = vmatpush1.bf16.msra.mxu0 %v4818
      %4869 = vmatprep.subr.bf16.mxu0 0
      %4870 = vmatpush1.bf16.msra.mxu0 %v4816
      %4871 = vmatprep.subr.bf16.mxu0 0
      %4872 = vmatpush1.bf16.msra.mxu0 %v4814
      %4873 = vmatprep.subr.bf16.mxu0 0
      %4874 = vmatpush1.bf16.msra.mxu0 %v4812
      %4875 = vmatprep.subr.bf16.mxu0 0
      %4876 = vmatpush2.bf16.msra.mxu0 %v4842
      %4877 = vmatprep.subr.bf16.mxu0 0
      %4878 = vmatpush2.bf16.msra.mxu0 %v4840
      %4879 = vmatprep.subr.bf16.mxu0 0
      %4880 = vmatpush2.bf16.msra.mxu0 %v4838
      %4881 = vmatprep.subr.bf16.mxu0 0
      %4882 = vmatpush2.bf16.msra.mxu0 %v4836
      %4883 = vmatprep.subr.bf16.mxu0 0
      %4884 = vmatpush2.bf16.msra.mxu0 %v4834
      %4885 = vmatprep.subr.bf16.mxu0 0
      %4886 = vmatpush2.bf16.msra.mxu0 %v4832
      %4887 = vmatprep.subr.bf16.mxu0 0
      %4888 = vmatpush2.bf16.msra.mxu0 %v4830
      %4889 = vmatprep.subr.bf16.mxu0 0
      %4890 = vmatpush2.bf16.msra.mxu0 %v4828
      %4891 = vmatprep.mubr.bf16.mxu0 %v4780
      %4892 = vmatmul.mubr.bf16.gmra.mxu0 %v4779
      %v4893 = vpop.f32.mrf.mxu0
      %v4894 = vadd.f32 0.0, %v4893
      %v4895 = vpop.f32.mrf.mxu0
      %v4896 = vpop.f32.mrf.mxu0
      %v4897 = vadd.f32 0.0, %v4896
      %v4898 = vpop.f32.mrf.mxu0
      %4899 = vmatprep.mubr.bf16.mxu0 %v4782
      %4900 = vmatmul.mubr.bf16.gmra.mxu0 %v4781
      %v4901 = vpop.f32.mrf.mxu0
      %v4902 = vadd.f32 0.0, %v4901
      %v4903 = vpop.f32.mrf.mxu0
      %v4904 = vpop.f32.mrf.mxu0
      %v4905 = vadd.f32 0.0, %v4904
      %v4906 = vpop.f32.mrf.mxu0
      %4907 = vmatprep.mubr.bf16.mxu0 %v4784
      %4908 = vmatmul.mubr.bf16.gmra.mxu0 %v4783
      %v4909 = vpop.f32.mrf.mxu0
      %v4910 = vadd.f32 0.0, %v4909
      %v4911 = vpop.f32.mrf.mxu0
      %v4912 = vpop.f32.mrf.mxu0
      %v4913 = vadd.f32 0.0, %v4912
      %v4914 = vpop.f32.mrf.mxu0
      %4915 = vmatprep.mubr.bf16.mxu0 %v4786
      %4916 = vmatmul.mubr.bf16.gmra.mxu0 %v4785
      %v4917 = vpop.f32.mrf.mxu0
      %v4918 = vadd.f32 0.0, %v4917
      %v4919 = vpop.f32.mrf.mxu0
      %v4920 = vpop.f32.mrf.mxu0
      %v4921 = vadd.f32 0.0, %v4920
      %v4922 = vpop.f32.mrf.mxu0
      %4923 = vmatprep.mubr.bf16.mxu0 %v4788
      %4924 = vmatmul.mubr.bf16.gmra.mxu0 %v4787
      %v4925 = vpop.f32.mrf.mxu0
      %v4926 = vadd.f32 0.0, %v4925
      %v4927 = vpop.f32.mrf.mxu0
      %v4928 = vpop.f32.mrf.mxu0
      %v4929 = vadd.f32 0.0, %v4928
      %v4930 = vpop.f32.mrf.mxu0
      %4931 = vmatprep.mubr.bf16.mxu0 %v4790
      %4932 = vmatmul.mubr.bf16.gmra.mxu0 %v4789
      %v4933 = vpop.f32.mrf.mxu0
      %v4934 = vadd.f32 0.0, %v4933
      %v4935 = vpop.f32.mrf.mxu0
      %v4936 = vpop.f32.mrf.mxu0
      %v4937 = vadd.f32 0.0, %v4936
      %v4938 = vpop.f32.mrf.mxu0
      %4939 = vmatprep.mubr.bf16.mxu0 %v4792
      %4940 = vmatmul.mubr.bf16.gmra.mxu0 %v4791
      %v4941 = vpop.f32.mrf.mxu0
      %v4942 = vadd.f32 0.0, %v4941
      %v4943 = vpop.f32.mrf.mxu0
      %v4944 = vpop.f32.mrf.mxu0
      %v4945 = vadd.f32 0.0, %v4944
      %v4946 = vpop.f32.mrf.mxu0
      %4947 = vmatprep.mubr.bf16.mxu0 %v4794
      %4948 = vmatmul.mubr.bf16.gmra.mxu0 %v4793
      %v4949 = vpop.f32.mrf.mxu0
      %v4950 = vadd.f32 0.0, %v4949
      %v4951 = vpop.f32.mrf.mxu0
      %v4952 = vpop.f32.mrf.mxu0
      %v4953 = vadd.f32 0.0, %v4952
      %v4954 = vpop.f32.mrf.mxu0
      %4955 = vmatprep.mubr.bf16.mxu0 %v4796
      %4956 = vmatmul.mubr.bf16.gmra.mxu0 %v4795
      %v4957 = vpop.f32.mrf.mxu0
      %v4958 = vadd.f32 0.0, %v4957
      %v4959 = vpop.f32.mrf.mxu0
      %v4960 = vpop.f32.mrf.mxu0
      %v4961 = vadd.f32 0.0, %v4960
      %v4962 = vpop.f32.mrf.mxu0
      %4963 = vmatprep.mubr.bf16.mxu0 %v4798
      %4964 = vmatmul.mubr.bf16.gmra.mxu0 %v4797
      %v4965 = vpop.f32.mrf.mxu0
      %v4966 = vadd.f32 0.0, %v4965
      %v4967 = vpop.f32.mrf.mxu0
      %v4968 = vpop.f32.mrf.mxu0
      %v4969 = vadd.f32 0.0, %v4968
      %v4970 = vpop.f32.mrf.mxu0
      %4971 = vmatprep.mubr.bf16.mxu0 %v4800
      %4972 = vmatmul.mubr.bf16.gmra.mxu0 %v4799
      %v4973 = vpop.f32.mrf.mxu0
      %v4974 = vadd.f32 0.0, %v4973
      %v4975 = vpop.f32.mrf.mxu0
      %v4976 = vpop.f32.mrf.mxu0
      %v4977 = vadd.f32 0.0, %v4976
      %v4978 = vpop.f32.mrf.mxu0
      %4979 = vmatprep.mubr.bf16.mxu0 %v4802
      %4980 = vmatmul.mubr.bf16.gmra.mxu0 %v4801
      %v4981 = vpop.f32.mrf.mxu0
      %v4982 = vadd.f32 0.0, %v4981
      %v4983 = vpop.f32.mrf.mxu0
      %v4984 = vpop.f32.mrf.mxu0
      %v4985 = vadd.f32 0.0, %v4984
      %v4986 = vpop.f32.mrf.mxu0
      %4987 = vmatprep.mubr.bf16.mxu0 %v4804
      %4988 = vmatmul.mubr.bf16.gmra.mxu0 %v4803
      %v4989 = vpop.f32.mrf.mxu0
      %v4990 = vadd.f32 0.0, %v4989
      %v4991 = vpop.f32.mrf.mxu0
      %v4992 = vpop.f32.mrf.mxu0
      %v4993 = vadd.f32 0.0, %v4992
      %v4994 = vpop.f32.mrf.mxu0
      %4995 = vmatprep.mubr.bf16.mxu0 %v4806
      %4996 = vmatmul.mubr.bf16.gmra.mxu0 %v4805
      %v4997 = vpop.f32.mrf.mxu0
      %v4998 = vadd.f32 0.0, %v4997
      %v4999 = vpop.f32.mrf.mxu0
      %v5000 = vpop.f32.mrf.mxu0
      %v5001 = vadd.f32 0.0, %v5000
      %v5002 = vpop.f32.mrf.mxu0
      %5003 = vmatprep.mubr.bf16.mxu0 %v4808
      %5004 = vmatmul.mubr.bf16.gmra.mxu0 %v4807
      %v5005 = vpop.f32.mrf.mxu0
      %v5006 = vadd.f32 0.0, %v5005
      %v5007 = vpop.f32.mrf.mxu0
      %v5008 = vpop.f32.mrf.mxu0
      %v5009 = vadd.f32 0.0, %v5008
      %v5010 = vpop.f32.mrf.mxu0
      %5011 = vmatprep.mubr.bf16.mxu0 %v4810
      %5012 = vmatmul.mubr.bf16.gmra.mxu0 %v4809
      %v5013 = vpop.f32.mrf.mxu0
      %v5014 = vadd.f32 0.0, %v5013
      %v5015 = vpop.f32.mrf.mxu0
      %v5016 = vpop.f32.mrf.mxu0
      %v5017 = vadd.f32 0.0, %v5016
      %v5018 = vpop.f32.mrf.mxu0
      %5019 = vdwg.mxu0
      %v5020 = vrcp.pop %v4685
      %v5021 = vrcp.pop %v4688
      %v5022 = vrcp.pop %v4691
      %v5023 = vrcp.pop %v4694
      %v5024 = vrcp.pop %v4697
      %v5025 = vrcp.pop %v4700
      %v5026 = vrcp.pop %v4703
      %v5027 = vrcp.pop %v4706
      %v5028 = vrcp.pop %v4709
      %v5029 = vrcp.pop %v4712
      %v5030 = vrcp.pop %v4715
      %v5031 = vrcp.pop %v4718
      %v5032 = vrcp.pop %v4721
      %v5033 = vrcp.pop %v4724
      %v5034 = vrcp.pop %v4727
      %v5035 = vrcp.pop %v4730
      %v5036 = vrcp.pop %v4733
      %v5037 = vrcp.pop %v4736
      %v5038 = vrcp.pop %v4739
      %v5039 = vrcp.pop %v4742
      %v5040 = vrcp.pop %v4745
      %v5041 = vrcp.pop %v4748
      %v5042 = vrcp.pop %v4751
      %v5043 = vrcp.pop %v4754
      %v5044 = vrcp.pop %v4757
      %v5045 = vrcp.pop %v4760
      %v5046 = vrcp.pop %v4763
      %v5047 = vrcp.pop %v4766
      %v5048 = vrcp.pop %v4769
      %v5049 = vrcp.pop %v4772
      %v5050 = vrcp.pop %v4775
      %v5051 = vrcp.pop %v4778
      %v5052 = vmul.f32 %v4894, %v5020
      %v5053 = vmul.f32 %v4897, %v5021
      %v5054 = vmul.f32 %v4902, %v5022
      %v5055 = vmul.f32 %v4905, %v5023
      %v5056 = vmul.f32 %v4910, %v5024
      %v5057 = vmul.f32 %v4913, %v5025
      %v5058 = vmul.f32 %v4918, %v5026
      %v5059 = vmul.f32 %v4921, %v5027
      %v5060 = vmul.f32 %v4926, %v5028
      %v5061 = vmul.f32 %v4929, %v5029
      %v5062 = vmul.f32 %v4934, %v5030
      %v5063 = vmul.f32 %v4937, %v5031
      %v5064 = vmul.f32 %v4942, %v5032
      %v5065 = vmul.f32 %v4945, %v5033
      %v5066 = vmul.f32 %v4950, %v5034
      %v5067 = vmul.f32 %v4953, %v5035
      %v5068 = vmul.f32 %v4958, %v5036
      %v5069 = vmul.f32 %v4961, %v5037
      %v5070 = vmul.f32 %v4966, %v5038
      %v5071 = vmul.f32 %v4969, %v5039
      %v5072 = vmul.f32 %v4974, %v5040
      %v5073 = vmul.f32 %v4977, %v5041
      %v5074 = vmul.f32 %v4982, %v5042
      %v5075 = vmul.f32 %v4985, %v5043
      %v5076 = vmul.f32 %v4990, %v5044
      %v5077 = vmul.f32 %v4993, %v5045
      %v5078 = vmul.f32 %v4998, %v5046
      %v5079 = vmul.f32 %v5001, %v5047
      %v5080 = vmul.f32 %v5006, %v5048
      %v5081 = vmul.f32 %v5009, %v5049
      %v5082 = vmul.f32 %v5014, %v5050
      %v5083 = vmul.f32 %v5017, %v5051
      %5116 = vrot.lane.b32.xlu0 %v5052, 96
      %v5117 = vpop.permute.xlu0 %5116
      %5118 = vrot.lane.b32.xlu0 %v5053, 96
      %v5119 = vpop.permute.xlu0 %5118
      %5120 = vrot.lane.b32.xlu0 %v5054, 96
      %v5121 = vpop.permute.xlu0 %5120
      %5122 = vrot.lane.b32.xlu0 %v5055, 96
      %v5123 = vpop.permute.xlu0 %5122
      %5124 = vrot.lane.b32.xlu0 %v5056, 96
      %v5125 = vpop.permute.xlu0 %5124
      %5126 = vrot.lane.b32.xlu0 %v5057, 96
      %v5127 = vpop.permute.xlu0 %5126
      %5128 = vrot.lane.b32.xlu0 %v5058, 96
      %v5129 = vpop.permute.xlu0 %5128
      %5130 = vrot.lane.b32.xlu0 %v5059, 96
      %v5131 = vpop.permute.xlu0 %5130
      %5132 = vrot.lane.b32.xlu0 %v5060, 96
      %v5133 = vpop.permute.xlu0 %5132
      %5134 = vrot.lane.b32.xlu0 %v5061, 96
      %v5135 = vpop.permute.xlu0 %5134
      %5136 = vrot.lane.b32.xlu0 %v5062, 96
      %v5137 = vpop.permute.xlu0 %5136
      %5138 = vrot.lane.b32.xlu0 %v5063, 96
      %v5139 = vpop.permute.xlu0 %5138
      %5140 = vrot.lane.b32.xlu0 %v5064, 96
      %v5141 = vpop.permute.xlu0 %5140
      %5142 = vrot.lane.b32.xlu0 %v5065, 96
      %v5143 = vpop.permute.xlu0 %5142
      %5144 = vrot.lane.b32.xlu0 %v5066, 96
      %v5145 = vpop.permute.xlu0 %5144
      %5146 = vrot.lane.b32.xlu0 %v5067, 96
      %v5147 = vpop.permute.xlu0 %5146
      %5148 = vrot.lane.b32.xlu0 %v5068, 96
      %v5149 = vpop.permute.xlu0 %5148
      %5150 = vrot.lane.b32.xlu0 %v5069, 96
      %v5151 = vpop.permute.xlu0 %5150
      %5152 = vrot.lane.b32.xlu0 %v5070, 96
      %v5153 = vpop.permute.xlu0 %5152
      %5154 = vrot.lane.b32.xlu0 %v5071, 96
      %v5155 = vpop.permute.xlu0 %5154
      %5156 = vrot.lane.b32.xlu0 %v5072, 96
      %v5157 = vpop.permute.xlu0 %5156
      %5158 = vrot.lane.b32.xlu0 %v5073, 96
      %v5159 = vpop.permute.xlu0 %5158
      %5160 = vrot.lane.b32.xlu0 %v5074, 96
      %v5161 = vpop.permute.xlu0 %5160
      %5162 = vrot.lane.b32.xlu0 %v5075, 96
      %v5163 = vpop.permute.xlu0 %5162
      %5164 = vrot.lane.b32.xlu0 %v5076, 96
      %v5165 = vpop.permute.xlu0 %5164
      %5166 = vrot.lane.b32.xlu0 %v5077, 96
      %v5167 = vpop.permute.xlu0 %5166
      %5168 = vrot.lane.b32.xlu0 %v5078, 96
      %v5169 = vpop.permute.xlu0 %5168
      %5170 = vrot.lane.b32.xlu0 %v5079, 96
      %v5171 = vpop.permute.xlu0 %5170
      %5172 = vrot.lane.b32.xlu0 %v5080, 96
      %v5173 = vpop.permute.xlu0 %5172
      %5174 = vrot.lane.b32.xlu0 %v5081, 96
      %v5175 = vpop.permute.xlu0 %5174
      %5176 = vrot.lane.b32.xlu0 %v5082, 96
      %v5177 = vpop.permute.xlu0 %5176
      %5178 = vrot.lane.b32.xlu0 %v5083, 96
      %v5179 = vpop.permute.xlu0 %5178
      %vm5212 = vcmask 1048320
      %5213 = vst.msk [vmem:[#allocation2] sm:$0xff] %vm5212, %v5117
      %5214 = vst.msk [vmem:[#allocation2 + $0x8] sm:$0xff] %vm5212, %v5119
      %5215 = vst.msk [vmem:[#allocation2 + $0x10] sm:$0xff] %vm5212, %v5121
      %5216 = vst.msk [vmem:[#allocation2 + $0x18] sm:$0xff] %vm5212, %v5123
      %5217 = vst.msk [vmem:[#allocation2 + $0x20] sm:$0xff] %vm5212, %v5125
      %5218 = vst.msk [vmem:[#allocation2 + $0x28] sm:$0xff] %vm5212, %v5127
      %5219 = vst.msk [vmem:[#allocation2 + $0x30] sm:$0xff] %vm5212, %v5129
      %5220 = vst.msk [vmem:[#allocation2 + $0x38] sm:$0xff] %vm5212, %v5131
      %5221 = vst.msk [vmem:[#allocation2 + $0x40] sm:$0xff] %vm5212, %v5133
      %5222 = vst.msk [vmem:[#allocation2 + $0x48] sm:$0xff] %vm5212, %v5135
      %5223 = vst.msk [vmem:[#allocation2 + $0x50] sm:$0xff] %vm5212, %v5137
      %5224 = vst.msk [vmem:[#allocation2 + $0x58] sm:$0xff] %vm5212, %v5139
      %5225 = vst.msk [vmem:[#allocation2 + $0x60] sm:$0xff] %vm5212, %v5141
      %5226 = vst.msk [vmem:[#allocation2 + $0x68] sm:$0xff] %vm5212, %v5143
      %5227 = vst.msk [vmem:[#allocation2 + $0x70] sm:$0xff] %vm5212, %v5145
      %5228 = vst.msk [vmem:[#allocation2 + $0x78] sm:$0xff] %vm5212, %v5147
      %5229 = vst.msk [vmem:[#allocation2 + $0x80] sm:$0xff] %vm5212, %v5149
      %5230 = vst.msk [vmem:[#allocation2 + $0x88] sm:$0xff] %vm5212, %v5151
      %5231 = vst.msk [vmem:[#allocation2 + $0x90] sm:$0xff] %vm5212, %v5153
      %5232 = vst.msk [vmem:[#allocation2 + $0x98] sm:$0xff] %vm5212, %v5155
      %5233 = vst.msk [vmem:[#allocation2 + $0xa0] sm:$0xff] %vm5212, %v5157
      %5234 = vst.msk [vmem:[#allocation2 + $0xa8] sm:$0xff] %vm5212, %v5159
      %5235 = vst.msk [vmem:[#allocation2 + $0xb0] sm:$0xff] %vm5212, %v5161
      %5236 = vst.msk [vmem:[#allocation2 + $0xb8] sm:$0xff] %vm5212, %v5163
      %5237 = vst.msk [vmem:[#allocation2 + $0xc0] sm:$0xff] %vm5212, %v5165
      %5238 = vst.msk [vmem:[#allocation2 + $0xc8] sm:$0xff] %vm5212, %v5167
      %5239 = vst.msk [vmem:[#allocation2 + $0xd0] sm:$0xff] %vm5212, %v5169
      %5240 = vst.msk [vmem:[#allocation2 + $0xd8] sm:$0xff] %vm5212, %v5171
      %5241 = vst.msk [vmem:[#allocation2 + $0xe0] sm:$0xff] %vm5212, %v5173
      %5242 = vst.msk [vmem:[#allocation2 + $0xe8] sm:$0xff] %vm5212, %v5175
      %5243 = vst.msk [vmem:[#allocation2 + $0xf0] sm:$0xff] %vm5212, %v5177
      %5244 = vst.msk [vmem:[#allocation2 + $0xf8] sm:$0xff] %vm5212, %v5179
      %v5245 = vld [vmem:[%s2] sm:$0xf]
      %v5246 = vld [vmem:[#allocation2] sm:$0xff]
      %v5247 = vld [vmem:[#allocation2 + $0x8] sm:$0xff]
      %v5248 = vld [vmem:[#allocation2 + $0x10] sm:$0xff]
      %v5249 = vld [vmem:[#allocation2 + $0x18] sm:$0xff]
      %v5250 = vld [vmem:[#allocation2 + $0x20] sm:$0xff]
      %v5251 = vld [vmem:[#allocation2 + $0x28] sm:$0xff]
      %v5252 = vld [vmem:[#allocation2 + $0x30] sm:$0xff]
      %v5253 = vld [vmem:[#allocation2 + $0x38] sm:$0xff]
      %v5254 = vld [vmem:[#allocation2 + $0x40] sm:$0xff]
      %v5255 = vld [vmem:[#allocation2 + $0x48] sm:$0xff]
      %v5256 = vld [vmem:[#allocation2 + $0x50] sm:$0xff]
      %v5257 = vld [vmem:[#allocation2 + $0x58] sm:$0xff]
      %v5258 = vld [vmem:[#allocation2 + $0x60] sm:$0xff]
      %v5259 = vld [vmem:[#allocation2 + $0x68] sm:$0xff]
      %v5260 = vld [vmem:[#allocation2 + $0x70] sm:$0xff]
      %v5261 = vld [vmem:[#allocation2 + $0x78] sm:$0xff]
      %v5262 = vld [vmem:[#allocation2 + $0x80] sm:$0xff]
      %v5263 = vld [vmem:[#allocation2 + $0x88] sm:$0xff]
      %v5264 = vld [vmem:[#allocation2 + $0x90] sm:$0xff]
      %v5265 = vld [vmem:[#allocation2 + $0x98] sm:$0xff]
      %v5266 = vld [vmem:[#allocation2 + $0xa0] sm:$0xff]
      %v5267 = vld [vmem:[#allocation2 + $0xa8] sm:$0xff]
      %v5268 = vld [vmem:[#allocation2 + $0xb0] sm:$0xff]
      %v5269 = vld [vmem:[#allocation2 + $0xb8] sm:$0xff]
      %v5270 = vld [vmem:[#allocation2 + $0xc0] sm:$0xff]
      %v5271 = vld [vmem:[#allocation2 + $0xc8] sm:$0xff]
      %v5272 = vld [vmem:[#allocation2 + $0xd0] sm:$0xff]
      %v5273 = vld [vmem:[#allocation2 + $0xd8] sm:$0xff]
      %v5274 = vld [vmem:[#allocation2 + $0xe0] sm:$0xff]
      %v5275 = vld [vmem:[#allocation2 + $0xe8] sm:$0xff]
      %v5276 = vld [vmem:[#allocation2 + $0xf0] sm:$0xff]
      %v5277 = vld [vmem:[#allocation2 + $0xf8] sm:$0xff]
      %v5278 = vld [vmem:[%s3] sm:$0xf]
      %5280 = vset.pattern.permute.xlu0 0
      %5281 = vperm.xlu0 %5280, %v5278
      %v5282 = vpop.permute.xlu0 %5281
      %5284 = vmatprep.subr.mxu0 0.0
      %5285 = vmatpush1.xpose.msra.mxu0 %v5261
      %5286 = vmatprep.subr.mxu0 0.0
      %5287 = vmatpush1.xpose.msra.mxu0 %v5260
      %5288 = vmatprep.subr.mxu0 0.0
      %5289 = vmatpush1.xpose.msra.mxu0 %v5259
      %5290 = vmatprep.subr.mxu0 0.0
      %5291 = vmatpush1.xpose.msra.mxu0 %v5258
      %5292 = vmatprep.subr.mxu0 0.0
      %5293 = vmatpush1.xpose.msra.mxu0 %v5257
      %5294 = vmatprep.subr.mxu0 0.0
      %5295 = vmatpush1.xpose.msra.mxu0 %v5256
      %5296 = vmatprep.subr.mxu0 0.0
      %5297 = vmatpush1.xpose.msra.mxu0 %v5255
      %5298 = vmatprep.subr.mxu0 0.0
      %5299 = vmatpush1.xpose.msra.mxu0 %v5254
      %5300 = vmatprep.subr.mxu0 0.0
      %5301 = vmatpush1.xpose.msra.mxu0 %v5253
      %5302 = vmatprep.subr.mxu0 0.0
      %5303 = vmatpush1.xpose.msra.mxu0 %v5252
      %5304 = vmatprep.subr.mxu0 0.0
      %5305 = vmatpush1.xpose.msra.mxu0 %v5251
      %5306 = vmatprep.subr.mxu0 0.0
      %5307 = vmatpush1.xpose.msra.mxu0 %v5250
      %5308 = vmatprep.subr.mxu0 0.0
      %5309 = vmatpush1.xpose.msra.mxu0 %v5249
      %5310 = vmatprep.subr.mxu0 0.0
      %5311 = vmatpush1.xpose.msra.mxu0 %v5248
      %5312 = vmatprep.subr.mxu0 0.0
      %5313 = vmatpush1.xpose.msra.mxu0 %v5247
      %5314 = vmatprep.subr.mxu0 0.0
      %5315 = vmatpush1.xpose.msra.mxu0 %v5246
      %5316 = vmatprep.subr.mxu0 0.0
      %5317 = vmatpush2.xpose.msra.mxu0 %v5277
      %5318 = vmatprep.subr.mxu0 0.0
      %5319 = vmatpush2.xpose.msra.mxu0 %v5276
      %5320 = vmatprep.subr.mxu0 0.0
      %5321 = vmatpush2.xpose.msra.mxu0 %v5275
      %5322 = vmatprep.subr.mxu0 0.0
      %5323 = vmatpush2.xpose.msra.mxu0 %v5274
      %5324 = vmatprep.subr.mxu0 0.0
      %5325 = vmatpush2.xpose.msra.mxu0 %v5273
      %5326 = vmatprep.subr.mxu0 0.0
      %5327 = vmatpush2.xpose.msra.mxu0 %v5272
      %5328 = vmatprep.subr.mxu0 0.0
      %5329 = vmatpush2.xpose.msra.mxu0 %v5271
      %5330 = vmatprep.subr.mxu0 0.0
      %5331 = vmatpush2.xpose.msra.mxu0 %v5270
      %5332 = vmatprep.subr.mxu0 0.0
      %5333 = vmatpush2.xpose.msra.mxu0 %v5269
      %5334 = vmatprep.subr.mxu0 0.0
      %5335 = vmatpush2.xpose.msra.mxu0 %v5268
      %5336 = vmatprep.subr.mxu0 0.0
      %5337 = vmatpush2.xpose.msra.mxu0 %v5267
      %5338 = vmatprep.subr.mxu0 0.0
      %5339 = vmatpush2.xpose.msra.mxu0 %v5266
      %5340 = vmatprep.subr.mxu0 0.0
      %5341 = vmatpush2.xpose.msra.mxu0 %v5265
      %5342 = vmatprep.subr.mxu0 0.0
      %5343 = vmatpush2.xpose.msra.mxu0 %v5264
      %5344 = vmatprep.subr.mxu0 0.0
      %5345 = vmatpush2.xpose.msra.mxu0 %v5263
      %5346 = vmatprep.subr.mxu0 0.0
      %5347 = vmatpush2.xpose.msra.mxu0 %v5262
      %5348 = vmatprep.mubr.f32.mxu0 0.0
      %5349 = vmatmul.mubr.f32.gmra.mxu0 %v5245
      %v5350 = vpop.f32.mrf.mxu0
      %v5351 = vadd.f32 %v5282, %v5350
      %v5352 = vpop.f32.mrf.mxu0
      %v5353 = vadd.f32 %v5282, %v5352
      %5354 = vdwg.mxu0
      %v5357 = vcombine.low %v5351, %v5353
      %5359 = vst [vmem:[%s197] sm:$0xff] %v5357
      %p5360 = scmp.lt.s32.totalorder %s15, 1
      %s5361 = scalar_select %p5360, %s15, 1
      %s5362 = smul.addr %s5361, 2
      %s5363 = smul.addr %s5362, 4
      %s5364 = scalar_lea.vmem %s4, %s5363
      // Predicated region
      $region37: #{attention_forward.1} parent=35 // pred_check
        %p5365 = pneg %p122
      $region38: #{attention_forward.1} parent=35 // pred_check_branch
        %5367 = sbr.rel (%p5365) target = $region40
      $region39: #{attention_forward.1} parent=35 // pred_region
        _
      $region40: #{attention_forward.1} parent=35 // pred_fallthru
        _
    $region36: #{attention_forward.1} parent=5 // pred_fallthru
      _
    %p5368 = scmp.le.s32.totalorder 2, %s10
    // Predicated region
    $region41: #{attention_forward.1} parent=5 // pred_check
      %p5369 = pneg %p5368
    $region42: #{attention_forward.1} parent=5 // pred_check_branch
      %5371 = sbr.rel (%p5369) target = $region44
    $region43: #{attention_forward.1} parent=5 // pred_region
      %s5372 = ssub.s32 %s10, 2
      // Predicated region
      $region45: #{attention_forward.1} parent=43 // pred_check
        %p5373 = pneg %p128
      $region46: #{attention_forward.1} parent=43 // pred_check_branch
        %5375 = sbr.rel (%p5373) target = $region48
      $region47: #{attention_forward.1} parent=43 // pred_region
        %p5376 = scmp.lt.s32.totalorder %s16, 1
        %s5377 = scalar_select %p5376, %s16, 1
        %s5378 = smul.addr %s5377, 2
        %s5379 = smul.addr %s5378, 4
        %s5380 = scalar_lea.vmem %s4, %s5379
      $region48: #{attention_forward.1} parent=43 // pred_fallthru
        _
    $region44: #{attention_forward.1} parent=5 // pred_fallthru
      _
  $region6: #{attention_forward.1} parent=0 // loop_footer
    %s14 = sadd.s32 1, %s10
  $region7: #{attention_forward.1} parent=0 // loop_footer_branch
    %9 = sbr.rel target = $region3
  $region8: #{attention_forward.1} parent=0 // loop_exit
    _

</llo_original>
